<compile_context>
chip_gen: v7x
topology: tpu7x:2x2x1
jax: 0.10.0
libtpu: 0.0.40
codegen_flags: <defaults>
</compile_context>

<pallas_src>
import functools
import math

import jax
import jax.numpy as jnp
from jax import lax
from jax.experimental import pallas as pl
from jax.experimental.pallas import tpu as pltpu


# ----------------------------------------------------------------------------
# helpers
# ----------------------------------------------------------------------------
def _round_up(x, m):
    return ((x + m - 1) // m) * m


def _prod(shape):
    p = 1
    for s in shape:
        p *= s
    return p


def _softplus(x):
    # numerically safe softplus that lowers cleanly (exp/log only)
    return jnp.where(x > 30.0, x, jnp.log(1.0 + jnp.exp(jnp.minimum(x, 30.0))))


def _tile_rows(M):
    """Row tile for (M, ...) activations: full extent when small, divisor otherwise."""
    if M <= 512:
        Mp = _round_up(M, 8)
        return Mp, Mp
    for t in (256, 128):
        if M % t == 0:
            return t, M
    return 128, _round_up(M, 128)


def _tile_and_pad(dim, cap):
    """(tile, padded_dim): full extent if <= cap, else a 128-multiple divisor, else pad."""
    if dim <= cap:
        return dim, dim
    t = cap
    while t >= 128:
        if dim % t == 0:
            return t, dim
        t -= 128
    return cap, _round_up(dim, cap)


def _pick_di_block(d):
    """Channel block for the conv / scan kernels (feeds both v7x TensorCores at B=1)."""
    if d > 256 and d % 256 == 0:
        return 256
    return d


def _pick_time_block(Lp, cap=256):
    lt, t = 8, 8
    while t <= min(Lp, cap):
        if Lp % t == 0:
            lt = t
        t *= 2
    return lt


# ----------------------------------------------------------------------------
# Kernel 1: tiled matmul  y = act(x @ w + b) [+ residual]
# ----------------------------------------------------------------------------
def _mm_kernel(*refs, activation, has_residual, multi_k):
    it = iter(refs)
    x_ref = next(it)
    w_ref = next(it)
    b_ref = next(it)
    res_ref = next(it) if has_residual else None
    o_ref = next(it)
    acc_ref = next(it) if multi_k else None

    def finish(acc):
        acc = acc + b_ref[...]
        if activation == "relu":
            acc = jnp.maximum(acc, 0.0)
        elif activation == "swish":
            acc = acc * jax.nn.sigmoid(acc)
        if has_residual:
            acc = acc + res_ref[...].astype(jnp.float32)
        o_ref[...] = acc.astype(o_ref.dtype)

    if multi_k:
        k = pl.program_id(2)

        @pl.when(k == 0)
        def _():
            acc_ref[...] = jnp.zeros_like(acc_ref)

        acc_ref[...] += jnp.dot(x_ref[...], w_ref[...],
                                preferred_element_type=jnp.float32)

        @pl.when(k == pl.num_programs(2) - 1)
        def _():
            finish(acc_ref[...])
    else:
        finish(jnp.dot(x_ref[...], w_ref[...], preferred_element_type=jnp.float32))


def pallas_matmul(x, w, b=None, *, activation="none", residual=None,
                  out_dtype=jnp.bfloat16):
    """y = act(x @ w + b) [+ residual], bf16 MXU operands, f32 accumulation."""
    lead = x.shape[:-1]
    K = x.shape[-1]
    N = w.shape[-1]
    M = _prod(lead)

    tm, Mp = _tile_rows(M)
    tk, Kp = _tile_and_pad(K, 1024)
    tn, Np = _tile_and_pad(N, 512)

    x2 = x.reshape(M, K).astype(jnp.bfloat16)
    if (Mp, Kp) != (M, K):
        x2 = jnp.pad(x2, ((0, Mp - M), (0, Kp - K)))
    wb = w.astype(jnp.bfloat16)
    if (Kp, Np) != (K, N):
        wb = jnp.pad(wb, ((0, Kp - K), (0, Np - N)))
    bvec = jnp.zeros((N,), jnp.float32) if b is None else b.astype(jnp.float32)
    bb = bvec.reshape(1, N)
    if Np != N:
        bb = jnp.pad(bb, ((0, 0), (0, Np - N)))

    inputs = [x2, wb, bb]
    in_specs = [pl.BlockSpec((tm, tk), lambda i, j, k: (i, k)),
                pl.BlockSpec((tk, tn), lambda i, j, k: (k, j)),
                pl.BlockSpec((1, tn), lambda i, j, k: (0, j))]
    if residual is not None:
        r2 = residual.reshape(M, N).astype(jnp.bfloat16)
        if (Mp, Np) != (M, N):
            r2 = jnp.pad(r2, ((0, Mp - M), (0, Np - N)))
        inputs.append(r2)
        in_specs.append(pl.BlockSpec((tm, tn), lambda i, j, k: (i, j)))

    multi_k = (Kp // tk) > 1
    scratch = [pltpu.VMEM((tm, tn), jnp.float32)] if multi_k else []

    out = pl.pallas_call(
        functools.partial(_mm_kernel, activation=activation,
                          has_residual=residual is not None, multi_k=multi_k),
        grid=(Mp // tm, Np // tn, Kp // tk),
        in_specs=in_specs,
        out_specs=pl.BlockSpec((tm, tn), lambda i, j, k: (i, j)),
        out_shape=jax.ShapeDtypeStruct((Mp, Np), out_dtype),
        scratch_shapes=scratch,
        compiler_params=pltpu.CompilerParams(
            dimension_semantics=("parallel", "parallel", "arbitrary")),
    )(*inputs)
    if (Mp, Np) != (M, N):
        out = out[:M, :N]
    return out.reshape(lead + (N,))


# ----------------------------------------------------------------------------
# Kernel 2: fused LayerNorm + in_proj with two outputs (x, z); LN computed once per row tile
# ----------------------------------------------------------------------------
def _ln_inproj_kernel(x_ref, g_ref, bt_ref, wx_ref, wz_ref, ox_ref, oz_ref,
                      xn_ref, *, eps):
    @pl.when(pl.program_id(1) == 0)
    def _():
        x = x_ref[...].astype(jnp.float32)
        mu = jnp.mean(x, axis=-1, keepdims=True)
        var = jnp.mean(jnp.square(x - mu), axis=-1, keepdims=True)
        xn_ref[...] = ((x - mu) * lax.rsqrt(var + eps) * g_ref[...]
                       + bt_ref[...]).astype(xn_ref.dtype)

    xn = xn_ref[...]
    ox_ref[...] = jnp.dot(xn, wx_ref[...],
                          preferred_element_type=jnp.float32).astype(ox_ref.dtype)
    oz_ref[...] = jnp.dot(xn, wz_ref[...],
                          preferred_element_type=jnp.float32).astype(oz_ref.dtype)


def pallas_ln_inproj(x, gamma, beta, wx, wz, *, eps=1e-12):
    Bsz, Lp, D = x.shape
    d_inner = wx.shape[-1]
    M = Bsz * Lp
    x2 = x.reshape(M, D)
    tm, Mp = _tile_rows(M)
    if Mp != M:
        x2 = jnp.pad(x2, ((0, Mp - M), (0, 0)))
    tn, Np = _tile_and_pad(d_inner, 512)
    wxp = wx.astype(jnp.bfloat16)
    wzp = wz.astype(jnp.bfloat16)
    if Np != d_inner:
        wxp = jnp.pad(wxp, ((0, 0), (0, Np - d_inner)))
        wzp = jnp.pad(wzp, ((0, 0), (0, Np - d_inner)))

    xm, z = pl.pallas_call(
        functools.partial(_ln_inproj_kernel, eps=eps),
        grid=(Mp // tm, Np // tn),
        in_specs=[pl.BlockSpec((tm, D), lambda i, j: (i, 0)),
                  pl.BlockSpec((1, D), lambda i, j: (0, 0)),
                  pl.BlockSpec((1, D), lambda i, j: (0, 0)),
                  pl.BlockSpec((D, tn), lambda i, j: (0, j)),
                  pl.BlockSpec((D, tn), lambda i, j: (0, j))],
        out_specs=(pl.BlockSpec((tm, tn), lambda i, j: (i, j)),
                   pl.BlockSpec((tm, tn), lambda i, j: (i, j))),
        out_shape=(jax.ShapeDtypeStruct((Mp, Np), jnp.bfloat16),
                   jax.ShapeDtypeStruct((Mp, Np), jnp.bfloat16)),
        scratch_shapes=[pltpu.VMEM((tm, D), jnp.bfloat16)],
        compiler_params=pltpu.CompilerParams(
            dimension_semantics=("parallel", "arbitrary")),
    )(x2.astype(jnp.bfloat16),
      gamma.reshape(1, D).astype(jnp.float32),
      beta.reshape(1, D).astype(jnp.float32), wxp, wzp)
    if (Mp, Np) != (M, d_inner):
        xm = xm[:M, :d_inner]
        z = z[:M, :d_inner]
    return (xm.reshape(Bsz, Lp, d_inner), z.reshape(Bsz, Lp, d_inner))


# ----------------------------------------------------------------------------
# Kernel 3: fused FFN block  out = x + W2(Swish(W1(LN(x)) + b1)) + b2, tiled over H
# ----------------------------------------------------------------------------
def _ffn_kernel(x_ref, g_ref, bt_ref, w1_ref, b1_ref, w2_ref, b2_ref, o_ref,
                xn_ref, acc_ref, *, eps):
    hidx = pl.program_id(1)

    @pl.when(hidx == 0)
    def _():
        x = x_ref[...].astype(jnp.float32)
        mu = jnp.mean(x, axis=-1, keepdims=True)
        var = jnp.mean(jnp.square(x - mu), axis=-1, keepdims=True)
        xn_ref[...] = ((x - mu) * lax.rsqrt(var + eps) * g_ref[...]
                       + bt_ref[...]).astype(xn_ref.dtype)
        acc_ref[...] = jnp.zeros_like(acc_ref)

    h = jnp.dot(xn_ref[...], w1_ref[...],
                preferred_element_type=jnp.float32) + b1_ref[...]
    h = h * jax.nn.sigmoid(h)                                        # Swish
    acc_ref[...] += jnp.dot(h.astype(w2_ref.dtype), w2_ref[...],
                            preferred_element_type=jnp.float32)

    @pl.when(hidx == pl.num_programs(1) - 1)
    def _():
        y = acc_ref[...] + b2_ref[...] + x_ref[...].astype(jnp.float32)
        o_ref[...] = y.astype(o_ref.dtype)


def pallas_ffn(x, gamma, beta, w1, b1, w2, b2, *, eps=1e-12):
    Bsz, Lp, D = x.shape
    H = w1.shape[-1]
    M = Bsz * Lp
    x2 = x.reshape(M, D)
    tm, Mp = _tile_rows(M)
    if Mp != M:
        x2 = jnp.pad(x2, ((0, Mp - M), (0, 0)))
    th, Hp = _tile_and_pad(H, 512)
    w1p = w1.astype(jnp.bfloat16)
    b1p = b1.astype(jnp.float32).reshape(1, H)
    w2p = w2.astype(jnp.bfloat16)
    if Hp != H:
        w1p = jnp.pad(w1p, ((0, 0), (0, Hp - H)))
        b1p = jnp.pad(b1p, ((0, 0), (0, Hp - H)))
        w2p = jnp.pad(w2p, ((0, Hp - H), (0, 0)))

    out = pl.pallas_call(
        functools.partial(_ffn_kernel, eps=eps),
        grid=(Mp // tm, Hp // th),
        in_specs=[pl.BlockSpec((tm, D), lambda i, h: (i, 0)),
                  pl.BlockSpec((1, D), lambda i, h: (0, 0)),
                  pl.BlockSpec((1, D), lambda i, h: (0, 0)),
                  pl.BlockSpec((D, th), lambda i, h: (0, h)),
                  pl.BlockSpec((1, th), lambda i, h: (0, h)),
                  pl.BlockSpec((th, D), lambda i, h: (h, 0)),
                  pl.BlockSpec((1, D), lambda i, h: (0, 0))],
        out_specs=pl.BlockSpec((tm, D), lambda i, h: (i, 0)),
        out_shape=jax.ShapeDtypeStruct((Mp, D), x.dtype),
        scratch_shapes=[pltpu.VMEM((tm, D), jnp.bfloat16),
                        pltpu.VMEM((tm, D), jnp.float32)],
        compiler_params=pltpu.CompilerParams(
            dimension_semantics=("parallel", "arbitrary")),
    )(x2, gamma.reshape(1, D).astype(jnp.float32),
      beta.reshape(1, D).astype(jnp.float32),
      w1p, b1p, w2p, b2.reshape(1, D).astype(jnp.float32))
    if Mp != M:
        out = out[:M]
    return out.reshape(Bsz, Lp, D)


# ----------------------------------------------------------------------------
# Kernel 4: row-tiled LayerNorm (only the final after_norm)
# ----------------------------------------------------------------------------
def _layernorm_kernel(x_ref, g_ref, b_ref, o_ref, *, eps):
    x = x_ref[...].astype(jnp.float32)
    mu = jnp.mean(x, axis=-1, keepdims=True)
    var = jnp.mean(jnp.square(x - mu), axis=-1, keepdims=True)
    y = (x - mu) * lax.rsqrt(var + eps)
    o_ref[...] = (y * g_ref[...] + b_ref[...]).astype(o_ref.dtype)


def pallas_layernorm(x, gamma, beta, eps=1e-12):   # ESPnet LayerNorm eps=1e-12
    lead = x.shape[:-1]
    D = x.shape[-1]
    M = _prod(lead)
    x2 = x.reshape(M, D)
    tm, Mp = _tile_rows(M)
    if Mp != M:
        x2 = jnp.pad(x2, ((0, Mp - M), (0, 0)))
    out = pl.pallas_call(
        functools.partial(_layernorm_kernel, eps=eps),
        grid=(Mp // tm,),
        in_specs=[pl.BlockSpec((tm, D), lambda i: (i, 0)),
                  pl.BlockSpec((1, D), lambda i: (0, 0)),
                  pl.BlockSpec((1, D), lambda i: (0, 0))],
        out_specs=pl.BlockSpec((tm, D), lambda i: (i, 0)),
        out_shape=jax.ShapeDtypeStruct((Mp, D), jnp.float32),
        compiler_params=pltpu.CompilerParams(dimension_semantics=("parallel",)),
    )(x2, gamma.reshape(1, D).astype(jnp.float32),
      beta.reshape(1, D).astype(jnp.float32))
    if Mp != M:
        out = out[:M]
    return out.reshape(lead + (D,))


# ----------------------------------------------------------------------------
# Kernel 5: causal depthwise conv1d + SiLU, chunked over (batch, channel, time)
#           with a carried (K-1)-row tail (causal halo) scratch.
# ----------------------------------------------------------------------------
def _dwconv_silu_kernel(x_ref, w_ref, b_ref, o_ref, tail_ref, *, K):
    LT = x_ref.shape[0]

    @pl.when(pl.program_id(2) == 0)
    def _():
        tail_ref[...] = jnp.zeros_like(tail_ref)

    x = x_ref[...].astype(jnp.float32)                        # (LT, Cb)
    xf = jnp.concatenate([tail_ref[...], x], axis=0)          # (LT+K-1, Cb)
    acc = jnp.zeros(x.shape, jnp.float32) + b_ref[...]
    for k in range(K):                                        # K is small & static
        acc = acc + xf[k:k + LT, :] * w_ref[k:k + 1, :]
    tail_ref[...] = x[LT - (K - 1):, :]
    o_ref[...] = (acc * jax.nn.sigmoid(acc)).astype(o_ref.dtype)   # SiLU


def pallas_dwconv_silu(x, w, b):
    """x: (B, Lp, C) -> (B, Lp, C), causal depthwise conv + SiLU, bf16 out."""
    Bsz, Lp, C = x.shape
    K = w.shape[0]
    Cb = _pick_di_block(C)
    LT = _pick_time_block(Lp)
    return pl.pallas_call(
        functools.partial(_dwconv_silu_kernel, K=K),
        grid=(Bsz, C // Cb, Lp // LT),
        in_specs=[pl.BlockSpec((None, LT, Cb), lambda b_, d, t: (b_, t, d)),
                  pl.BlockSpec((K, Cb), lambda b_, d, t: (0, d)),
                  pl.BlockSpec((1, Cb), lambda b_, d, t: (0, d))],
        out_specs=pl.BlockSpec((None, LT, Cb), lambda b_, d, t: (b_, t, d)),
        out_shape=jax.ShapeDtypeStruct((Bsz, Lp, C), jnp.bfloat16),
        scratch_shapes=[pltpu.VMEM((K - 1, Cb), jnp.float32)],
        compiler_params=pltpu.CompilerParams(
            dimension_semantics=("parallel", "parallel", "arbitrary")),
    )(x.astype(jnp.bfloat16), w.astype(jnp.float32),
      b.reshape(1, C).astype(jnp.float32))


# ----------------------------------------------------------------------------
# Kernel 6: Mamba selective scan, time-chunked, with fused dt_proj+softplus and SiLU(z) gate.
# Grid = (batch, d_inner chunks, time chunks) -> both TensorCores busy on v7x even at B=1.
# ----------------------------------------------------------------------------
def _mamba_scan_kernel(u_ref, z_ref, dtin_ref, b_ref, c_ref, dtw_ref, dtb_ref,
                       At_ref, D_ref, y_ref, h_ref, yc_ref):
    CH = u_ref.shape[0]

    @pl.when(pl.program_id(2) == 0)                    # new (batch, d_inner chunk)
    def _():
        h_ref[...] = jnp.zeros_like(h_ref)

    u = u_ref[...].astype(jnp.float32)                 # (CH, di)
    # fused dt_proj + softplus (delta never touches HBM)
    dt = jnp.dot(dtin_ref[...], dtw_ref[...],
                 preferred_element_type=jnp.float32) + dtb_ref[...]
    dt = _softplus(dt)                                 # (CH, di)
    du = dt * u
    A_t = At_ref[...]                                  # (d_state, di) = A^T chunk
    Bt = b_ref[...].astype(jnp.float32).T              # (d_state, CH)
    Ct = c_ref[...].astype(jnp.float32).T              # (d_state, CH)

    # serial recurrence; dA / dBu are built per step in vregs (no chunk-sized spills)
    h = h_ref[...]
    for t in range(CH):
        dA = jnp.exp(dt[t:t + 1, :] * A_t)                        # (ds, di)
        h = dA * h + Bt[:, t:t + 1] * du[t:t + 1, :]              # (ds, di)
        yc_ref[pl.ds(t, 1), :] = jnp.sum(Ct[:, t:t + 1] * h, axis=0, keepdims=True)
    h_ref[...] = h

    z = z_ref[...].astype(jnp.float32)
    y = yc_ref[...] + D_ref[...] * u
    y_ref[...] = (y * (z * jax.nn.sigmoid(z))).astype(y_ref.dtype)   # fused SiLU(z) gate


def pallas_mamba_scan(u, z, dt_in, Bm, Cm, dt_w, dt_b, A_t, Dvec, *, CH):
    """u/z: (B, Lp, d_inner); dt_in: (B, Lp, dt_rank); Bm/Cm: (B, Lp, d_state)."""
    Bsz, Lp, d_inner = u.shape
    d_state = A_t.shape[0]
    dt_rank = dt_w.shape[0]
    rp = _round_up(dt_rank, 8)
    if rp != dt_rank:                                  # zero-pad tiny contraction dim
        dt_in = jnp.pad(dt_in, ((0, 0), (0, 0), (0, rp - dt_rank)))
        dt_w = jnp.pad(dt_w, ((0, rp - dt_rank), (0, 0)))
    di_blk = _pick_di_block(d_inner)

    return pl.pallas_call(
        _mamba_scan_kernel,
        grid=(Bsz, d_inner // di_blk, Lp // CH),
        in_specs=[
            pl.BlockSpec((None, CH, di_blk), lambda b, d, c: (b, c, d)),    # u
            pl.BlockSpec((None, CH, di_blk), lambda b, d, c: (b, c, d)),    # z
            pl.BlockSpec((None, CH, rp), lambda b, d, c: (b, c, 0)),        # dt part
            pl.BlockSpec((None, CH, d_state), lambda b, d, c: (b, c, 0)),   # B
            pl.BlockSpec((None, CH, d_state), lambda b, d, c: (b, c, 0)),   # C
            pl.BlockSpec((rp, di_blk), lambda b, d, c: (0, d)),             # dt_proj weight
            pl.BlockSpec((1, di_blk), lambda b, d, c: (0, d)),              # dt_proj bias
            pl.BlockSpec((d_state, di_blk), lambda b, d, c: (0, d)),        # A^T
            pl.BlockSpec((1, di_blk), lambda b, d, c: (0, d)),              # D
        ],
        out_specs=pl.BlockSpec((None, CH, di_blk), lambda b, d, c: (b, c, d)),
        out_shape=jax.ShapeDtypeStruct((Bsz, Lp, d_inner), jnp.bfloat16),
        scratch_shapes=[pltpu.VMEM((d_state, di_blk), jnp.float32),   # carried h
                        pltpu.VMEM((CH, di_blk), jnp.float32)],       # per-chunk y
        compiler_params=pltpu.CompilerParams(
            dimension_semantics=("parallel", "parallel", "arbitrary")),
    )(u.astype(jnp.bfloat16), z.astype(jnp.bfloat16), dt_in.astype(jnp.bfloat16),
      Bm.astype(jnp.bfloat16), Cm.astype(jnp.bfloat16),
      dt_w.astype(jnp.bfloat16), dt_b.reshape(1, d_inner).astype(jnp.float32),
      A_t.astype(jnp.float32), Dvec.reshape(1, d_inner).astype(jnp.float32))


# ----------------------------------------------------------------------------
# Model pieces (glue in JAX, hot paths in Pallas)
# ----------------------------------------------------------------------------
def sinusoidal_pe(length, d_model):
    position = jnp.arange(length, dtype=jnp.float32)[:, None]
    div_term = jnp.exp(jnp.arange(0, d_model, 2, dtype=jnp.float32)
                       * -(math.log(10000.0) / d_model))
    pe = jnp.zeros((length, d_model), jnp.float32)
    pe = pe.at[:, 0::2].set(jnp.sin(position * div_term))
    pe = pe.at[:, 1::2].set(jnp.cos(position * div_term))
    return pe


def _im2col_k3s2(x):
    """x: (B, H, W, Cin) -> (B, Ho, Wo, 9*Cin), kernel 3, stride 2, no padding."""
    Ho = (x.shape[1] - 3) // 2 + 1
    Wo = (x.shape[2] - 3) // 2 + 1
    cols = []
    for ki in range(3):
        for kj in range(3):
            cols.append(x[:, ki:ki + 2 * (Ho - 1) + 1:2, kj:kj + 2 * (Wo - 1) + 1:2, :])
    return jnp.concatenate(cols, axis=-1), Ho, Wo


def conv2d_subsample_posenc(xs, ep, d_model):
    """Conv2dSubsampling (two 3x3/stride-2 convs + ReLU, linear) + PositionalEncoding."""
    # TODO(synk): im2col materializes 9x patches in HBM; acceptable since it runs once per utterance.
    Bsz = xs.shape[0]
    x = xs[..., None]                                                  # (B, T, idim, 1) NHWC
    p1, T1, F1 = _im2col_k3s2(x)
    h1 = pallas_matmul(p1, ep["w1"], ep["b1"], activation="relu")      # (B,T1,F1,d_model) bf16
    p2, T2, F2 = _im2col_k3s2(h1)
    h2 = pallas_matmul(p2, ep["w2"], ep["b2"], activation="relu")      # (B,T2,F2,d_model) bf16
    # torch: (b,c,t,f) -> transpose(1,2).view(b,t,c*f)  => channel-major feature ordering
    h2 = jnp.transpose(h2, (0, 1, 3, 2)).reshape(Bsz, T2, d_model * F2)
    out = pallas_matmul(h2, ep["w_out"], ep["b_out"], out_dtype=jnp.float32)
    pe = sinusoidal_pe(T2, d_model)
    return out * math.sqrt(d_model) + pe[None]                         # dropout = identity


def mamba_block(x, lp, CH):
    """x + Mamba(LayerNorm(x)); LN fused into in_proj, dt_proj+softplus and SiLU(z) gate
    fused into the selective scan, residual fused into out_proj."""
    m = lp["mamba"]
    d_state, d_inner = m["A_t"].shape
    dt_rank = m["dt_w"].shape[0]
    xm, z = pallas_ln_inproj(x, lp["norm_mha_g"], lp["norm_mha_b"],
                             m["in_wx"], m["in_wz"])                   # (B,Lp,d_inner) x2, bf16
    xc = pallas_dwconv_silu(xm, m["conv_w"], m["conv_b"])              # causal dwconv + SiLU
    x_dbl = pallas_matmul(xc, m["xproj_w"])                            # (B,Lp,dt_rank+2*d_state)
    dt_in = x_dbl[..., :dt_rank]
    Bm = x_dbl[..., dt_rank:dt_rank + d_state]
    Cm = x_dbl[..., dt_rank + d_state:dt_rank + 2 * d_state]
    y = pallas_mamba_scan(xc, z, dt_in, Bm, Cm, m["dt_w"], m["dt_b"],
                          m["A_t"], m["D"], CH=CH)                     # gated y, bf16
    return pallas_matmul(y, m["out_w"], residual=x)


def encoder_forward(params, xs, masks):
    """xs: (B, T, idim), masks: (B, 1, T) -> (B, T', d_model), (B, 1, T')."""
    d_model = params["after_norm_g"].shape[0]
    x = conv2d_subsample_posenc(xs, params["embed"], d_model)          # (B, L, D) f32
    masks = masks[:, :, :-2:2][:, :, :-2:2]                            # Conv2dSubsampling mask
    Bsz, L, _ = x.shape
    # pad time ONCE (zeros, causal kernels never leak padding into real frames);
    # the whole layer stack runs on the padded shape -> no per-kernel pad/slice round trips.
    CH = min(32, _round_up(L, 8))                                      # scan time chunk
    Lp = _round_up(L, CH)
    if Lp != L:
        x = jnp.pad(x, ((0, 0), (0, Lp - L), (0, 0)))
    x = x.astype(jnp.bfloat16)
    # EncoderLayer (normalize_before=True, concat_after=False, no macaron, no cnn module):
    #   x = x + mamba(norm_mha(x));  x = x + ffn(norm_ff(x))
    for lp in params["layers"]:
        x = mamba_block(x, lp, CH)
        x = pallas_ffn(x, lp["norm_ff_g"], lp["norm_ff_b"],
                       lp["ff_w1"], lp["ff_b1"], lp["ff_w2"], lp["ff_b2"])
    x = pallas_layernorm(x, params["after_norm_g"], params["after_norm_b"])
    return x[:, :L, :], masks


# ----------------------------------------------------------------------------
# Deterministic parameter init (synthetic; shapes follow the module __init__)
# TODO(synk): layouts are synthetic-friendly (im2col column order, conv_w as (d_conv, d_inner),
# in_proj stored as its two halves in_wx/in_wz); permute when loading real torch checkpoints.
# ----------------------------------------------------------------------------
def init_params(key, idim, d_model, linear_units, num_blocks,
                d_state, d_conv, expand, dt_rank="auto",
                dt_min=1e-3, dt_max=0.1, dt_init_floor=1e-4):
    d_inner = expand * d_model
    if dt_rank == "auto":
        dt_rank = math.ceil(d_model / 16)
    keys = iter(jax.random.split(key, 8 + num_blocks * 12))

    def nrm(shape, scale=0.02):
        return scale * jax.random.normal(next(keys), shape, jnp.float32)

    f2 = ((idim - 1) // 2 - 1) // 2
    embed = dict(
        w1=nrm((9, d_model)), b1=jnp.zeros((d_model,), jnp.float32),
        w2=nrm((9 * d_model, d_model)), b2=jnp.zeros((d_model,), jnp.float32),
        w_out=nrm((d_model * f2, d_model)), b_out=jnp.zeros((d_model,), jnp.float32),
    )

    A_log = jnp.log(jnp.arange(1, d_state + 1, dtype=jnp.float32))     # S4D-real init
    A_log = jnp.broadcast_to(A_log[None, :], (d_inner, d_state))
    A_t = -jnp.exp(A_log).T                                            # (d_state, d_inner)

    layers = []
    for _ in range(num_blocks):
        uu = jax.random.uniform(next(keys), (d_inner,), jnp.float32)
        dt = jnp.exp(uu * (math.log(dt_max) - math.log(dt_min)) + math.log(dt_min))
        dt = jnp.maximum(dt, dt_init_floor)
        dt_b = dt + jnp.log(-jnp.expm1(-dt))                           # inverse softplus
        mamba = dict(
            in_wx=nrm((d_model, d_inner)), in_wz=nrm((d_model, d_inner)),
            conv_w=nrm((d_conv, d_inner), 0.2), conv_b=jnp.zeros((d_inner,), jnp.float32),
            xproj_w=nrm((d_inner, dt_rank + 2 * d_state)),
            dt_w=nrm((dt_rank, d_inner), 0.1), dt_b=dt_b,
            A_t=A_t, D=jnp.ones((d_inner,), jnp.float32),
            out_w=nrm((d_inner, d_model)),
        )
        layers.append(dict(
            norm_mha_g=jnp.ones((d_model,), jnp.float32),
            norm_mha_b=jnp.zeros((d_model,), jnp.float32),
            norm_ff_g=jnp.ones((d_model,), jnp.float32),
            norm_ff_b=jnp.zeros((d_model,), jnp.float32),
            ff_w1=nrm((d_model, linear_units)), ff_b1=jnp.zeros((linear_units,), jnp.float32),
            ff_w2=nrm((linear_units, d_model)), ff_b2=jnp.zeros((d_model,), jnp.float32),
            mamba=mamba,
        ))
    return dict(embed=embed, layers=layers,
                after_norm_g=jnp.ones((d_model,), jnp.float32),
                after_norm_b=jnp.zeros((d_model,), jnp.float32))


# ----------------------------------------------------------------------------
if __name__ == "__main__":
    key = jax.random.PRNGKey(0)
    B, T, idim = 2, 32, 16
    d_model, linear_units, num_blocks = 32, 64, 2
    d_state, d_conv, expand = 8, 4, 2

    kp, kx = jax.random.split(key)
    params = init_params(kp, idim, d_model, linear_units, num_blocks,
                         d_state, d_conv, expand, "auto")
    xs = jax.random.normal(kx, (B, T, idim), jnp.float32)
    masks = jnp.ones((B, 1, T), dtype=jnp.bool_)

    fwd = jax.jit(functools.partial(encoder_forward, params))
    out, out_masks = fwd(xs, masks)
    jax.block_until_ready(out)

    T_out = ((T - 1) // 2 - 1) // 2   # conv_subsampling_factor = 4
    assert out.shape == (B, T_out, d_model), out.shape
    assert out_masks.shape == (B, 1, T_out), out_masks.shape
    # TODO(synk): dropout / stochastic-depth are identity (inference); Mamba's fused CUDA fast
    # path is implemented via its mathematically-equivalent chunked reference selective scan.
    print("KERNEL_OK")
</pallas_src>

<mosaic_0001>
module attributes {stable_mosaic.version = 11 : i64} {
  func.func @_mm_kernel(%arg0: i32, %arg1: i32, %arg2: i32, %arg3: memref<216x9xbf16, #tpu.memory_space<vmem>>, %arg4: memref<9x32xbf16, #tpu.memory_space<vmem>>, %arg5: memref<1x32xf32, #tpu.memory_space<vmem>>, %arg6: memref<216x32xbf16, #tpu.memory_space<vmem>>) attributes {dimension_semantics = [#tpu.dimension_semantics<parallel>, #tpu.dimension_semantics<parallel>, #tpu.dimension_semantics<arbitrary>], iteration_bounds = array<i64: 1, 1, 1>, scalar_prefetch = 0 : i64, scratch_operands = 0 : i64, tpu.core_type = #tpu.core_type<tc>, window_params = [{transform_indices = @transform_0, window_bounds = array<i64: 216, 9>}, {transform_indices = @transform_1, window_bounds = array<i64: 9, 32>}, {transform_indices = @transform_2, window_bounds = array<i64: 1, 32>}, {transform_indices = @transform_3, window_bounds = array<i64: 216, 32>}]} {
    %c0 = arith.constant 0 : index
    %c0_0 = arith.constant 0 : index
    %0 = vector.load %arg3[%c0, %c0_0] : memref<216x9xbf16, #tpu.memory_space<vmem>>, vector<216x9xbf16>
    %c0_1 = arith.constant 0 : index
    %c0_2 = arith.constant 0 : index
    %1 = vector.load %arg4[%c0_1, %c0_2] : memref<9x32xbf16, #tpu.memory_space<vmem>>, vector<9x32xbf16>
    %cst = arith.constant dense<0.000000e+00> : vector<216x32xf32>
    %2 = tpu.matmul %0, %1, %cst {dimension_numbers = #tpu.dot_dimension_numbers<[1], [0], [0], [1], [0, 0, 1, 1], [], []>} : vector<216x9xbf16>, vector<9x32xbf16>, vector<216x32xf32> -> vector<216x32xf32>
    %c0_3 = arith.constant 0 : index
    %c0_4 = arith.constant 0 : index
    %3 = vector.load %arg5[%c0_3, %c0_4] : memref<1x32xf32, #tpu.memory_space<vmem>>, vector<1x32xf32>
    %4 = vector.broadcast %3 : vector<1x32xf32> to vector<216x32xf32>
    %5 = arith.addf %2, %4 : vector<216x32xf32>
    %cst_5 = arith.constant 0.000000e+00 : f32
    %6 = vector.broadcast %cst_5 : f32 to vector<216x32xf32>
    %7 = arith.maximumf %5, %6 : vector<216x32xf32>
    %8 = arith.truncf %7 : vector<216x32xf32> to vector<216x32xbf16>
    %c0_6 = arith.constant 0 : index
    %c0_7 = arith.constant 0 : index
    %9 = vector.load %arg6[%c0_6, %c0_7] : memref<216x32xbf16, #tpu.memory_space<vmem>>, vector<216x32xbf16>
    tpu.vector_store %arg6[%c0_6, %c0_7], %8 {strides = array<i32>} : memref<216x32xbf16, #tpu.memory_space<vmem>>, vector<216x32xbf16>,
    return
  }
  func.func @transform_0(%arg0: i32, %arg1: i32, %arg2: i32) -> (i32, i32) {
    %c0_i32 = arith.constant 0 : i32
    return %arg0, %arg2 : i32, i32
  }
  func.func @transform_1(%arg0: i32, %arg1: i32, %arg2: i32) -> (i32, i32) {
    %c0_i32 = arith.constant 0 : i32
    return %arg2, %arg1 : i32, i32
  }
  func.func @transform_2(%arg0: i32, %arg1: i32, %arg2: i32) -> (i32, i32) {
    %c0_i32 = arith.constant 0 : i32
    %c0_i32_0 = arith.constant 0 : i32
    return %c0_i32, %arg1 : i32, i32
  }
  func.func @transform_3(%arg0: i32, %arg1: i32, %arg2: i32) -> (i32, i32) {
    %c0_i32 = arith.constant 0 : i32
    return %arg0, %arg1 : i32, i32
  }
}

module attributes {stable_mosaic.version = 11 : i64} {
  func.func @_mm_kernel(%arg0: i32, %arg1: i32, %arg2: i32, %arg3: memref<48x288xbf16, #tpu.memory_space<vmem>>, %arg4: memref<288x32xbf16, #tpu.memory_space<vmem>>, %arg5: memref<1x32xf32, #tpu.memory_space<vmem>>, %arg6: memref<48x32xbf16, #tpu.memory_space<vmem>>) attributes {dimension_semantics = [#tpu.dimension_semantics<parallel>, #tpu.dimension_semantics<parallel>, #tpu.dimension_semantics<arbitrary>], iteration_bounds = array<i64: 1, 1, 1>, scalar_prefetch = 0 : i64, scratch_operands = 0 : i64, tpu.core_type = #tpu.core_type<tc>, window_params = [{transform_indices = @transform_0, window_bounds = array<i64: 48, 288>}, {transform_indices = @transform_1, window_bounds = array<i64: 288, 32>}, {transform_indices = @transform_2, window_bounds = array<i64: 1, 32>}, {transform_indices = @transform_3, window_bounds = array<i64: 48, 32>}]} {
    %c0 = arith.constant 0 : index
    %c0_0 = arith.constant 0 : index
    %0 = vector.load %arg3[%c0, %c0_0] : memref<48x288xbf16, #tpu.memory_space<vmem>>, vector<48x288xbf16>
    %c0_1 = arith.constant 0 : index
    %c0_2 = arith.constant 0 : index
    %1 = vector.load %arg4[%c0_1, %c0_2] : memref<288x32xbf16, #tpu.memory_space<vmem>>, vector<288x32xbf16>
    %cst = arith.constant dense<0.000000e+00> : vector<48x32xf32>
    %2 = tpu.matmul %0, %1, %cst {dimension_numbers = #tpu.dot_dimension_numbers<[1], [0], [0], [1], [0, 0, 1, 1], [], []>} : vector<48x288xbf16>, vector<288x32xbf16>, vector<48x32xf32> -> vector<48x32xf32>
    %c0_3 = arith.constant 0 : index
    %c0_4 = arith.constant 0 : index
    %3 = vector.load %arg5[%c0_3, %c0_4] : memref<1x32xf32, #tpu.memory_space<vmem>>, vector<1x32xf32>
    %4 = vector.broadcast %3 : vector<1x32xf32> to vector<48x32xf32>
    %5 = arith.addf %2, %4 : vector<48x32xf32>
    %cst_5 = arith.constant 0.000000e+00 : f32
    %6 = vector.broadcast %cst_5 : f32 to vector<48x32xf32>
    %7 = arith.maximumf %5, %6 : vector<48x32xf32>
    %8 = arith.truncf %7 : vector<48x32xf32> to vector<48x32xbf16>
    %c0_6 = arith.constant 0 : index
    %c0_7 = arith.constant 0 : index
    %9 = vector.load %arg6[%c0_6, %c0_7] : memref<48x32xbf16, #tpu.memory_space<vmem>>, vector<48x32xbf16>
    tpu.vector_store %arg6[%c0_6, %c0_7], %8 {strides = array<i32>} : memref<48x32xbf16, #tpu.memory_space<vmem>>, vector<48x32xbf16>,
    return
  }
  func.func @transform_0(%arg0: i32, %arg1: i32, %arg2: i32) -> (i32, i32) {
    %c0_i32 = arith.constant 0 : i32
    return %arg0, %arg2 : i32, i32
  }
  func.func @transform_1(%arg0: i32, %arg1: i32, %arg2: i32) -> (i32, i32) {
    %c0_i32 = arith.constant 0 : i32
    return %arg2, %arg1 : i32, i32
  }
  func.func @transform_2(%arg0: i32, %arg1: i32, %arg2: i32) -> (i32, i32) {
    %c0_i32 = arith.constant 0 : i32
    %c0_i32_0 = arith.constant 0 : i32
    return %c0_i32, %arg1 : i32, i32
  }
  func.func @transform_3(%arg0: i32, %arg1: i32, %arg2: i32) -> (i32, i32) {
    %c0_i32 = arith.constant 0 : i32
    return %arg0, %arg1 : i32, i32
  }
}

module attributes {stable_mosaic.version = 11 : i64} {
  func.func @_ln_inproj_kernel(%arg0: i32, %arg1: i32, %arg2: memref<16x32xbf16, #tpu.memory_space<vmem>>, %arg3: memref<1x32xf32, #tpu.memory_space<vmem>>, %arg4: memref<1x32xf32, #tpu.memory_space<vmem>>, %arg5: memref<32x64xbf16, #tpu.memory_space<vmem>>, %arg6: memref<32x64xbf16, #tpu.memory_space<vmem>>, %arg7: memref<16x64xbf16, #tpu.memory_space<vmem>>, %arg8: memref<16x64xbf16, #tpu.memory_space<vmem>>, %arg9: memref<16x32xbf16, #tpu.memory_space<vmem>>) attributes {dimension_semantics = [#tpu.dimension_semantics<parallel>, #tpu.dimension_semantics<arbitrary>], iteration_bounds = array<i64: 1, 1>, scalar_prefetch = 0 : i64, scratch_operands = 1 : i64, tpu.core_type = #tpu.core_type<tc>, window_params = [{transform_indices = @transform_0, window_bounds = array<i64: 16, 32>}, {pipeline_mode = #tpu.pipeline_mode<synchronous>, transform_indices = @transform_1, window_bounds = array<i64: 1, 32>}, {pipeline_mode = #tpu.pipeline_mode<synchronous>, transform_indices = @transform_2, window_bounds = array<i64: 1, 32>}, {transform_indices = @transform_3, window_bounds = array<i64: 32, 64>}, {transform_indices = @transform_4, window_bounds = array<i64: 32, 64>}, {transform_indices = @transform_5, window_bounds = array<i64: 16, 64>}, {transform_indices = @transform_6, window_bounds = array<i64: 16, 64>}]} {
    %c0_i32 = arith.constant 0 : i32
    %0 = arith.cmpi eq, %arg1, %c0_i32 : i32
    %1 = arith.extui %0 : i1 to i32
    %c0_i32_0 = arith.constant 0 : i32
    %2 = arith.cmpi ne, %1, %c0_i32_0 : i32
    scf.if %2 {
      %c0_11 = arith.constant 0 : index
      %c0_12 = arith.constant 0 : index
      %12 = vector.load %arg2[%c0_11, %c0_12] : memref<16x32xbf16, #tpu.memory_space<vmem>>, vector<16x32xbf16>
      %13 = arith.extf %12 : vector<16x32xbf16> to vector<16x32xf32>
      %cst_13 = arith.constant dense<0.000000e+00> : vector<16xf32>
      %14 = vector.multi_reduction <add>, %13, %cst_13 [1] : vector<16x32xf32> to vector<16xf32>
      %15 = vector.shape_cast %14 : vector<16xf32> to vector<16x1xf32>
      %cst_14 = arith.constant 3.200000e+01 : f32
      %16 = vector.broadcast %cst_14 : f32 to vector<16x1xf32>
      %17 = arith.divf %15, %16 : vector<16x1xf32>
      %18 = vector.broadcast %17 : vector<16x1xf32> to vector<16x32xf32>
      %19 = arith.subf %13, %18 : vector<16x32xf32>
      %20 = arith.mulf %19, %19 : vector<16x32xf32>
      %cst_15 = arith.constant dense<0.000000e+00> : vector<16xf32>
      %21 = vector.multi_reduction <add>, %20, %cst_15 [1] : vector<16x32xf32> to vector<16xf32>
      %22 = vector.shape_cast %21 : vector<16xf32> to vector<16x1xf32>
      %cst_16 = arith.constant 3.200000e+01 : f32
      %23 = vector.broadcast %cst_16 : f32 to vector<16x1xf32>
      %24 = arith.divf %22, %23 : vector<16x1xf32>
      %25 = vector.broadcast %17 : vector<16x1xf32> to vector<16x32xf32>
      %26 = arith.subf %13, %25 : vector<16x32xf32>
      %cst_17 = arith.constant 9.99999996E-13 : f32
      %27 = vector.broadcast %cst_17 : f32 to vector<16x1xf32>
      %28 = arith.addf %24, %27 : vector<16x1xf32>
      %29 = math.rsqrt %28 : vector<16x1xf32>
      %30 = vector.broadcast %29 : vector<16x1xf32> to vector<16x32xf32>
      %31 = arith.mulf %26, %30 : vector<16x32xf32>
      %c0_18 = arith.constant 0 : index
      %c0_19 = arith.constant 0 : index
      %32 = vector.load %arg3[%c0_18, %c0_19] : memref<1x32xf32, #tpu.memory_space<vmem>>, vector<1x32xf32>
      %33 = vector.broadcast %32 : vector<1x32xf32> to vector<16x32xf32>
      %34 = arith.mulf %31, %33 : vector<16x32xf32>
      %c0_20 = arith.constant 0 : index
      %c0_21 = arith.constant 0 : index
      %35 = vector.load %arg4[%c0_20, %c0_21] : memref<1x32xf32, #tpu.memory_space<vmem>>, vector<1x32xf32>
      %36 = vector.broadcast %35 : vector<1x32xf32> to vector<16x32xf32>
      %37 = arith.addf %34, %36 : vector<16x32xf32>
      %38 = arith.truncf %37 : vector<16x32xf32> to vector<16x32xbf16>
      %c0_22 = arith.constant 0 : index
      %c0_23 = arith.constant 0 : index
      %39 = vector.load %arg9[%c0_22, %c0_23] : memref<16x32xbf16, #tpu.memory_space<vmem>>, vector<16x32xbf16>
      tpu.vector_store %arg9[%c0_22, %c0_23], %38 {strides = array<i32>} : memref<16x32xbf16, #tpu.memory_space<vmem>>, vector<16x32xbf16>,
    } else {
    }
    %c0 = arith.constant 0 : index
    %c0_1 = arith.constant 0 : index
    %3 = vector.load %arg9[%c0, %c0_1] : memref<16x32xbf16, #tpu.memory_space<vmem>>, vector<16x32xbf16>
    %c0_2 = arith.constant 0 : index
    %c0_3 = arith.constant 0 : index
    %4 = vector.load %arg5[%c0_2, %c0_3] : memref<32x64xbf16, #tpu.memory_space<vmem>>, vector<32x64xbf16>
    %cst = arith.constant dense<0.000000e+00> : vector<16x64xf32>
    %5 = tpu.matmul %3, %4, %cst {dimension_numbers = #tpu.dot_dimension_numbers<[1], [0], [0], [1], [0, 0, 1, 1], [], []>} : vector<16x32xbf16>, vector<32x64xbf16>, vector<16x64xf32> -> vector<16x64xf32>
    %6 = arith.truncf %5 : vector<16x64xf32> to vector<16x64xbf16>
    %c0_4 = arith.constant 0 : index
    %c0_5 = arith.constant 0 : index
    %7 = vector.load %arg7[%c0_4, %c0_5] : memref<16x64xbf16, #tpu.memory_space<vmem>>, vector<16x64xbf16>
    tpu.vector_store %arg7[%c0_4, %c0_5], %6 {strides = array<i32>} : memref<16x64xbf16, #tpu.memory_space<vmem>>, vector<16x64xbf16>,
    %c0_6 = arith.constant 0 : index
    %c0_7 = arith.constant 0 : index
    %8 = vector.load %arg6[%c0_6, %c0_7] : memref<32x64xbf16, #tpu.memory_space<vmem>>, vector<32x64xbf16>
    %cst_8 = arith.constant dense<0.000000e+00> : vector<16x64xf32>
    %9 = tpu.matmul %3, %8, %cst_8 {dimension_numbers = #tpu.dot_dimension_numbers<[1], [0], [0], [1], [0, 0, 1, 1], [], []>} : vector<16x32xbf16>, vector<32x64xbf16>, vector<16x64xf32> -> vector<16x64xf32>
    %10 = arith.truncf %9 : vector<16x64xf32> to vector<16x64xbf16>
    %c0_9 = arith.constant 0 : index
    %c0_10 = arith.constant 0 : index
    %11 = vector.load %arg8[%c0_9, %c0_10] : memref<16x64xbf16, #tpu.memory_space<vmem>>, vector<16x64xbf16>
    tpu.vector_store %arg8[%c0_9, %c0_10], %10 {strides = array<i32>} : memref<16x64xbf16, #tpu.memory_space<vmem>>, vector<16x64xbf16>,
    return
  }
  func.func @transform_0(%arg0: i32, %arg1: i32) -> (i32, i32) {
    %c0_i32 = arith.constant 0 : i32
    %c0_i32_0 = arith.constant 0 : i32
    return %arg0, %c0_i32 : i32, i32
  }
  func.func @transform_1(%arg0: i32, %arg1: i32) -> (i32, i32) {
    %c0_i32 = arith.constant 0 : i32
    %c0_i32_0 = arith.constant 0 : i32
    %c0_i32_1 = arith.constant 0 : i32
    return %c0_i32, %c0_i32_0 : i32, i32
  }
  func.func @transform_2(%arg0: i32, %arg1: i32) -> (i32, i32) {
    %c0_i32 = arith.constant 0 : i32
    %c0_i32_0 = arith.constant 0 : i32
    %c0_i32_1 = arith.constant 0 : i32
    return %c0_i32, %c0_i32_0 : i32, i32
  }
  func.func @transform_3(%arg0: i32, %arg1: i32) -> (i32, i32) {
    %c0_i32 = arith.constant 0 : i32
    %c0_i32_0 = arith.constant 0 : i32
    return %c0_i32, %arg1 : i32, i32
  }
  func.func @transform_4(%arg0: i32, %arg1: i32) -> (i32, i32) {
    %c0_i32 = arith.constant 0 : i32
    %c0_i32_0 = arith.constant 0 : i32
    return %c0_i32, %arg1 : i32, i32
  }
  func.func @transform_5(%arg0: i32, %arg1: i32) -> (i32, i32) {
    %c0_i32 = arith.constant 0 : i32
    return %arg0, %arg1 : i32, i32
  }
  func.func @transform_6(%arg0: i32, %arg1: i32) -> (i32, i32) {
    %c0_i32 = arith.constant 0 : i32
    return %arg0, %arg1 : i32, i32
  }
}

module attributes {stable_mosaic.version = 11 : i64} {
  func.func @_mm_kernel(%arg0: i32, %arg1: i32, %arg2: i32, %arg3: memref<16x96xbf16, #tpu.memory_space<vmem>>, %arg4: memref<96x32xbf16, #tpu.memory_space<vmem>>, %arg5: memref<1x32xf32, #tpu.memory_space<vmem>>, %arg6: memref<16x32xf32, #tpu.memory_space<vmem>>) attributes {dimension_semantics = [#tpu.dimension_semantics<parallel>, #tpu.dimension_semantics<parallel>, #tpu.dimension_semantics<arbitrary>], iteration_bounds = array<i64: 1, 1, 1>, scalar_prefetch = 0 : i64, scratch_operands = 0 : i64, tpu.core_type = #tpu.core_type<tc>, window_params = [{transform_indices = @transform_0, window_bounds = array<i64: 16, 96>}, {transform_indices = @transform_1, window_bounds = array<i64: 96, 32>}, {transform_indices = @transform_2, window_bounds = array<i64: 1, 32>}, {transform_indices = @transform_3, window_bounds = array<i64: 16, 32>}]} {
    %c0 = arith.constant 0 : index
    %c0_0 = arith.constant 0 : index
    %0 = vector.load %arg3[%c0, %c0_0] : memref<16x96xbf16, #tpu.memory_space<vmem>>, vector<16x96xbf16>
    %c0_1 = arith.constant 0 : index
    %c0_2 = arith.constant 0 : index
    %1 = vector.load %arg4[%c0_1, %c0_2] : memref<96x32xbf16, #tpu.memory_space<vmem>>, vector<96x32xbf16>
    %cst = arith.constant dense<0.000000e+00> : vector<16x32xf32>
    %2 = tpu.matmul %0, %1, %cst {dimension_numbers = #tpu.dot_dimension_numbers<[1], [0], [0], [1], [0, 0, 1, 1], [], []>} : vector<16x96xbf16>, vector<96x32xbf16>, vector<16x32xf32> -> vector<16x32xf32>
    %c0_3 = arith.constant 0 : index
    %c0_4 = arith.constant 0 : index
    %3 = vector.load %arg5[%c0_3, %c0_4] : memref<1x32xf32, #tpu.memory_space<vmem>>, vector<1x32xf32>
    %4 = vector.broadcast %3 : vector<1x32xf32> to vector<16x32xf32>
    %5 = arith.addf %2, %4 : vector<16x32xf32>
    %c0_5 = arith.constant 0 : index
    %c0_6 = arith.constant 0 : index
    %6 = vector.load %arg6[%c0_5, %c0_6] : memref<16x32xf32, #tpu.memory_space<vmem>>, vector<16x32xf32>
    tpu.vector_store %arg6[%c0_5, %c0_6], %5 {strides = array<i32>} : memref<16x32xf32, #tpu.memory_space<vmem>>, vector<16x32xf32>,
    return
  }
  func.func @transform_0(%arg0: i32, %arg1: i32, %arg2: i32) -> (i32, i32) {
    %c0_i32 = arith.constant 0 : i32
    return %arg0, %arg2 : i32, i32
  }
  func.func @transform_1(%arg0: i32, %arg1: i32, %arg2: i32) -> (i32, i32) {
    %c0_i32 = arith.constant 0 : i32
    return %arg2, %arg1 : i32, i32
  }
  func.func @transform_2(%arg0: i32, %arg1: i32, %arg2: i32) -> (i32, i32) {
    %c0_i32 = arith.constant 0 : i32
    %c0_i32_0 = arith.constant 0 : i32
    return %c0_i32, %arg1 : i32, i32
  }
  func.func @transform_3(%arg0: i32, %arg1: i32, %arg2: i32) -> (i32, i32) {
    %c0_i32 = arith.constant 0 : i32
    return %arg0, %arg1 : i32, i32
  }
}

module attributes {stable_mosaic.version = 11 : i64} {
  func.func @_mm_kernel(%arg0: i32, %arg1: i32, %arg2: i32, %arg3: memref<16x64xbf16, #tpu.memory_space<vmem>>, %arg4: memref<64x18xbf16, #tpu.memory_space<vmem>>, %arg5: memref<1x18xf32, #tpu.memory_space<vmem>>, %arg6: memref<16x18xbf16, #tpu.memory_space<vmem>>) attributes {dimension_semantics = [#tpu.dimension_semantics<parallel>, #tpu.dimension_semantics<parallel>, #tpu.dimension_semantics<arbitrary>], iteration_bounds = array<i64: 1, 1, 1>, scalar_prefetch = 0 : i64, scratch_operands = 0 : i64, tpu.core_type = #tpu.core_type<tc>, window_params = [{transform_indices = @transform_0, window_bounds = array<i64: 16, 64>}, {transform_indices = @transform_1, window_bounds = array<i64: 64, 18>}, {transform_indices = @transform_2, window_bounds = array<i64: 1, 18>}, {transform_indices = @transform_3, window_bounds = array<i64: 16, 18>}]} {
    %c0 = arith.constant 0 : index
    %c0_0 = arith.constant 0 : index
    %0 = vector.load %arg3[%c0, %c0_0] : memref<16x64xbf16, #tpu.memory_space<vmem>>, vector<16x64xbf16>
    %c0_1 = arith.constant 0 : index
    %c0_2 = arith.constant 0 : index
    %1 = vector.load %arg4[%c0_1, %c0_2] : memref<64x18xbf16, #tpu.memory_space<vmem>>, vector<64x18xbf16>
    %cst = arith.constant dense<0.000000e+00> : vector<16x18xf32>
    %2 = tpu.matmul %0, %1, %cst {dimension_numbers = #tpu.dot_dimension_numbers<[1], [0], [0], [1], [0, 0, 1, 1], [], []>} : vector<16x64xbf16>, vector<64x18xbf16>, vector<16x18xf32> -> vector<16x18xf32>
    %c0_3 = arith.constant 0 : index
    %c0_4 = arith.constant 0 : index
    %3 = vector.load %arg5[%c0_3, %c0_4] : memref<1x18xf32, #tpu.memory_space<vmem>>, vector<1x18xf32>
    %4 = vector.broadcast %3 : vector<1x18xf32> to vector<16x18xf32>
    %5 = arith.addf %2, %4 : vector<16x18xf32>
    %6 = arith.truncf %5 : vector<16x18xf32> to vector<16x18xbf16>
    %c0_5 = arith.constant 0 : index
    %c0_6 = arith.constant 0 : index
    %7 = vector.load %arg6[%c0_5, %c0_6] : memref<16x18xbf16, #tpu.memory_space<vmem>>, vector<16x18xbf16>
    tpu.vector_store %arg6[%c0_5, %c0_6], %6 {strides = array<i32>} : memref<16x18xbf16, #tpu.memory_space<vmem>>, vector<16x18xbf16>,
    return
  }
  func.func @transform_0(%arg0: i32, %arg1: i32, %arg2: i32) -> (i32, i32) {
    %c0_i32 = arith.constant 0 : i32
    return %arg0, %arg2 : i32, i32
  }
  func.func @transform_1(%arg0: i32, %arg1: i32, %arg2: i32) -> (i32, i32) {
    %c0_i32 = arith.constant 0 : i32
    return %arg2, %arg1 : i32, i32
  }
  func.func @transform_2(%arg0: i32, %arg1: i32, %arg2: i32) -> (i32, i32) {
    %c0_i32 = arith.constant 0 : i32
    %c0_i32_0 = arith.constant 0 : i32
    return %c0_i32, %arg1 : i32, i32
  }
  func.func @transform_3(%arg0: i32, %arg1: i32, %arg2: i32) -> (i32, i32) {
    %c0_i32 = arith.constant 0 : i32
    return %arg0, %arg1 : i32, i32
  }
}

module attributes {stable_mosaic.version = 11 : i64} {
  func.func @_dwconv_silu_kernel(%arg0: i32, %arg1: i32, %arg2: i32, %arg3: memref<1x8x64xbf16, #tpu.memory_space<vmem>>, %arg4: memref<4x64xf32, #tpu.memory_space<vmem>>, %arg5: memref<1x64xf32, #tpu.memory_space<vmem>>, %arg6: memref<1x8x64xbf16, #tpu.memory_space<vmem>>, %arg7: memref<3x64xf32, #tpu.memory_space<vmem>>) attributes {dimension_semantics = [#tpu.dimension_semantics<parallel>, #tpu.dimension_semantics<parallel>, #tpu.dimension_semantics<arbitrary>], iteration_bounds = array<i64: 2, 1, 1>, scalar_prefetch = 0 : i64, scratch_operands = 1 : i64, tpu.core_type = #tpu.core_type<tc>, window_params = [{transform_indices = @transform_0, window_bounds = array<i64: 1, 8, 64>}, {transform_indices = @transform_1, window_bounds = array<i64: 4, 64>}, {transform_indices = @transform_2, window_bounds = array<i64: 1, 64>}, {transform_indices = @transform_3, window_bounds = array<i64: 1, 8, 64>}]} {
    %c0_i32 = arith.constant 0 : i32
    %0 = arith.cmpi eq, %arg2, %c0_i32 : i32
    %1 = arith.extui %0 : i1 to i32
    %c0_i32_0 = arith.constant 0 : i32
    %2 = arith.cmpi ne, %1, %c0_i32_0 : i32
    scf.if %2 {
      %cst_18 = arith.constant 0.000000e+00 : f32
      %44 = vector.broadcast %cst_18 : f32 to vector<3x64xf32>
      %c0_19 = arith.constant 0 : index
      %c0_20 = arith.constant 0 : index
      %45 = vector.load %arg7[%c0_19, %c0_20] : memref<3x64xf32, #tpu.memory_space<vmem>>, vector<3x64xf32>
      tpu.vector_store %arg7[%c0_19, %c0_20], %44 {strides = array<i32>} : memref<3x64xf32, #tpu.memory_space<vmem>>, vector<3x64xf32>,
    } else {
    }
    %c0 = arith.constant 0 : index
    %c0_1 = arith.constant 0 : index
    %c0_2 = arith.constant 0 : index
    %3 = vector.load %arg3[%c0, %c0_1, %c0_2] : memref<1x8x64xbf16, #tpu.memory_space<vmem>>, vector<1x8x64xbf16>
    %4 = vector.shape_cast %3 : vector<1x8x64xbf16> to vector<8x64xbf16>
    %5 = arith.extf %4 : vector<8x64xbf16> to vector<8x64xf32>
    %c0_3 = arith.constant 0 : index
    %c0_4 = arith.constant 0 : index
    %6 = vector.load %arg7[%c0_3, %c0_4] : memref<3x64xf32, #tpu.memory_space<vmem>>, vector<3x64xf32>
    %7 = tpu.concatenate %6, %5 in 0 : vector<3x64xf32>, vector<8x64xf32> -> vector<11x64xf32>
    %cst = arith.constant 0.000000e+00 : f32
    %8 = vector.broadcast %cst : f32 to vector<8x64xf32>
    %c0_5 = arith.constant 0 : index
    %c0_6 = arith.constant 0 : index
    %9 = vector.load %arg5[%c0_5, %c0_6] : memref<1x64xf32, #tpu.memory_space<vmem>>, vector<1x64xf32>
    %10 = vector.broadcast %9 : vector<1x64xf32> to vector<8x64xf32>
    %11 = arith.addf %8, %10 : vector<8x64xf32>
    %12 = vector.extract_strided_slice %7 {offsets = [0, 0], sizes = [8, 64], strides = [1, 1]} : vector<11x64xf32> to vector<8x64xf32>
    %c0_7 = arith.constant 0 : index
    %c0_8 = arith.constant 0 : index
    %13 = vector.load %arg4[%c0_7, %c0_8] : memref<4x64xf32, #tpu.memory_space<vmem>>, vector<1x64xf32>
    %14 = vector.broadcast %13 : vector<1x64xf32> to vector<8x64xf32>
    %15 = arith.mulf %12, %14 : vector<8x64xf32>
    %16 = arith.addf %11, %15 : vector<8x64xf32>
    %17 = vector.extract_strided_slice %7 {offsets = [1, 0], sizes = [8, 64], strides = [1, 1]} : vector<11x64xf32> to vector<8x64xf32>
    %c1 = arith.constant 1 : index
    %c0_9 = arith.constant 0 : index
    %18 = vector.load %arg4[%c1, %c0_9] : memref<4x64xf32, #tpu.memory_space<vmem>>, vector<1x64xf32>
    %19 = vector.broadcast %18 : vector<1x64xf32> to vector<8x64xf32>
    %20 = arith.mulf %17, %19 : vector<8x64xf32>
    %21 = arith.addf %16, %20 : vector<8x64xf32>
    %22 = vector.extract_strided_slice %7 {offsets = [2, 0], sizes = [8, 64], strides = [1, 1]} : vector<11x64xf32> to vector<8x64xf32>
    %c2 = arith.constant 2 : index
    %c0_10 = arith.constant 0 : index
    %23 = vector.load %arg4[%c2, %c0_10] : memref<4x64xf32, #tpu.memory_space<vmem>>, vector<1x64xf32>
    %24 = vector.broadcast %23 : vector<1x64xf32> to vector<8x64xf32>
    %25 = arith.mulf %22, %24 : vector<8x64xf32>
    %26 = arith.addf %21, %25 : vector<8x64xf32>
    %27 = vector.extract_strided_slice %7 {offsets = [3, 0], sizes = [8, 64], strides = [1, 1]} : vector<11x64xf32> to vector<8x64xf32>
    %c3 = arith.constant 3 : index
    %c0_11 = arith.constant 0 : index
    %28 = vector.load %arg4[%c3, %c0_11] : memref<4x64xf32, #tpu.memory_space<vmem>>, vector<1x64xf32>
    %29 = vector.broadcast %28 : vector<1x64xf32> to vector<8x64xf32>
    %30 = arith.mulf %27, %29 : vector<8x64xf32>
    %31 = arith.addf %26, %30 : vector<8x64xf32>
    %32 = vector.extract_strided_slice %5 {offsets = [5, 0], sizes = [3, 64], strides = [1, 1]} : vector<8x64xf32> to vector<3x64xf32>
    %c0_12 = arith.constant 0 : index
    %c0_13 = arith.constant 0 : index
    %33 = vector.load %arg7[%c0_12, %c0_13] : memref<3x64xf32, #tpu.memory_space<vmem>>, vector<3x64xf32>
    tpu.vector_store %arg7[%c0_12, %c0_13], %32 {strides = array<i32>} : memref<3x64xf32, #tpu.memory_space<vmem>>, vector<3x64xf32>,
    %34 = arith.negf %31 : vector<8x64xf32>
    %35 = math.exp %34 : vector<8x64xf32>
    %cst_14 = arith.constant 1.000000e+00 : f32
    %36 = vector.broadcast %cst_14 : f32 to vector<8x64xf32>
    %37 = arith.addf %36, %35 : vector<8x64xf32>
    %38 = arith.divf %36, %37 : vector<8x64xf32>
    %39 = arith.mulf %31, %38 : vector<8x64xf32>
    %40 = arith.truncf %39 : vector<8x64xf32> to vector<8x64xbf16>
    %c0_15 = arith.constant 0 : index
    %c0_16 = arith.constant 0 : index
    %c0_17 = arith.constant 0 : index
    %41 = vector.load %arg6[%c0_15, %c0_16, %c0_17] : memref<1x8x64xbf16, #tpu.memory_space<vmem>>, vector<1x8x64xbf16>
    %42 = vector.shape_cast %41 : vector<1x8x64xbf16> to vector<8x64xbf16>
    %43 = vector.shape_cast %40 : vector<8x64xbf16> to vector<1x8x64xbf16>
    tpu.vector_store %arg6[%c0_15, %c0_16, %c0_17], %43 {strides = array<i32>} : memref<1x8x64xbf16, #tpu.memory_space<vmem>>, vector<1x8x64xbf16>,
    return
  }
  func.func @transform_0(%arg0: i32, %arg1: i32, %arg2: i32) -> (i32, i32, i32) {
    %c0_i32 = arith.constant 0 : i32
    return %arg0, %arg2, %arg1 : i32, i32, i32
  }
  func.func @transform_1(%arg0: i32, %arg1: i32, %arg2: i32) -> (i32, i32) {
    %c0_i32 = arith.constant 0 : i32
    %c0_i32_0 = arith.constant 0 : i32
    return %c0_i32, %arg1 : i32, i32
  }
  func.func @transform_2(%arg0: i32, %arg1: i32, %arg2: i32) -> (i32, i32) {
    %c0_i32 = arith.constant 0 : i32
    %c0_i32_0 = arith.constant 0 : i32
    return %c0_i32, %arg1 : i32, i32
  }
  func.func @transform_3(%arg0: i32, %arg1: i32, %arg2: i32) -> (i32, i32, i32) {
    %c0_i32 = arith.constant 0 : i32
    return %arg0, %arg2, %arg1 : i32, i32, i32
  }
}

module attributes {stable_mosaic.version = 11 : i64} {
  func.func @_mm_kernel(%arg0: i32, %arg1: i32, %arg2: i32, %arg3: memref<16x64xbf16, #tpu.memory_space<vmem>>, %arg4: memref<64x32xbf16, #tpu.memory_space<vmem>>, %arg5: memref<1x32xf32, #tpu.memory_space<vmem>>, %arg6: memref<16x32xbf16, #tpu.memory_space<vmem>>, %arg7: memref<16x32xbf16, #tpu.memory_space<vmem>>) attributes {dimension_semantics = [#tpu.dimension_semantics<parallel>, #tpu.dimension_semantics<parallel>, #tpu.dimension_semantics<arbitrary>], iteration_bounds = array<i64: 1, 1, 1>, scalar_prefetch = 0 : i64, scratch_operands = 0 : i64, tpu.core_type = #tpu.core_type<tc>, window_params = [{transform_indices = @transform_0, window_bounds = array<i64: 16, 64>}, {transform_indices = @transform_1, window_bounds = array<i64: 64, 32>}, {transform_indices = @transform_2, window_bounds = array<i64: 1, 32>}, {transform_indices = @transform_3, window_bounds = array<i64: 16, 32>}, {transform_indices = @transform_4, window_bounds = array<i64: 16, 32>}]} {
    %c0 = arith.constant 0 : index
    %c0_0 = arith.constant 0 : index
    %0 = vector.load %arg3[%c0, %c0_0] : memref<16x64xbf16, #tpu.memory_space<vmem>>, vector<16x64xbf16>
    %c0_1 = arith.constant 0 : index
    %c0_2 = arith.constant 0 : index
    %1 = vector.load %arg4[%c0_1, %c0_2] : memref<64x32xbf16, #tpu.memory_space<vmem>>, vector<64x32xbf16>
    %cst = arith.constant dense<0.000000e+00> : vector<16x32xf32>
    %2 = tpu.matmul %0, %1, %cst {dimension_numbers = #tpu.dot_dimension_numbers<[1], [0], [0], [1], [0, 0, 1, 1], [], []>} : vector<16x64xbf16>, vector<64x32xbf16>, vector<16x32xf32> -> vector<16x32xf32>
    %c0_3 = arith.constant 0 : index
    %c0_4 = arith.constant 0 : index
    %3 = vector.load %arg5[%c0_3, %c0_4] : memref<1x32xf32, #tpu.memory_space<vmem>>, vector<1x32xf32>
    %4 = vector.broadcast %3 : vector<1x32xf32> to vector<16x32xf32>
    %5 = arith.addf %2, %4 : vector<16x32xf32>
    %c0_5 = arith.constant 0 : index
    %c0_6 = arith.constant 0 : index
    %6 = vector.load %arg6[%c0_5, %c0_6] : memref<16x32xbf16, #tpu.memory_space<vmem>>, vector<16x32xbf16>
    %7 = arith.extf %6 : vector<16x32xbf16> to vector<16x32xf32>
    %8 = arith.addf %5, %7 : vector<16x32xf32>
    %9 = arith.truncf %8 : vector<16x32xf32> to vector<16x32xbf16>
    %c0_7 = arith.constant 0 : index
    %c0_8 = arith.constant 0 : index
    %10 = vector.load %arg7[%c0_7, %c0_8] : memref<16x32xbf16, #tpu.memory_space<vmem>>, vector<16x32xbf16>
    tpu.vector_store %arg7[%c0_7, %c0_8], %9 {strides = array<i32>} : memref<16x32xbf16, #tpu.memory_space<vmem>>, vector<16x32xbf16>,
    return
  }
  func.func @transform_0(%arg0: i32, %arg1: i32, %arg2: i32) -> (i32, i32) {
    %c0_i32 = arith.constant 0 : i32
    return %arg0, %arg2 : i32, i32
  }
  func.func @transform_1(%arg0: i32, %arg1: i32, %arg2: i32) -> (i32, i32) {
    %c0_i32 = arith.constant 0 : i32
    return %arg2, %arg1 : i32, i32
  }
  func.func @transform_2(%arg0: i32, %arg1: i32, %arg2: i32) -> (i32, i32) {
    %c0_i32 = arith.constant 0 : i32
    %c0_i32_0 = arith.constant 0 : i32
    return %c0_i32, %arg1 : i32, i32
  }
  func.func @transform_3(%arg0: i32, %arg1: i32, %arg2: i32) -> (i32, i32) {
    %c0_i32 = arith.constant 0 : i32
    return %arg0, %arg1 : i32, i32
  }
  func.func @transform_4(%arg0: i32, %arg1: i32, %arg2: i32) -> (i32, i32) {
    %c0_i32 = arith.constant 0 : i32
    return %arg0, %arg1 : i32, i32
  }
}

module attributes {stable_mosaic.version = 11 : i64} {
  func.func @_mamba_scan_kernel(%arg0: i32, %arg1: i32, %arg2: i32, %arg3: memref<1x8x64xbf16, #tpu.memory_space<vmem>>, %arg4: memref<1x8x64xbf16, #tpu.memory_space<vmem>>, %arg5: memref<1x8x8xbf16, #tpu.memory_space<vmem>>, %arg6: memref<1x8x8xbf16, #tpu.memory_space<vmem>>, %arg7: memref<1x8x8xbf16, #tpu.memory_space<vmem>>, %arg8: memref<8x64xbf16, #tpu.memory_space<vmem>>, %arg9: memref<1x64xf32, #tpu.memory_space<vmem>>, %arg10: memref<8x64xf32, #tpu.memory_space<vmem>>, %arg11: memref<1x64xf32, #tpu.memory_space<vmem>>, %arg12: memref<1x8x64xbf16, #tpu.memory_space<vmem>>, %arg13: memref<8x64xf32, #tpu.memory_space<vmem>>, %arg14: memref<8x64xf32, #tpu.memory_space<vmem>>) attributes {dimension_semantics = [#tpu.dimension_semantics<parallel>, #tpu.dimension_semantics<parallel>, #tpu.dimension_semantics<arbitrary>], iteration_bounds = array<i64: 2, 1, 1>, scalar_prefetch = 0 : i64, scratch_operands = 2 : i64, tpu.core_type = #tpu.core_type<tc>, window_params = [{transform_indices = @transform_0, window_bounds = array<i64: 1, 8, 64>}, {transform_indices = @transform_1, window_bounds = array<i64: 1, 8, 64>}, {transform_indices = @transform_2, window_bounds = array<i64: 1, 8, 8>}, {transform_indices = @transform_3, window_bounds = array<i64: 1, 8, 8>}, {transform_indices = @transform_4, window_bounds = array<i64: 1, 8, 8>}, {transform_indices = @transform_5, window_bounds = array<i64: 8, 64>}, {transform_indices = @transform_6, window_bounds = array<i64: 1, 64>}, {transform_indices = @transform_7, window_bounds = array<i64: 8, 64>}, {transform_indices = @transform_8, window_bounds = array<i64: 1, 64>}, {transform_indices = @transform_9, window_bounds = array<i64: 1, 8, 64>}]} {
    %c0_i32 = arith.constant 0 : i32
    %0 = arith.cmpi eq, %arg2, %c0_i32 : i32
    %1 = arith.extui %0 : i1 to i32
    %c0_i32_0 = arith.constant 0 : i32
    %2 = arith.cmpi ne, %1, %c0_i32_0 : i32
    scf.if %2 {
      %cst_53 = arith.constant 0.000000e+00 : f32
      %189 = vector.broadcast %cst_53 : f32 to vector<8x64xf32>
      %c0_54 = arith.constant 0 : index
      %c0_55 = arith.constant 0 : index
      %190 = vector.load %arg13[%c0_54, %c0_55] : memref<8x64xf32, #tpu.memory_space<vmem>>, vector<8x64xf32>
      tpu.vector_store %arg13[%c0_54, %c0_55], %189 {strides = array<i32>} : memref<8x64xf32, #tpu.memory_space<vmem>>, vector<8x64xf32>,
    } else {
    }
    %c0 = arith.constant 0 : index
    %c0_1 = arith.constant 0 : index
    %c0_2 = arith.constant 0 : index
    %3 = vector.load %arg3[%c0, %c0_1, %c0_2] : memref<1x8x64xbf16, #tpu.memory_space<vmem>>, vector<1x8x64xbf16>
    %4 = vector.shape_cast %3 : vector<1x8x64xbf16> to vector<8x64xbf16>
    %5 = arith.extf %4 : vector<8x64xbf16> to vector<8x64xf32>
    %c0_3 = arith.constant 0 : index
    %c0_4 = arith.constant 0 : index
    %c0_5 = arith.constant 0 : index
    %6 = vector.load %arg5[%c0_3, %c0_4, %c0_5] : memref<1x8x8xbf16, #tpu.memory_space<vmem>>, vector<1x8x8xbf16>
    %7 = vector.shape_cast %6 : vector<1x8x8xbf16> to vector<8x8xbf16>
    %c0_6 = arith.constant 0 : index
    %c0_7 = arith.constant 0 : index
    %8 = vector.load %arg8[%c0_6, %c0_7] : memref<8x64xbf16, #tpu.memory_space<vmem>>, vector<8x64xbf16>
    %cst = arith.constant dense<0.000000e+00> : vector<8x64xf32>
    %9 = tpu.matmul %7, %8, %cst {dimension_numbers = #tpu.dot_dimension_numbers<[1], [0], [0], [1], [0, 0, 1, 1], [], []>} : vector<8x8xbf16>, vector<8x64xbf16>, vector<8x64xf32> -> vector<8x64xf32>
    %c0_8 = arith.constant 0 : index
    %c0_9 = arith.constant 0 : index
    %10 = vector.load %arg9[%c0_8, %c0_9] : memref<1x64xf32, #tpu.memory_space<vmem>>, vector<1x64xf32>
    %11 = vector.broadcast %10 : vector<1x64xf32> to vector<8x64xf32>
    %12 = arith.addf %9, %11 : vector<8x64xf32>
    %cst_10 = arith.constant 3.000000e+01 : f32
    %13 = vector.broadcast %cst_10 : f32 to vector<8x64xf32>
    %14 = arith.cmpf ogt, %12, %13 : vector<8x64xf32>
    %cst_11 = arith.constant 3.000000e+01 : f32
    %15 = vector.broadcast %cst_11 : f32 to vector<8x64xf32>
    %16 = arith.minimumf %12, %15 : vector<8x64xf32>
    %17 = math.exp %16 : vector<8x64xf32>
    %cst_12 = arith.constant 1.000000e+00 : f32
    %18 = vector.broadcast %cst_12 : f32 to vector<8x64xf32>
    %19 = arith.addf %18, %17 : vector<8x64xf32>
    %20 = math.log %19 : vector<8x64xf32>
    %21 = arith.select %14, %12, %20 : vector<8x64xi1>, vector<8x64xf32>
    %22 = arith.mulf %21, %5 : vector<8x64xf32>
    %c0_13 = arith.constant 0 : index
    %c0_14 = arith.constant 0 : index
    %23 = vector.load %arg10[%c0_13, %c0_14] : memref<8x64xf32, #tpu.memory_space<vmem>>, vector<8x64xf32>
    %c0_15 = arith.constant 0 : index
    %c0_16 = arith.constant 0 : index
    %c0_17 = arith.constant 0 : index
    %24 = vector.load %arg6[%c0_15, %c0_16, %c0_17] : memref<1x8x8xbf16, #tpu.memory_space<vmem>>, vector<1x8x8xbf16>
    %25 = vector.shape_cast %24 : vector<1x8x8xbf16> to vector<8x8xbf16>
    %26 = arith.extf %25 : vector<8x8xbf16> to vector<8x8xf32>
    %27 = tpu.transpose %26, [1, 0] : vector<8x8xf32> -> vector<8x8xf32>
    %c0_18 = arith.constant 0 : index
    %c0_19 = arith.constant 0 : index
    %c0_20 = arith.constant 0 : index
    %28 = vector.load %arg7[%c0_18, %c0_19, %c0_20] : memref<1x8x8xbf16, #tpu.memory_space<vmem>>, vector<1x8x8xbf16>
    %29 = vector.shape_cast %28 : vector<1x8x8xbf16> to vector<8x8xbf16>
    %30 = arith.extf %29 : vector<8x8xbf16> to vector<8x8xf32>
    %31 = tpu.transpose %30, [1, 0] : vector<8x8xf32> -> vector<8x8xf32>
    %c0_21 = arith.constant 0 : index
    %c0_22 = arith.constant 0 : index
    %32 = vector.load %arg13[%c0_21, %c0_22] : memref<8x64xf32, #tpu.memory_space<vmem>>, vector<8x64xf32>
    %33 = vector.extract_strided_slice %21 {offsets = [0, 0], sizes = [1, 64], strides = [1, 1]} : vector<8x64xf32> to vector<1x64xf32>
    %34 = vector.broadcast %33 : vector<1x64xf32> to vector<8x64xf32>
    %35 = arith.mulf %34, %23 : vector<8x64xf32>
    %36 = math.exp %35 : vector<8x64xf32>
    %37 = arith.mulf %36, %32 : vector<8x64xf32>
    %38 = vector.extract_strided_slice %27 {offsets = [0, 0], sizes = [8, 1], strides = [1, 1]} : vector<8x8xf32> to vector<8x1xf32>
    %39 = vector.extract_strided_slice %22 {offsets = [0, 0], sizes = [1, 64], strides = [1, 1]} : vector<8x64xf32> to vector<1x64xf32>
    %40 = vector.broadcast %38 : vector<8x1xf32> to vector<8x64xf32>
    %41 = vector.broadcast %39 : vector<1x64xf32> to vector<8x64xf32>
    %42 = arith.mulf %40, %41 : vector<8x64xf32>
    %43 = arith.addf %37, %42 : vector<8x64xf32>
    %44 = vector.extract_strided_slice %31 {offsets = [0, 0], sizes = [8, 1], strides = [1, 1]} : vector<8x8xf32> to vector<8x1xf32>
    %45 = vector.broadcast %44 : vector<8x1xf32> to vector<8x64xf32>
    %46 = arith.mulf %45, %43 : vector<8x64xf32>
    %cst_23 = arith.constant dense<0.000000e+00> : vector<64xf32>
    %47 = vector.multi_reduction <add>, %46, %cst_23 [0] : vector<8x64xf32> to vector<64xf32>
    %48 = vector.shape_cast %47 : vector<64xf32> to vector<1x64xf32>
    %c0_24 = arith.constant 0 : index
    %c0_25 = arith.constant 0 : index
    %49 = vector.load %arg14[%c0_24, %c0_25] : memref<8x64xf32, #tpu.memory_space<vmem>>, vector<1x64xf32>
    tpu.vector_store %arg14[%c0_24, %c0_25], %48 {strides = array<i32>} : memref<8x64xf32, #tpu.memory_space<vmem>>, vector<1x64xf32>,
    %50 = vector.extract_strided_slice %21 {offsets = [1, 0], sizes = [1, 64], strides = [1, 1]} : vector<8x64xf32> to vector<1x64xf32>
    %51 = vector.broadcast %50 : vector<1x64xf32> to vector<8x64xf32>
    %52 = arith.mulf %51, %23 : vector<8x64xf32>
    %53 = math.exp %52 : vector<8x64xf32>
    %54 = arith.mulf %53, %43 : vector<8x64xf32>
    %55 = vector.extract_strided_slice %27 {offsets = [0, 1], sizes = [8, 1], strides = [1, 1]} : vector<8x8xf32> to vector<8x1xf32>
    %56 = vector.extract_strided_slice %22 {offsets = [1, 0], sizes = [1, 64], strides = [1, 1]} : vector<8x64xf32> to vector<1x64xf32>
    %57 = vector.broadcast %55 : vector<8x1xf32> to vector<8x64xf32>
    %58 = vector.broadcast %56 : vector<1x64xf32> to vector<8x64xf32>
    %59 = arith.mulf %57, %58 : vector<8x64xf32>
    %60 = arith.addf %54, %59 : vector<8x64xf32>
    %61 = vector.extract_strided_slice %31 {offsets = [0, 1], sizes = [8, 1], strides = [1, 1]} : vector<8x8xf32> to vector<8x1xf32>
    %62 = vector.broadcast %61 : vector<8x1xf32> to vector<8x64xf32>
    %63 = arith.mulf %62, %60 : vector<8x64xf32>
    %cst_26 = arith.constant dense<0.000000e+00> : vector<64xf32>
    %64 = vector.multi_reduction <add>, %63, %cst_26 [0] : vector<8x64xf32> to vector<64xf32>
    %65 = vector.shape_cast %64 : vector<64xf32> to vector<1x64xf32>
    %c1 = arith.constant 1 : index
    %c0_27 = arith.constant 0 : index
    %66 = vector.load %arg14[%c1, %c0_27] : memref<8x64xf32, #tpu.memory_space<vmem>>, vector<1x64xf32>
    tpu.vector_store %arg14[%c1, %c0_27], %65 {strides = array<i32>} : memref<8x64xf32, #tpu.memory_space<vmem>>, vector<1x64xf32>,
    %67 = vector.extract_strided_slice %21 {offsets = [2, 0], sizes = [1, 64], strides = [1, 1]} : vector<8x64xf32> to vector<1x64xf32>
    %68 = vector.broadcast %67 : vector<1x64xf32> to vector<8x64xf32>
    %69 = arith.mulf %68, %23 : vector<8x64xf32>
    %70 = math.exp %69 : vector<8x64xf32>
    %71 = arith.mulf %70, %60 : vector<8x64xf32>
    %72 = vector.extract_strided_slice %27 {offsets = [0, 2], sizes = [8, 1], strides = [1, 1]} : vector<8x8xf32> to vector<8x1xf32>
    %73 = vector.extract_strided_slice %22 {offsets = [2, 0], sizes = [1, 64], strides = [1, 1]} : vector<8x64xf32> to vector<1x64xf32>
    %74 = vector.broadcast %72 : vector<8x1xf32> to vector<8x64xf32>
    %75 = vector.broadcast %73 : vector<1x64xf32> to vector<8x64xf32>
    %76 = arith.mulf %74, %75 : vector<8x64xf32>
    %77 = arith.addf %71, %76 : vector<8x64xf32>
    %78 = vector.extract_strided_slice %31 {offsets = [0, 2], sizes = [8, 1], strides = [1, 1]} : vector<8x8xf32> to vector<8x1xf32>
    %79 = vector.broadcast %78 : vector<8x1xf32> to vector<8x64xf32>
    %80 = arith.mulf %79, %77 : vector<8x64xf32>
    %cst_28 = arith.constant dense<0.000000e+00> : vector<64xf32>
    %81 = vector.multi_reduction <add>, %80, %cst_28 [0] : vector<8x64xf32> to vector<64xf32>
    %82 = vector.shape_cast %81 : vector<64xf32> to vector<1x64xf32>
    %c2 = arith.constant 2 : index
    %c0_29 = arith.constant 0 : index
    %83 = vector.load %arg14[%c2, %c0_29] : memref<8x64xf32, #tpu.memory_space<vmem>>, vector<1x64xf32>
    tpu.vector_store %arg14[%c2, %c0_29], %82 {strides = array<i32>} : memref<8x64xf32, #tpu.memory_space<vmem>>, vector<1x64xf32>,
    %84 = vector.extract_strided_slice %21 {offsets = [3, 0], sizes = [1, 64], strides = [1, 1]} : vector<8x64xf32> to vector<1x64xf32>
    %85 = vector.broadcast %84 : vector<1x64xf32> to vector<8x64xf32>
    %86 = arith.mulf %85, %23 : vector<8x64xf32>
    %87 = math.exp %86 : vector<8x64xf32>
    %88 = arith.mulf %87, %77 : vector<8x64xf32>
    %89 = vector.extract_strided_slice %27 {offsets = [0, 3], sizes = [8, 1], strides = [1, 1]} : vector<8x8xf32> to vector<8x1xf32>
    %90 = vector.extract_strided_slice %22 {offsets = [3, 0], sizes = [1, 64], strides = [1, 1]} : vector<8x64xf32> to vector<1x64xf32>
    %91 = vector.broadcast %89 : vector<8x1xf32> to vector<8x64xf32>
    %92 = vector.broadcast %90 : vector<1x64xf32> to vector<8x64xf32>
    %93 = arith.mulf %91, %92 : vector<8x64xf32>
    %94 = arith.addf %88, %93 : vector<8x64xf32>
    %95 = vector.extract_strided_slice %31 {offsets = [0, 3], sizes = [8, 1], strides = [1, 1]} : vector<8x8xf32> to vector<8x1xf32>
    %96 = vector.broadcast %95 : vector<8x1xf32> to vector<8x64xf32>
    %97 = arith.mulf %96, %94 : vector<8x64xf32>
    %cst_30 = arith.constant dense<0.000000e+00> : vector<64xf32>
    %98 = vector.multi_reduction <add>, %97, %cst_30 [0] : vector<8x64xf32> to vector<64xf32>
    %99 = vector.shape_cast %98 : vector<64xf32> to vector<1x64xf32>
    %c3 = arith.constant 3 : index
    %c0_31 = arith.constant 0 : index
    %100 = vector.load %arg14[%c3, %c0_31] : memref<8x64xf32, #tpu.memory_space<vmem>>, vector<1x64xf32>
    tpu.vector_store %arg14[%c3, %c0_31], %99 {strides = array<i32>} : memref<8x64xf32, #tpu.memory_space<vmem>>, vector<1x64xf32>,
    %101 = vector.extract_strided_slice %21 {offsets = [4, 0], sizes = [1, 64], strides = [1, 1]} : vector<8x64xf32> to vector<1x64xf32>
    %102 = vector.broadcast %101 : vector<1x64xf32> to vector<8x64xf32>
    %103 = arith.mulf %102, %23 : vector<8x64xf32>
    %104 = math.exp %103 : vector<8x64xf32>
    %105 = arith.mulf %104, %94 : vector<8x64xf32>
    %106 = vector.extract_strided_slice %27 {offsets = [0, 4], sizes = [8, 1], strides = [1, 1]} : vector<8x8xf32> to vector<8x1xf32>
    %107 = vector.extract_strided_slice %22 {offsets = [4, 0], sizes = [1, 64], strides = [1, 1]} : vector<8x64xf32> to vector<1x64xf32>
    %108 = vector.broadcast %106 : vector<8x1xf32> to vector<8x64xf32>
    %109 = vector.broadcast %107 : vector<1x64xf32> to vector<8x64xf32>
    %110 = arith.mulf %108, %109 : vector<8x64xf32>
    %111 = arith.addf %105, %110 : vector<8x64xf32>
    %112 = vector.extract_strided_slice %31 {offsets = [0, 4], sizes = [8, 1], strides = [1, 1]} : vector<8x8xf32> to vector<8x1xf32>
    %113 = vector.broadcast %112 : vector<8x1xf32> to vector<8x64xf32>
    %114 = arith.mulf %113, %111 : vector<8x64xf32>
    %cst_32 = arith.constant dense<0.000000e+00> : vector<64xf32>
    %115 = vector.multi_reduction <add>, %114, %cst_32 [0] : vector<8x64xf32> to vector<64xf32>
    %116 = vector.shape_cast %115 : vector<64xf32> to vector<1x64xf32>
    %c4 = arith.constant 4 : index
    %c0_33 = arith.constant 0 : index
    %117 = vector.load %arg14[%c4, %c0_33] : memref<8x64xf32, #tpu.memory_space<vmem>>, vector<1x64xf32>
    tpu.vector_store %arg14[%c4, %c0_33], %116 {strides = array<i32>} : memref<8x64xf32, #tpu.memory_space<vmem>>, vector<1x64xf32>,
    %118 = vector.extract_strided_slice %21 {offsets = [5, 0], sizes = [1, 64], strides = [1, 1]} : vector<8x64xf32> to vector<1x64xf32>
    %119 = vector.broadcast %118 : vector<1x64xf32> to vector<8x64xf32>
    %120 = arith.mulf %119, %23 : vector<8x64xf32>
    %121 = math.exp %120 : vector<8x64xf32>
    %122 = arith.mulf %121, %111 : vector<8x64xf32>
    %123 = vector.extract_strided_slice %27 {offsets = [0, 5], sizes = [8, 1], strides = [1, 1]} : vector<8x8xf32> to vector<8x1xf32>
    %124 = vector.extract_strided_slice %22 {offsets = [5, 0], sizes = [1, 64], strides = [1, 1]} : vector<8x64xf32> to vector<1x64xf32>
    %125 = vector.broadcast %123 : vector<8x1xf32> to vector<8x64xf32>
    %126 = vector.broadcast %124 : vector<1x64xf32> to vector<8x64xf32>
    %127 = arith.mulf %125, %126 : vector<8x64xf32>
    %128 = arith.addf %122, %127 : vector<8x64xf32>
    %129 = vector.extract_strided_slice %31 {offsets = [0, 5], sizes = [8, 1], strides = [1, 1]} : vector<8x8xf32> to vector<8x1xf32>
    %130 = vector.broadcast %129 : vector<8x1xf32> to vector<8x64xf32>
    %131 = arith.mulf %130, %128 : vector<8x64xf32>
    %cst_34 = arith.constant dense<0.000000e+00> : vector<64xf32>
    %132 = vector.multi_reduction <add>, %131, %cst_34 [0] : vector<8x64xf32> to vector<64xf32>
    %133 = vector.shape_cast %132 : vector<64xf32> to vector<1x64xf32>
    %c5 = arith.constant 5 : index
    %c0_35 = arith.constant 0 : index
    %134 = vector.load %arg14[%c5, %c0_35] : memref<8x64xf32, #tpu.memory_space<vmem>>, vector<1x64xf32>
    tpu.vector_store %arg14[%c5, %c0_35], %133 {strides = array<i32>} : memref<8x64xf32, #tpu.memory_space<vmem>>, vector<1x64xf32>,
    %135 = vector.extract_strided_slice %21 {offsets = [6, 0], sizes = [1, 64], strides = [1, 1]} : vector<8x64xf32> to vector<1x64xf32>
    %136 = vector.broadcast %135 : vector<1x64xf32> to vector<8x64xf32>
    %137 = arith.mulf %136, %23 : vector<8x64xf32>
    %138 = math.exp %137 : vector<8x64xf32>
    %139 = arith.mulf %138, %128 : vector<8x64xf32>
    %140 = vector.extract_strided_slice %27 {offsets = [0, 6], sizes = [8, 1], strides = [1, 1]} : vector<8x8xf32> to vector<8x1xf32>
    %141 = vector.extract_strided_slice %22 {offsets = [6, 0], sizes = [1, 64], strides = [1, 1]} : vector<8x64xf32> to vector<1x64xf32>
    %142 = vector.broadcast %140 : vector<8x1xf32> to vector<8x64xf32>
    %143 = vector.broadcast %141 : vector<1x64xf32> to vector<8x64xf32>
    %144 = arith.mulf %142, %143 : vector<8x64xf32>
    %145 = arith.addf %139, %144 : vector<8x64xf32>
    %146 = vector.extract_strided_slice %31 {offsets = [0, 6], sizes = [8, 1], strides = [1, 1]} : vector<8x8xf32> to vector<8x1xf32>
    %147 = vector.broadcast %146 : vector<8x1xf32> to vector<8x64xf32>
    %148 = arith.mulf %147, %145 : vector<8x64xf32>
    %cst_36 = arith.constant dense<0.000000e+00> : vector<64xf32>
    %149 = vector.multi_reduction <add>, %148, %cst_36 [0] : vector<8x64xf32> to vector<64xf32>
    %150 = vector.shape_cast %149 : vector<64xf32> to vector<1x64xf32>
    %c6 = arith.constant 6 : index
    %c0_37 = arith.constant 0 : index
    %151 = vector.load %arg14[%c6, %c0_37] : memref<8x64xf32, #tpu.memory_space<vmem>>, vector<1x64xf32>
    tpu.vector_store %arg14[%c6, %c0_37], %150 {strides = array<i32>} : memref<8x64xf32, #tpu.memory_space<vmem>>, vector<1x64xf32>,
    %152 = vector.extract_strided_slice %21 {offsets = [7, 0], sizes = [1, 64], strides = [1, 1]} : vector<8x64xf32> to vector<1x64xf32>
    %153 = vector.broadcast %152 : vector<1x64xf32> to vector<8x64xf32>
    %154 = arith.mulf %153, %23 : vector<8x64xf32>
    %155 = math.exp %154 : vector<8x64xf32>
    %156 = arith.mulf %155, %145 : vector<8x64xf32>
    %157 = vector.extract_strided_slice %27 {offsets = [0, 7], sizes = [8, 1], strides = [1, 1]} : vector<8x8xf32> to vector<8x1xf32>
    %158 = vector.extract_strided_slice %22 {offsets = [7, 0], sizes = [1, 64], strides = [1, 1]} : vector<8x64xf32> to vector<1x64xf32>
    %159 = vector.broadcast %157 : vector<8x1xf32> to vector<8x64xf32>
    %160 = vector.broadcast %158 : vector<1x64xf32> to vector<8x64xf32>
    %161 = arith.mulf %159, %160 : vector<8x64xf32>
    %162 = arith.addf %156, %161 : vector<8x64xf32>
    %163 = vector.extract_strided_slice %31 {offsets = [0, 7], sizes = [8, 1], strides = [1, 1]} : vector<8x8xf32> to vector<8x1xf32>
    %164 = vector.broadcast %163 : vector<8x1xf32> to vector<8x64xf32>
    %165 = arith.mulf %164, %162 : vector<8x64xf32>
    %cst_38 = arith.constant dense<0.000000e+00> : vector<64xf32>
    %166 = vector.multi_reduction <add>, %165, %cst_38 [0] : vector<8x64xf32> to vector<64xf32>
    %167 = vector.shape_cast %166 : vector<64xf32> to vector<1x64xf32>
    %c7 = arith.constant 7 : index
    %c0_39 = arith.constant 0 : index
    %168 = vector.load %arg14[%c7, %c0_39] : memref<8x64xf32, #tpu.memory_space<vmem>>, vector<1x64xf32>
    tpu.vector_store %arg14[%c7, %c0_39], %167 {strides = array<i32>} : memref<8x64xf32, #tpu.memory_space<vmem>>, vector<1x64xf32>,
    %c0_40 = arith.constant 0 : index
    %c0_41 = arith.constant 0 : index
    %169 = vector.load %arg13[%c0_40, %c0_41] : memref<8x64xf32, #tpu.memory_space<vmem>>, vector<8x64xf32>
    tpu.vector_store %arg13[%c0_40, %c0_41], %162 {strides = array<i32>} : memref<8x64xf32, #tpu.memory_space<vmem>>, vector<8x64xf32>,
    %c0_42 = arith.constant 0 : index
    %c0_43 = arith.constant 0 : index
    %c0_44 = arith.constant 0 : index
    %170 = vector.load %arg4[%c0_42, %c0_43, %c0_44] : memref<1x8x64xbf16, #tpu.memory_space<vmem>>, vector<1x8x64xbf16>
    %171 = vector.shape_cast %170 : vector<1x8x64xbf16> to vector<8x64xbf16>
    %172 = arith.extf %171 : vector<8x64xbf16> to vector<8x64xf32>
    %c0_45 = arith.constant 0 : index
    %c0_46 = arith.constant 0 : index
    %173 = vector.load %arg14[%c0_45, %c0_46] : memref<8x64xf32, #tpu.memory_space<vmem>>, vector<8x64xf32>
    %c0_47 = arith.constant 0 : index
    %c0_48 = arith.constant 0 : index
    %174 = vector.load %arg11[%c0_47, %c0_48] : memref<1x64xf32, #tpu.memory_space<vmem>>, vector<1x64xf32>
    %175 = vector.broadcast %174 : vector<1x64xf32> to vector<8x64xf32>
    %176 = arith.mulf %175, %5 : vector<8x64xf32>
    %177 = arith.addf %173, %176 : vector<8x64xf32>
    %178 = arith.negf %172 : vector<8x64xf32>
    %179 = math.exp %178 : vector<8x64xf32>
    %cst_49 = arith.constant 1.000000e+00 : f32
    %180 = vector.broadcast %cst_49 : f32 to vector<8x64xf32>
    %181 = arith.addf %180, %179 : vector<8x64xf32>
    %182 = arith.divf %180, %181 : vector<8x64xf32>
    %183 = arith.mulf %172, %182 : vector<8x64xf32>
    %184 = arith.mulf %177, %183 : vector<8x64xf32>
    %185 = arith.truncf %184 : vector<8x64xf32> to vector<8x64xbf16>
    %c0_50 = arith.constant 0 : index
    %c0_51 = arith.constant 0 : index
    %c0_52 = arith.constant 0 : index
    %186 = vector.load %arg12[%c0_50, %c0_51, %c0_52] : memref<1x8x64xbf16, #tpu.memory_space<vmem>>, vector<1x8x64xbf16>
    %187 = vector.shape_cast %186 : vector<1x8x64xbf16> to vector<8x64xbf16>
    %188 = vector.shape_cast %185 : vector<8x64xbf16> to vector<1x8x64xbf16>
    tpu.vector_store %arg12[%c0_50, %c0_51, %c0_52], %188 {strides = array<i32>} : memref<1x8x64xbf16, #tpu.memory_space<vmem>>, vector<1x8x64xbf16>,
    return
  }
  func.func @transform_0(%arg0: i32, %arg1: i32, %arg2: i32) -> (i32, i32, i32) {
    %c0_i32 = arith.constant 0 : i32
    return %arg0, %arg2, %arg1 : i32, i32, i32
  }
  func.func @transform_1(%arg0: i32, %arg1: i32, %arg2: i32) -> (i32, i32, i32) {
    %c0_i32 = arith.constant 0 : i32
    return %arg0, %arg2, %arg1 : i32, i32, i32
  }
  func.func @transform_2(%arg0: i32, %arg1: i32, %arg2: i32) -> (i32, i32, i32) {
    %c0_i32 = arith.constant 0 : i32
    %c0_i32_0 = arith.constant 0 : i32
    return %arg0, %arg2, %c0_i32 : i32, i32, i32
  }
  func.func @transform_3(%arg0: i32, %arg1: i32, %arg2: i32) -> (i32, i32, i32) {
    %c0_i32 = arith.constant 0 : i32
    %c0_i32_0 = arith.constant 0 : i32
    return %arg0, %arg2, %c0_i32 : i32, i32, i32
  }
  func.func @transform_4(%arg0: i32, %arg1: i32, %arg2: i32) -> (i32, i32, i32) {
    %c0_i32 = arith.constant 0 : i32
    %c0_i32_0 = arith.constant 0 : i32
    return %arg0, %arg2, %c0_i32 : i32, i32, i32
  }
  func.func @transform_5(%arg0: i32, %arg1: i32, %arg2: i32) -> (i32, i32) {
    %c0_i32 = arith.constant 0 : i32
    %c0_i32_0 = arith.constant 0 : i32
    return %c0_i32, %arg1 : i32, i32
  }
  func.func @transform_6(%arg0: i32, %arg1: i32, %arg2: i32) -> (i32, i32) {
    %c0_i32 = arith.constant 0 : i32
    %c0_i32_0 = arith.constant 0 : i32
    return %c0_i32, %arg1 : i32, i32
  }
  func.func @transform_7(%arg0: i32, %arg1: i32, %arg2: i32) -> (i32, i32) {
    %c0_i32 = arith.constant 0 : i32
    %c0_i32_0 = arith.constant 0 : i32
    return %c0_i32, %arg1 : i32, i32
  }
  func.func @transform_8(%arg0: i32, %arg1: i32, %arg2: i32) -> (i32, i32) {
    %c0_i32 = arith.constant 0 : i32
    %c0_i32_0 = arith.constant 0 : i32
    return %c0_i32, %arg1 : i32, i32
  }
  func.func @transform_9(%arg0: i32, %arg1: i32, %arg2: i32) -> (i32, i32, i32) {
    %c0_i32 = arith.constant 0 : i32
    return %arg0, %arg2, %arg1 : i32, i32, i32
  }
}

module attributes {stable_mosaic.version = 11 : i64} {
  func.func @_ffn_kernel(%arg0: i32, %arg1: i32, %arg2: memref<16x32xbf16, #tpu.memory_space<vmem>>, %arg3: memref<1x32xf32, #tpu.memory_space<vmem>>, %arg4: memref<1x32xf32, #tpu.memory_space<vmem>>, %arg5: memref<32x64xbf16, #tpu.memory_space<vmem>>, %arg6: memref<1x64xf32, #tpu.memory_space<vmem>>, %arg7: memref<64x32xbf16, #tpu.memory_space<vmem>>, %arg8: memref<1x32xf32, #tpu.memory_space<vmem>>, %arg9: memref<16x32xbf16, #tpu.memory_space<vmem>>, %arg10: memref<16x32xbf16, #tpu.memory_space<vmem>>, %arg11: memref<16x32xf32, #tpu.memory_space<vmem>>) attributes {dimension_semantics = [#tpu.dimension_semantics<parallel>, #tpu.dimension_semantics<arbitrary>], iteration_bounds = array<i64: 1, 1>, scalar_prefetch = 0 : i64, scratch_operands = 2 : i64, tpu.core_type = #tpu.core_type<tc>, window_params = [{transform_indices = @transform_0, window_bounds = array<i64: 16, 32>}, {pipeline_mode = #tpu.pipeline_mode<synchronous>, transform_indices = @transform_1, window_bounds = array<i64: 1, 32>}, {pipeline_mode = #tpu.pipeline_mode<synchronous>, transform_indices = @transform_2, window_bounds = array<i64: 1, 32>}, {transform_indices = @transform_3, window_bounds = array<i64: 32, 64>}, {transform_indices = @transform_4, window_bounds = array<i64: 1, 64>}, {transform_indices = @transform_5, window_bounds = array<i64: 64, 32>}, {pipeline_mode = #tpu.pipeline_mode<synchronous>, transform_indices = @transform_6, window_bounds = array<i64: 1, 32>}, {transform_indices = @transform_7, window_bounds = array<i64: 16, 32>}]} {
    %c0_i32 = arith.constant 0 : i32
    %0 = arith.cmpi eq, %arg1, %c0_i32 : i32
    %1 = arith.extui %0 : i1 to i32
    %c0_i32_0 = arith.constant 0 : i32
    %2 = arith.cmpi ne, %1, %c0_i32_0 : i32
    scf.if %2 {
      %c0_16 = arith.constant 0 : index
      %c0_17 = arith.constant 0 : index
      %24 = vector.load %arg2[%c0_16, %c0_17] : memref<16x32xbf16, #tpu.memory_space<vmem>>, vector<16x32xbf16>
      %25 = arith.extf %24 : vector<16x32xbf16> to vector<16x32xf32>
      %cst_18 = arith.constant dense<0.000000e+00> : vector<16xf32>
      %26 = vector.multi_reduction <add>, %25, %cst_18 [1] : vector<16x32xf32> to vector<16xf32>
      %27 = vector.shape_cast %26 : vector<16xf32> to vector<16x1xf32>
      %cst_19 = arith.constant 3.200000e+01 : f32
      %28 = vector.broadcast %cst_19 : f32 to vector<16x1xf32>
      %29 = arith.divf %27, %28 : vector<16x1xf32>
      %30 = vector.broadcast %29 : vector<16x1xf32> to vector<16x32xf32>
      %31 = arith.subf %25, %30 : vector<16x32xf32>
      %32 = arith.mulf %31, %31 : vector<16x32xf32>
      %cst_20 = arith.constant dense<0.000000e+00> : vector<16xf32>
      %33 = vector.multi_reduction <add>, %32, %cst_20 [1] : vector<16x32xf32> to vector<16xf32>
      %34 = vector.shape_cast %33 : vector<16xf32> to vector<16x1xf32>
      %cst_21 = arith.constant 3.200000e+01 : f32
      %35 = vector.broadcast %cst_21 : f32 to vector<16x1xf32>
      %36 = arith.divf %34, %35 : vector<16x1xf32>
      %37 = vector.broadcast %29 : vector<16x1xf32> to vector<16x32xf32>
      %38 = arith.subf %25, %37 : vector<16x32xf32>
      %cst_22 = arith.constant 9.99999996E-13 : f32
      %39 = vector.broadcast %cst_22 : f32 to vector<16x1xf32>
      %40 = arith.addf %36, %39 : vector<16x1xf32>
      %41 = math.rsqrt %40 : vector<16x1xf32>
      %42 = vector.broadcast %41 : vector<16x1xf32> to vector<16x32xf32>
      %43 = arith.mulf %38, %42 : vector<16x32xf32>
      %c0_23 = arith.constant 0 : index
      %c0_24 = arith.constant 0 : index
      %44 = vector.load %arg3[%c0_23, %c0_24] : memref<1x32xf32, #tpu.memory_space<vmem>>, vector<1x32xf32>
      %45 = vector.broadcast %44 : vector<1x32xf32> to vector<16x32xf32>
      %46 = arith.mulf %43, %45 : vector<16x32xf32>
      %c0_25 = arith.constant 0 : index
      %c0_26 = arith.constant 0 : index
      %47 = vector.load %arg4[%c0_25, %c0_26] : memref<1x32xf32, #tpu.memory_space<vmem>>, vector<1x32xf32>
      %48 = vector.broadcast %47 : vector<1x32xf32> to vector<16x32xf32>
      %49 = arith.addf %46, %48 : vector<16x32xf32>
      %50 = arith.truncf %49 : vector<16x32xf32> to vector<16x32xbf16>
      %c0_27 = arith.constant 0 : index
      %c0_28 = arith.constant 0 : index
      %51 = vector.load %arg10[%c0_27, %c0_28] : memref<16x32xbf16, #tpu.memory_space<vmem>>, vector<16x32xbf16>
      tpu.vector_store %arg10[%c0_27, %c0_28], %50 {strides = array<i32>} : memref<16x32xbf16, #tpu.memory_space<vmem>>, vector<16x32xbf16>,
      %cst_29 = arith.constant 0.000000e+00 : f32
      %52 = vector.broadcast %cst_29 : f32 to vector<16x32xf32>
      %c0_30 = arith.constant 0 : index
      %c0_31 = arith.constant 0 : index
      %53 = vector.load %arg11[%c0_30, %c0_31] : memref<16x32xf32, #tpu.memory_space<vmem>>, vector<16x32xf32>
      tpu.vector_store %arg11[%c0_30, %c0_31], %52 {strides = array<i32>} : memref<16x32xf32, #tpu.memory_space<vmem>>, vector<16x32xf32>,
    } else {
    }
    %c0 = arith.constant 0 : index
    %c0_1 = arith.constant 0 : index
    %3 = vector.load %arg10[%c0, %c0_1] : memref<16x32xbf16, #tpu.memory_space<vmem>>, vector<16x32xbf16>
    %c0_2 = arith.constant 0 : index
    %c0_3 = arith.constant 0 : index
    %4 = vector.load %arg5[%c0_2, %c0_3] : memref<32x64xbf16, #tpu.memory_space<vmem>>, vector<32x64xbf16>
    %cst = arith.constant dense<0.000000e+00> : vector<16x64xf32>
    %5 = tpu.matmul %3, %4, %cst {dimension_numbers = #tpu.dot_dimension_numbers<[1], [0], [0], [1], [0, 0, 1, 1], [], []>} : vector<16x32xbf16>, vector<32x64xbf16>, vector<16x64xf32> -> vector<16x64xf32>
    %c0_4 = arith.constant 0 : index
    %c0_5 = arith.constant 0 : index
    %6 = vector.load %arg6[%c0_4, %c0_5] : memref<1x64xf32, #tpu.memory_space<vmem>>, vector<1x64xf32>
    %7 = vector.broadcast %6 : vector<1x64xf32> to vector<16x64xf32>
    %8 = arith.addf %5, %7 : vector<16x64xf32>
    %9 = arith.negf %8 : vector<16x64xf32>
    %10 = math.exp %9 : vector<16x64xf32>
    %cst_6 = arith.constant 1.000000e+00 : f32
    %11 = vector.broadcast %cst_6 : f32 to vector<16x64xf32>
    %12 = arith.addf %11, %10 : vector<16x64xf32>
    %13 = arith.divf %11, %12 : vector<16x64xf32>
    %14 = arith.mulf %8, %13 : vector<16x64xf32>
    %c0_7 = arith.constant 0 : index
    %c0_8 = arith.constant 0 : index
    %15 = vector.load %arg11[%c0_7, %c0_8] : memref<16x32xf32, #tpu.memory_space<vmem>>, vector<16x32xf32>
    %16 = arith.truncf %14 : vector<16x64xf32> to vector<16x64xbf16>
    %c0_9 = arith.constant 0 : index
    %c0_10 = arith.constant 0 : index
    %17 = vector.load %arg7[%c0_9, %c0_10] : memref<64x32xbf16, #tpu.memory_space<vmem>>, vector<64x32xbf16>
    %cst_11 = arith.constant dense<0.000000e+00> : vector<16x32xf32>
    %18 = tpu.matmul %16, %17, %cst_11 {dimension_numbers = #tpu.dot_dimension_numbers<[1], [0], [0], [1], [0, 0, 1, 1], [], []>} : vector<16x64xbf16>, vector<64x32xbf16>, vector<16x32xf32> -> vector<16x32xf32>
    %19 = arith.addf %15, %18 : vector<16x32xf32>
    %c0_12 = arith.constant 0 : index
    %c0_13 = arith.constant 0 : index
    %20 = vector.load %arg11[%c0_12, %c0_13] : memref<16x32xf32, #tpu.memory_space<vmem>>, vector<16x32xf32>
    tpu.vector_store %arg11[%c0_12, %c0_13], %19 {strides = array<i32>} : memref<16x32xf32, #tpu.memory_space<vmem>>, vector<16x32xf32>,
    %c0_i32_14 = arith.constant 0 : i32
    %21 = arith.cmpi eq, %arg1, %c0_i32_14 : i32
    %22 = arith.extui %21 : i1 to i32
    %c0_i32_15 = arith.constant 0 : i32
    %23 = arith.cmpi ne, %22, %c0_i32_15 : i32
    scf.if %23 {
      %c0_16 = arith.constant 0 : index
      %c0_17 = arith.constant 0 : index
      %24 = vector.load %arg11[%c0_16, %c0_17] : memref<16x32xf32, #tpu.memory_space<vmem>>, vector<16x32xf32>
      %c0_18 = arith.constant 0 : index
      %c0_19 = arith.constant 0 : index
      %25 = vector.load %arg8[%c0_18, %c0_19] : memref<1x32xf32, #tpu.memory_space<vmem>>, vector<1x32xf32>
      %26 = vector.broadcast %25 : vector<1x32xf32> to vector<16x32xf32>
      %27 = arith.addf %24, %26 : vector<16x32xf32>
      %c0_20 = arith.constant 0 : index
      %c0_21 = arith.constant 0 : index
      %28 = vector.load %arg2[%c0_20, %c0_21] : memref<16x32xbf16, #tpu.memory_space<vmem>>, vector<16x32xbf16>
      %29 = arith.extf %28 : vector<16x32xbf16> to vector<16x32xf32>
      %30 = arith.addf %27, %29 : vector<16x32xf32>
      %31 = arith.truncf %30 : vector<16x32xf32> to vector<16x32xbf16>
      %c0_22 = arith.constant 0 : index
      %c0_23 = arith.constant 0 : index
      %32 = vector.load %arg9[%c0_22, %c0_23] : memref<16x32xbf16, #tpu.memory_space<vmem>>, vector<16x32xbf16>
      tpu.vector_store %arg9[%c0_22, %c0_23], %31 {strides = array<i32>} : memref<16x32xbf16, #tpu.memory_space<vmem>>, vector<16x32xbf16>,
    } else {
    }
    return
  }
  func.func @transform_0(%arg0: i32, %arg1: i32) -> (i32, i32) {
    %c0_i32 = arith.constant 0 : i32
    %c0_i32_0 = arith.constant 0 : i32
    return %arg0, %c0_i32 : i32, i32
  }
  func.func @transform_1(%arg0: i32, %arg1: i32) -> (i32, i32) {
    %c0_i32 = arith.constant 0 : i32
    %c0_i32_0 = arith.constant 0 : i32
    %c0_i32_1 = arith.constant 0 : i32
    return %c0_i32, %c0_i32_0 : i32, i32
  }
  func.func @transform_2(%arg0: i32, %arg1: i32) -> (i32, i32) {
    %c0_i32 = arith.constant 0 : i32
    %c0_i32_0 = arith.constant 0 : i32
    %c0_i32_1 = arith.constant 0 : i32
    return %c0_i32, %c0_i32_0 : i32, i32
  }
  func.func @transform_3(%arg0: i32, %arg1: i32) -> (i32, i32) {
    %c0_i32 = arith.constant 0 : i32
    %c0_i32_0 = arith.constant 0 : i32
    return %c0_i32, %arg1 : i32, i32
  }
  func.func @transform_4(%arg0: i32, %arg1: i32) -> (i32, i32) {
    %c0_i32 = arith.constant 0 : i32
    %c0_i32_0 = arith.constant 0 : i32
    return %c0_i32, %arg1 : i32, i32
  }
  func.func @transform_5(%arg0: i32, %arg1: i32) -> (i32, i32) {
    %c0_i32 = arith.constant 0 : i32
    %c0_i32_0 = arith.constant 0 : i32
    return %arg1, %c0_i32 : i32, i32
  }
  func.func @transform_6(%arg0: i32, %arg1: i32) -> (i32, i32) {
    %c0_i32 = arith.constant 0 : i32
    %c0_i32_0 = arith.constant 0 : i32
    %c0_i32_1 = arith.constant 0 : i32
    return %c0_i32, %c0_i32_0 : i32, i32
  }
  func.func @transform_7(%arg0: i32, %arg1: i32) -> (i32, i32) {
    %c0_i32 = arith.constant 0 : i32
    %c0_i32_0 = arith.constant 0 : i32
    return %arg0, %c0_i32 : i32, i32
  }
}

module attributes {stable_mosaic.version = 11 : i64} {
  func.func @_layernorm_kernel(%arg0: i32, %arg1: memref<16x32xbf16, #tpu.memory_space<vmem>>, %arg2: memref<1x32xf32, #tpu.memory_space<vmem>>, %arg3: memref<1x32xf32, #tpu.memory_space<vmem>>, %arg4: memref<16x32xf32, #tpu.memory_space<vmem>>) attributes {dimension_semantics = [#tpu.dimension_semantics<parallel>], iteration_bounds = array<i64: 1>, scalar_prefetch = 0 : i64, scratch_operands = 0 : i64, tpu.core_type = #tpu.core_type<tc>, window_params = [{transform_indices = @transform_0, window_bounds = array<i64: 16, 32>}, {pipeline_mode = #tpu.pipeline_mode<synchronous>, transform_indices = @transform_1, window_bounds = array<i64: 1, 32>}, {pipeline_mode = #tpu.pipeline_mode<synchronous>, transform_indices = @transform_2, window_bounds = array<i64: 1, 32>}, {transform_indices = @transform_3, window_bounds = array<i64: 16, 32>}]} {
    %c0 = arith.constant 0 : index
    %c0_0 = arith.constant 0 : index
    %0 = vector.load %arg1[%c0, %c0_0] : memref<16x32xbf16, #tpu.memory_space<vmem>>, vector<16x32xbf16>
    %1 = arith.extf %0 : vector<16x32xbf16> to vector<16x32xf32>
    %cst = arith.constant dense<0.000000e+00> : vector<16xf32>
    %2 = vector.multi_reduction <add>, %1, %cst [1] : vector<16x32xf32> to vector<16xf32>
    %3 = vector.shape_cast %2 : vector<16xf32> to vector<16x1xf32>
    %cst_1 = arith.constant 3.200000e+01 : f32
    %4 = vector.broadcast %cst_1 : f32 to vector<16x1xf32>
    %5 = arith.divf %3, %4 : vector<16x1xf32>
    %6 = vector.broadcast %5 : vector<16x1xf32> to vector<16x32xf32>
    %7 = arith.subf %1, %6 : vector<16x32xf32>
    %8 = arith.mulf %7, %7 : vector<16x32xf32>
    %cst_2 = arith.constant dense<0.000000e+00> : vector<16xf32>
    %9 = vector.multi_reduction <add>, %8, %cst_2 [1] : vector<16x32xf32> to vector<16xf32>
    %10 = vector.shape_cast %9 : vector<16xf32> to vector<16x1xf32>
    %cst_3 = arith.constant 3.200000e+01 : f32
    %11 = vector.broadcast %cst_3 : f32 to vector<16x1xf32>
    %12 = arith.divf %10, %11 : vector<16x1xf32>
    %13 = vector.broadcast %5 : vector<16x1xf32> to vector<16x32xf32>
    %14 = arith.subf %1, %13 : vector<16x32xf32>
    %cst_4 = arith.constant 9.99999996E-13 : f32
    %15 = vector.broadcast %cst_4 : f32 to vector<16x1xf32>
    %16 = arith.addf %12, %15 : vector<16x1xf32>
    %17 = math.rsqrt %16 : vector<16x1xf32>
    %18 = vector.broadcast %17 : vector<16x1xf32> to vector<16x32xf32>
    %19 = arith.mulf %14, %18 : vector<16x32xf32>
    %c0_5 = arith.constant 0 : index
    %c0_6 = arith.constant 0 : index
    %20 = vector.load %arg2[%c0_5, %c0_6] : memref<1x32xf32, #tpu.memory_space<vmem>>, vector<1x32xf32>
    %21 = vector.broadcast %20 : vector<1x32xf32> to vector<16x32xf32>
    %22 = arith.mulf %19, %21 : vector<16x32xf32>
    %c0_7 = arith.constant 0 : index
    %c0_8 = arith.constant 0 : index
    %23 = vector.load %arg3[%c0_7, %c0_8] : memref<1x32xf32, #tpu.memory_space<vmem>>, vector<1x32xf32>
    %24 = vector.broadcast %23 : vector<1x32xf32> to vector<16x32xf32>
    %25 = arith.addf %22, %24 : vector<16x32xf32>
    %c0_9 = arith.constant 0 : index
    %c0_10 = arith.constant 0 : index
    %26 = vector.load %arg4[%c0_9, %c0_10] : memref<16x32xf32, #tpu.memory_space<vmem>>, vector<16x32xf32>
    tpu.vector_store %arg4[%c0_9, %c0_10], %25 {strides = array<i32>} : memref<16x32xf32, #tpu.memory_space<vmem>>, vector<16x32xf32>,
    return
  }
  func.func @transform_0(%arg0: i32) -> (i32, i32) {
    %c0_i32 = arith.constant 0 : i32
    %c0_i32_0 = arith.constant 0 : i32
    return %arg0, %c0_i32 : i32, i32
  }
  func.func @transform_1(%arg0: i32) -> (i32, i32) {
    %c0_i32 = arith.constant 0 : i32
    %c0_i32_0 = arith.constant 0 : i32
    %c0_i32_1 = arith.constant 0 : i32
    return %c0_i32, %c0_i32_0 : i32, i32
  }
  func.func @transform_2(%arg0: i32) -> (i32, i32) {
    %c0_i32 = arith.constant 0 : i32
    %c0_i32_0 = arith.constant 0 : i32
    %c0_i32_1 = arith.constant 0 : i32
    return %c0_i32, %c0_i32_0 : i32, i32
  }
  func.func @transform_3(%arg0: i32) -> (i32, i32) {
    %c0_i32 = arith.constant 0 : i32
    %c0_i32_0 = arith.constant 0 : i32
    return %arg0, %c0_i32 : i32, i32
  }
}

</mosaic_0001>

<llo_original>
// kernel: encoder_forward.16
$region0: #{encoder_forward.16}
  #allocation0 [shape = 'u32[]', space=smem, size = 0x4, offset = 0x4, fixed_abs, tag = 'smem constant byte address 0x4 - core index']
  #allocation1 [shape = 'u32[144,128]{1,0:T(1,128)}', space=vmem, size = 0x12000, scoped, tag = 'internal scratch']
  %s0 = inlined_call_operand.vmem [shape: bf16[216,9], index: 0, kind: input, shape index: {}]
  %s1 = inlined_call_operand.vmem [shape: bf16[9,32], index: 1, kind: input, shape index: {}]
  %s2 = inlined_call_operand.vmem [shape: f32[1,32], index: 2, kind: input, shape index: {}]
  %s3 = inlined_call_operand.vmem [shape: bf16[216,32], index: 3, kind: output, shape index: {}]
  %s4 = sld [smem:[#allocation0]]
  $region22: #{encoder_forward.16} parent=0
    _
  %s6 = ssub.s32 1, %s4
  %s7 = scalar_select 0, %s6, %s4
  // Predicated region
  $region2: #{encoder_forward.16} parent=0 // pred_check
    _
  $region3: #{encoder_forward.16} parent=0 // pred_check_branch
    %9 = sbr.rel (0) target = $region5
  $region4: #{encoder_forward.16} parent=0 // pred_region
    _
  $region5: #{encoder_forward.16} parent=0 // pred_fallthru
    _
  // Predicated region
  $region6: #{encoder_forward.16} parent=0 // pred_check
    _
  $region7: #{encoder_forward.16} parent=0 // pred_check_branch
    %11 = sbr.rel (0) target = $region9
  $region8: #{encoder_forward.16} parent=0 // pred_region
    _
  $region9: #{encoder_forward.16} parent=0 // pred_fallthru
    _
  // Predicated region
  $region10: #{encoder_forward.16} parent=0 // pred_check
    _
  $region11: #{encoder_forward.16} parent=0 // pred_check_branch
    %13 = sbr.rel (0) target = $region13
  $region12: #{encoder_forward.16} parent=0 // pred_region
    _
  $region13: #{encoder_forward.16} parent=0 // pred_fallthru
    _
  %v15 = vld [vmem:[%s0] sm:$0xf]
  %v16 = vld [vmem:[%s0 + $0x4] sm:$0xf]
  %v17 = vld [vmem:[%s0 + $0x8] sm:$0xf]
  %v18 = vld [vmem:[%s0 + $0xc] sm:$0xf]
  %v19 = vld [vmem:[%s0 + $0x10] sm:$0xf]
  %v20 = vld [vmem:[%s0 + $0x14] sm:$0xf]
  %v21 = vld [vmem:[%s0 + $0x18] sm:$0xf]
  %v22 = vld [vmem:[%s0 + $0x1c] sm:$0xf]
  %v23 = vld [vmem:[%s0 + $0x20] sm:$0xf]
  %v24 = vld [vmem:[%s0 + $0x24] sm:$0xf]
  %v25 = vld [vmem:[%s0 + $0x28] sm:$0xf]
  %v26 = vld [vmem:[%s0 + $0x2c] sm:$0xf]
  %v27 = vld [vmem:[%s0 + $0x30] sm:$0xf]
  %v28 = vld [vmem:[%s0 + $0x34] sm:$0xf]
  %v29 = vld [vmem:[%s0 + $0x38] sm:$0xf]
  %v30 = vld [vmem:[%s0 + $0x3c] sm:$0xf]
  %v31 = vld [vmem:[%s0 + $0x40] sm:$0xf]
  %v32 = vld [vmem:[%s0 + $0x44] sm:$0xf]
  %v33 = vld [vmem:[%s0 + $0x48] sm:$0xf]
  %v34 = vld [vmem:[%s0 + $0x4c] sm:$0xf]
  %v35 = vld [vmem:[%s0 + $0x50] sm:$0xf]
  %v36 = vld [vmem:[%s0 + $0x54] sm:$0xf]
  %v37 = vld [vmem:[%s0 + $0x58] sm:$0xf]
  %v38 = vld [vmem:[%s0 + $0x5c] sm:$0xf]
  %v39 = vld [vmem:[%s0 + $0x60] sm:$0xf]
  %v40 = vld [vmem:[%s0 + $0x64] sm:$0xf]
  %v41 = vld [vmem:[%s0 + $0x68] sm:$0xf]
  %v42 = vld [vmem:[%s1] sm:$0xf]
  %v43 = vld [vmem:[%s1 + $0x4] sm:$0x1]
  %v44 = vld [vmem:[%s2] sm:$0x1]
  %v46 = vlaneseq
  %v47 = vshrl.u32 %v46, 7
  %v48 = vsub.s32 0, %v47
  %v49 = vrot.slane %v44, %v48
  %v78 = vunpack.c.l.b16 %v15
  %v79 = vunpack.c.l.b16 %v16
  %v80 = vunpack.c.l.b16 %v17
  %v81 = vunpack.c.l.b16 %v18
  %v82 = vunpack.c.l.b16 %v19
  %v83 = vunpack.c.l.b16 %v20
  %v84 = vunpack.c.l.b16 %v21
  %v85 = vunpack.c.l.b16 %v22
  %v86 = vunpack.c.l.b16 %v23
  %v87 = vunpack.c.l.b16 %v24
  %v88 = vunpack.c.l.b16 %v25
  %v89 = vunpack.c.l.b16 %v26
  %v90 = vunpack.c.l.b16 %v27
  %v91 = vunpack.c.l.b16 %v28
  %v92 = vunpack.c.l.b16 %v29
  %v93 = vunpack.c.l.b16 %v30
  %v94 = vunpack.c.l.b16 %v31
  %v95 = vunpack.c.l.b16 %v32
  %v96 = vunpack.c.l.b16 %v33
  %v97 = vunpack.c.l.b16 %v34
  %v98 = vunpack.c.l.b16 %v35
  %v99 = vunpack.c.l.b16 %v36
  %v100 = vunpack.c.l.b16 %v37
  %v101 = vunpack.c.l.b16 %v38
  %v102 = vunpack.c.l.b16 %v39
  %v103 = vunpack.c.l.b16 %v40
  %v104 = vunpack.c.l.b16 %v41
  %v105 = vpack.c.b16 %v79, %v78
  %v106 = vpack.c.b16 %v81, %v80
  %v107 = vpack.c.b16 %v83, %v82
  %v108 = vpack.c.b16 %v85, %v84
  %v109 = vpack.c.b16 %v87, %v86
  %v110 = vpack.c.b16 %v89, %v88
  %v111 = vpack.c.b16 %v91, %v90
  %v112 = vpack.c.b16 %v93, %v92
  %v113 = vpack.c.b16 %v95, %v94
  %v114 = vpack.c.b16 %v97, %v96
  %v115 = vpack.c.b16 %v99, %v98
  %v116 = vpack.c.b16 %v101, %v100
  %v117 = vpack.c.b16 %v103, %v102
  %v118 = vpack.c.b16 %v104, %v104
  %v121 = vunpack.c.l.b16 %v42
  %v122 = vunpack.c.l.b16 %v43
  %v123 = vpack.c.b16 %v122, %v121
  %vm124 = vcmask 72704
  %v126 = vsel %vm124, %v105, 0
  %v129 = vsel %vm124, %v106, 0
  %v132 = vsel %vm124, %v107, 0
  %v135 = vsel %vm124, %v108, 0
  %v138 = vsel %vm124, %v109, 0
  %v141 = vsel %vm124, %v110, 0
  %v144 = vsel %vm124, %v111, 0
  %v147 = vsel %vm124, %v112, 0
  %v150 = vsel %vm124, %v113, 0
  %v153 = vsel %vm124, %v114, 0
  %v156 = vsel %vm124, %v115, 0
  %v159 = vsel %vm124, %v116, 0
  %v162 = vsel %vm124, %v117, 0
  %v165 = vsel %vm124, %v118, 0
  %vm167 = vcmask 1043456
  %vm168 = vcmask 1044480
  %v169 = vsel %vm167, 4294967295, 65535
  %v170 = vsel %vm168, %v169, 0
  %v172 = vand.u32 %v123, %v170
  %174 = vmatprep.subr.bf16.mxu0 0
  %175 = vmatpush1.bf16.msra.mxu0 %v172
  %176 = vmatprep.subr.bf16.mxu0 0
  %177 = vmatpush1.bf16.msra.mxu0 0
  %178 = vmatprep.subr.bf16.mxu0 0
  %179 = vmatpush1.bf16.msra.mxu0 0
  %180 = vmatprep.subr.bf16.mxu0 0
  %181 = vmatpush1.bf16.msra.mxu0 0
  %182 = vmatprep.subr.bf16.mxu0 0
  %183 = vmatpush1.bf16.msra.mxu0 0
  %184 = vmatprep.subr.bf16.mxu0 0
  %185 = vmatpush1.bf16.msra.mxu0 0
  %186 = vmatprep.subr.bf16.mxu0 0
  %187 = vmatpush1.bf16.msra.mxu0 0
  %188 = vmatprep.subr.bf16.mxu0 0
  %189 = vmatpush1.bf16.msra.mxu0 0
  %190 = vmatprep.subr.bf16.mxu0 0
  %191 = vmatpush1.bf16.msra.mxu0 0
  %192 = vmatprep.subr.bf16.mxu0 0
  %193 = vmatpush1.bf16.msra.mxu0 0
  %194 = vmatprep.subr.bf16.mxu0 0
  %195 = vmatpush1.bf16.msra.mxu0 0
  %196 = vmatprep.subr.bf16.mxu0 0
  %197 = vmatpush1.bf16.msra.mxu0 0
  %198 = vmatprep.subr.bf16.mxu0 0
  %199 = vmatpush1.bf16.msra.mxu0 0
  %200 = vmatprep.subr.bf16.mxu0 0
  %201 = vmatpush1.bf16.msra.mxu0 0
  %202 = vmatprep.subr.bf16.mxu0 0
  %203 = vmatpush1.bf16.msra.mxu0 0
  %204 = vmatprep.subr.bf16.mxu0 0
  %205 = vmatpush1.bf16.msra.mxu0 0
  %206 = vmatprep.mubr.bf16.mxu0 0
  %207 = vmatmul.mubr.bf16.gmra.mrb[0].mxu0 %v126
  %v208 = vpop.f32.mrb[0].mxu0
  %v209 = vadd.f32 %v49, %v208
  %v210 = vpop.f32.mrb[0].mxu0
  %v211 = vpop.f32.mrb[0].mxu0
  %v212 = vadd.f32 %v49, %v211
  %v213 = vpop.f32.mrb[0].mxu0
  %214 = vmatprep.mubr.bf16.mxu0 0
  %215 = vmatmul.mubr.bf16.gmra.mrb[0].mxu0 %v129
  %v216 = vpop.f32.mrb[0].mxu0
  %v217 = vadd.f32 %v49, %v216
  %v218 = vpop.f32.mrb[0].mxu0
  %v219 = vpop.f32.mrb[0].mxu0
  %v220 = vadd.f32 %v49, %v219
  %v221 = vpop.f32.mrb[0].mxu0
  %222 = vmatprep.mubr.bf16.mxu0 0
  %223 = vmatmul.mubr.bf16.gmra.mrb[0].mxu0 %v132
  %v224 = vpop.f32.mrb[0].mxu0
  %v225 = vadd.f32 %v49, %v224
  %v226 = vpop.f32.mrb[0].mxu0
  %v227 = vpop.f32.mrb[0].mxu0
  %v228 = vadd.f32 %v49, %v227
  %v229 = vpop.f32.mrb[0].mxu0
  %230 = vmatprep.mubr.bf16.mxu0 0
  %231 = vmatmul.mubr.bf16.gmra.mrb[0].mxu0 %v135
  %v232 = vpop.f32.mrb[0].mxu0
  %v233 = vadd.f32 %v49, %v232
  %v234 = vpop.f32.mrb[0].mxu0
  %v235 = vpop.f32.mrb[0].mxu0
  %v236 = vadd.f32 %v49, %v235
  %v237 = vpop.f32.mrb[0].mxu0
  %238 = vmatprep.mubr.bf16.mxu0 0
  %239 = vmatmul.mubr.bf16.gmra.mrb[0].mxu0 %v138
  %v240 = vpop.f32.mrb[0].mxu0
  %v241 = vadd.f32 %v49, %v240
  %v242 = vpop.f32.mrb[0].mxu0
  %v243 = vpop.f32.mrb[0].mxu0
  %v244 = vadd.f32 %v49, %v243
  %v245 = vpop.f32.mrb[0].mxu0
  %246 = vmatprep.mubr.bf16.mxu0 0
  %247 = vmatmul.mubr.bf16.gmra.mrb[0].mxu0 %v141
  %v248 = vpop.f32.mrb[0].mxu0
  %v249 = vadd.f32 %v49, %v248
  %v250 = vpop.f32.mrb[0].mxu0
  %v251 = vpop.f32.mrb[0].mxu0
  %v252 = vadd.f32 %v49, %v251
  %v253 = vpop.f32.mrb[0].mxu0
  %254 = vmatprep.mubr.bf16.mxu0 0
  %255 = vmatmul.mubr.bf16.gmra.mrb[0].mxu0 %v144
  %v256 = vpop.f32.mrb[0].mxu0
  %v257 = vadd.f32 %v49, %v256
  %v258 = vpop.f32.mrb[0].mxu0
  %v259 = vpop.f32.mrb[0].mxu0
  %v260 = vadd.f32 %v49, %v259
  %v261 = vpop.f32.mrb[0].mxu0
  %262 = vmatprep.mubr.bf16.mxu0 0
  %263 = vmatmul.mubr.bf16.gmra.mrb[0].mxu0 %v147
  %v264 = vpop.f32.mrb[0].mxu0
  %v265 = vadd.f32 %v49, %v264
  %v266 = vpop.f32.mrb[0].mxu0
  %v267 = vpop.f32.mrb[0].mxu0
  %v268 = vadd.f32 %v49, %v267
  %v269 = vpop.f32.mrb[0].mxu0
  %270 = vmatprep.mubr.bf16.mxu0 0
  %271 = vmatmul.mubr.bf16.gmra.mrb[0].mxu0 %v150
  %v272 = vpop.f32.mrb[0].mxu0
  %v273 = vadd.f32 %v49, %v272
  %v274 = vpop.f32.mrb[0].mxu0
  %v275 = vpop.f32.mrb[0].mxu0
  %v276 = vadd.f32 %v49, %v275
  %v277 = vpop.f32.mrb[0].mxu0
  %278 = vmatprep.mubr.bf16.mxu0 0
  %279 = vmatmul.mubr.bf16.gmra.mrb[0].mxu0 %v153
  %v280 = vpop.f32.mrb[0].mxu0
  %v281 = vadd.f32 %v49, %v280
  %v282 = vpop.f32.mrb[0].mxu0
  %v283 = vpop.f32.mrb[0].mxu0
  %v284 = vadd.f32 %v49, %v283
  %v285 = vpop.f32.mrb[0].mxu0
  %286 = vmatprep.mubr.bf16.mxu0 0
  %287 = vmatmul.mubr.bf16.gmra.mrb[0].mxu0 %v156
  %v288 = vpop.f32.mrb[0].mxu0
  %v289 = vadd.f32 %v49, %v288
  %v290 = vpop.f32.mrb[0].mxu0
  %v291 = vpop.f32.mrb[0].mxu0
  %v292 = vadd.f32 %v49, %v291
  %v293 = vpop.f32.mrb[0].mxu0
  %294 = vmatprep.mubr.bf16.mxu0 0
  %295 = vmatmul.mubr.bf16.gmra.mrb[0].mxu0 %v159
  %v296 = vpop.f32.mrb[0].mxu0
  %v297 = vadd.f32 %v49, %v296
  %v298 = vpop.f32.mrb[0].mxu0
  %v299 = vpop.f32.mrb[0].mxu0
  %v300 = vadd.f32 %v49, %v299
  %v301 = vpop.f32.mrb[0].mxu0
  %302 = vmatprep.mubr.bf16.mxu0 0
  %303 = vmatmul.mubr.bf16.gmra.mrb[0].mxu0 %v162
  %v304 = vpop.f32.mrb[0].mxu0
  %v305 = vadd.f32 %v49, %v304
  %v306 = vpop.f32.mrb[0].mxu0
  %v307 = vpop.f32.mrb[0].mxu0
  %v308 = vadd.f32 %v49, %v307
  %v309 = vpop.f32.mrb[0].mxu0
  %310 = vmatprep.mubr.bf16.mxu0 0
  %311 = vmatmul.mubr.bf16.gmra.mrb[0].mxu0 %v165
  %v312 = vpop.f32.mrb[0].mxu0
  %v313 = vadd.f32 %v49, %v312
  %v314 = vpop.f32.mrb[0].mxu0
  %v315 = vpop.f32.mrb[0].mxu0
  %v316 = vpop.f32.mrb[0].mxu0
  %317 = vdwg.mxu0
  %v318 = vmax.f32 %v209, 0.0
  %v319 = vmax.f32 %v212, 0.0
  %v320 = vmax.f32 %v217, 0.0
  %v321 = vmax.f32 %v220, 0.0
  %v322 = vmax.f32 %v225, 0.0
  %v323 = vmax.f32 %v228, 0.0
  %v324 = vmax.f32 %v233, 0.0
  %v325 = vmax.f32 %v236, 0.0
  %v326 = vmax.f32 %v241, 0.0
  %v327 = vmax.f32 %v244, 0.0
  %v328 = vmax.f32 %v249, 0.0
  %v329 = vmax.f32 %v252, 0.0
  %v330 = vmax.f32 %v257, 0.0
  %v331 = vmax.f32 %v260, 0.0
  %v332 = vmax.f32 %v265, 0.0
  %v333 = vmax.f32 %v268, 0.0
  %v334 = vmax.f32 %v273, 0.0
  %v335 = vmax.f32 %v276, 0.0
  %v336 = vmax.f32 %v281, 0.0
  %v337 = vmax.f32 %v284, 0.0
  %v338 = vmax.f32 %v289, 0.0
  %v339 = vmax.f32 %v292, 0.0
  %v340 = vmax.f32 %v297, 0.0
  %v341 = vmax.f32 %v300, 0.0
  %v342 = vmax.f32 %v305, 0.0
  %v343 = vmax.f32 %v308, 0.0
  %v344 = vmax.f32 %v313, 0.0
  %v345 = vpack.c.bf16 %v319, %v318
  %v346 = vpack.c.bf16 %v321, %v320
  %v347 = vpack.c.bf16 %v323, %v322
  %v348 = vpack.c.bf16 %v325, %v324
  %v349 = vpack.c.bf16 %v327, %v326
  %v350 = vpack.c.bf16 %v329, %v328
  %v351 = vpack.c.bf16 %v331, %v330
  %v352 = vpack.c.bf16 %v333, %v332
  %v353 = vpack.c.bf16 %v335, %v334
  %v354 = vpack.c.bf16 %v337, %v336
  %v355 = vpack.c.bf16 %v339, %v338
  %v356 = vpack.c.bf16 %v341, %v340
  %v357 = vpack.c.bf16 %v343, %v342
  %v358 = vpack.c.bf16 %v344, %v344
  %v373 = vunpack.c.l.b16 %v345
  %v374 = vunpack.c.h.b16 %v345
  %v375 = vunpack.c.l.b16 %v346
  %v376 = vunpack.c.h.b16 %v346
  %v377 = vunpack.c.l.b16 %v347
  %v378 = vunpack.c.h.b16 %v347
  %v379 = vunpack.c.l.b16 %v348
  %v380 = vunpack.c.h.b16 %v348
  %v381 = vunpack.c.l.b16 %v349
  %v382 = vunpack.c.h.b16 %v349
  %v383 = vunpack.c.l.b16 %v350
  %v384 = vunpack.c.h.b16 %v350
  %v385 = vunpack.c.l.b16 %v351
  %v386 = vunpack.c.h.b16 %v351
  %v387 = vunpack.c.l.b16 %v352
  %v388 = vunpack.c.h.b16 %v352
  %v389 = vunpack.c.l.b16 %v353
  %v390 = vunpack.c.h.b16 %v353
  %v391 = vunpack.c.l.b16 %v354
  %v392 = vunpack.c.h.b16 %v354
  %v393 = vunpack.c.l.b16 %v355
  %v394 = vunpack.c.h.b16 %v355
  %v395 = vunpack.c.l.b16 %v356
  %v396 = vunpack.c.h.b16 %v356
  %v397 = vunpack.c.l.b16 %v357
  %v398 = vunpack.c.h.b16 %v357
  %v399 = vunpack.c.l.b16 %v358
  %v400 = vpack.c.b16 %v373, %v373
  %v401 = vpack.c.b16 %v374, %v374
  %v402 = vpack.c.b16 %v375, %v375
  %v403 = vpack.c.b16 %v376, %v376
  %v404 = vpack.c.b16 %v377, %v377
  %v405 = vpack.c.b16 %v378, %v378
  %v406 = vpack.c.b16 %v379, %v379
  %v407 = vpack.c.b16 %v380, %v380
  %v408 = vpack.c.b16 %v381, %v381
  %v409 = vpack.c.b16 %v382, %v382
  %v410 = vpack.c.b16 %v383, %v383
  %v411 = vpack.c.b16 %v384, %v384
  %v412 = vpack.c.b16 %v385, %v385
  %v413 = vpack.c.b16 %v386, %v386
  %v414 = vpack.c.b16 %v387, %v387
  %v415 = vpack.c.b16 %v388, %v388
  %v416 = vpack.c.b16 %v389, %v389
  %v417 = vpack.c.b16 %v390, %v390
  %v418 = vpack.c.b16 %v391, %v391
  %v419 = vpack.c.b16 %v392, %v392
  %v420 = vpack.c.b16 %v393, %v393
  %v421 = vpack.c.b16 %v394, %v394
  %v422 = vpack.c.b16 %v395, %v395
  %v423 = vpack.c.b16 %v396, %v396
  %v424 = vpack.c.b16 %v397, %v397
  %v425 = vpack.c.b16 %v398, %v398
  %v426 = vpack.c.b16 %v399, %v399
  %vm454 = vcmask 257024
  %455 = vst.msk [vmem:[%s3] sm:$0xf] %vm454, %v400
  %456 = vst.msk [vmem:[%s3 + $0x4] sm:$0xf] %vm454, %v401
  %457 = vst.msk [vmem:[%s3 + $0x8] sm:$0xf] %vm454, %v402
  %458 = vst.msk [vmem:[%s3 + $0xc] sm:$0xf] %vm454, %v403
  %459 = vst.msk [vmem:[%s3 + $0x10] sm:$0xf] %vm454, %v404
  %460 = vst.msk [vmem:[%s3 + $0x14] sm:$0xf] %vm454, %v405
  %461 = vst.msk [vmem:[%s3 + $0x18] sm:$0xf] %vm454, %v406
  %462 = vst.msk [vmem:[%s3 + $0x1c] sm:$0xf] %vm454, %v407
  %463 = vst.msk [vmem:[%s3 + $0x20] sm:$0xf] %vm454, %v408
  %464 = vst.msk [vmem:[%s3 + $0x24] sm:$0xf] %vm454, %v409
  %465 = vst.msk [vmem:[%s3 + $0x28] sm:$0xf] %vm454, %v410
  %466 = vst.msk [vmem:[%s3 + $0x2c] sm:$0xf] %vm454, %v411
  %467 = vst.msk [vmem:[%s3 + $0x30] sm:$0xf] %vm454, %v412
  %468 = vst.msk [vmem:[%s3 + $0x34] sm:$0xf] %vm454, %v413
  %469 = vst.msk [vmem:[%s3 + $0x38] sm:$0xf] %vm454, %v414
  %470 = vst.msk [vmem:[%s3 + $0x3c] sm:$0xf] %vm454, %v415
  %471 = vst.msk [vmem:[%s3 + $0x40] sm:$0xf] %vm454, %v416
  %472 = vst.msk [vmem:[%s3 + $0x44] sm:$0xf] %vm454, %v417
  %473 = vst.msk [vmem:[%s3 + $0x48] sm:$0xf] %vm454, %v418
  %474 = vst.msk [vmem:[%s3 + $0x4c] sm:$0xf] %vm454, %v419
  %475 = vst.msk [vmem:[%s3 + $0x50] sm:$0xf] %vm454, %v420
  %476 = vst.msk [vmem:[%s3 + $0x54] sm:$0xf] %vm454, %v421
  %477 = vst.msk [vmem:[%s3 + $0x58] sm:$0xf] %vm454, %v422
  %478 = vst.msk [vmem:[%s3 + $0x5c] sm:$0xf] %vm454, %v423
  %479 = vst.msk [vmem:[%s3 + $0x60] sm:$0xf] %vm454, %v424
  %480 = vst.msk [vmem:[%s3 + $0x64] sm:$0xf] %vm454, %v425
  %481 = vst.msk [vmem:[%s3 + $0x68] sm:$0xf] %vm454, %v426
  // Predicated region
  $region14: #{encoder_forward.16} parent=0 // pred_check
    _
  $region15: #{encoder_forward.16} parent=0 // pred_check_branch
    %483 = sbr.rel (0) target = $region17
  $region16: #{encoder_forward.16} parent=0 // pred_region
    _
  $region17: #{encoder_forward.16} parent=0 // pred_fallthru
    _
  // Predicated region
  $region18: #{encoder_forward.16} parent=0 // pred_check
    _
  $region19: #{encoder_forward.16} parent=0 // pred_check_branch
    %485 = sbr.rel (0) target = $region21
  $region20: #{encoder_forward.16} parent=0 // pred_region
    _
  $region21: #{encoder_forward.16} parent=0 // pred_fallthru
    _

// kernel: encoder_forward.17
$region0: #{encoder_forward.17}
  #allocation0 [shape = 'u32[]', space=smem, size = 0x4, offset = 0x4, fixed_abs, tag = 'smem constant byte address 0x4 - core index']
  #allocation1 [shape = 'u32[144,128]{1,0:T(1,128)}', space=vmem, size = 0x12000, scoped, tag = 'internal scratch']
  %s0 = inlined_call_operand.vmem [shape: bf16[48,288], index: 0, kind: input, shape index: {}]
  %s1 = inlined_call_operand.vmem [shape: bf16[288,32], index: 1, kind: input, shape index: {}]
  %s2 = inlined_call_operand.vmem [shape: f32[1,32], index: 2, kind: input, shape index: {}]
  %s3 = inlined_call_operand.vmem [shape: bf16[48,32], index: 3, kind: output, shape index: {}]
  %s4 = sld [smem:[#allocation0]]
  $region22: #{encoder_forward.17} parent=0
    _
  %s6 = ssub.s32 1, %s4
  %s7 = scalar_select 0, %s6, %s4
  // Predicated region
  $region2: #{encoder_forward.17} parent=0 // pred_check
    _
  $region3: #{encoder_forward.17} parent=0 // pred_check_branch
    %9 = sbr.rel (0) target = $region5
  $region4: #{encoder_forward.17} parent=0 // pred_region
    _
  $region5: #{encoder_forward.17} parent=0 // pred_fallthru
    _
  // Predicated region
  $region6: #{encoder_forward.17} parent=0 // pred_check
    _
  $region7: #{encoder_forward.17} parent=0 // pred_check_branch
    %11 = sbr.rel (0) target = $region9
  $region8: #{encoder_forward.17} parent=0 // pred_region
    _
  $region9: #{encoder_forward.17} parent=0 // pred_fallthru
    _
  // Predicated region
  $region10: #{encoder_forward.17} parent=0 // pred_check
    _
  $region11: #{encoder_forward.17} parent=0 // pred_check_branch
    %13 = sbr.rel (0) target = $region13
  $region12: #{encoder_forward.17} parent=0 // pred_region
    _
  $region13: #{encoder_forward.17} parent=0 // pred_fallthru
    _
  %v15 = vld [vmem:[%s0] sm:$0xff]
  %v16 = vld [vmem:[%s0 + $0x8] sm:$0xf]
  %v17 = vld [vmem:[%s0 + $0xc] sm:$0xff]
  %v18 = vld [vmem:[%s0 + $0x14] sm:$0xf]
  %v19 = vld [vmem:[%s0 + $0x18] sm:$0xff]
  %v20 = vld [vmem:[%s0 + $0x20] sm:$0xf]
  %v21 = vld [vmem:[%s0 + $0x24] sm:$0xff]
  %v22 = vld [vmem:[%s0 + $0x2c] sm:$0xf]
  %v23 = vld [vmem:[%s0 + $0x30] sm:$0xff]
  %v24 = vld [vmem:[%s0 + $0x38] sm:$0xf]
  %v25 = vld [vmem:[%s0 + $0x3c] sm:$0xff]
  %v26 = vld [vmem:[%s0 + $0x44] sm:$0xf]
  %v27 = vld [vmem:[%s1] sm:$0xf]
  %v28 = vld [vmem:[%s1 + $0x4] sm:$0xf]
  %v29 = vld [vmem:[%s1 + $0x8] sm:$0xf]
  %v30 = vld [vmem:[%s1 + $0xc] sm:$0xf]
  %v31 = vld [vmem:[%s1 + $0x10] sm:$0xf]
  %v32 = vld [vmem:[%s1 + $0x14] sm:$0xf]
  %v33 = vld [vmem:[%s1 + $0x18] sm:$0xf]
  %v34 = vld [vmem:[%s1 + $0x1c] sm:$0xf]
  %v35 = vld [vmem:[%s1 + $0x20] sm:$0xf]
  %v36 = vld [vmem:[%s1 + $0x24] sm:$0xf]
  %v37 = vld [vmem:[%s1 + $0x28] sm:$0xf]
  %v38 = vld [vmem:[%s1 + $0x2c] sm:$0xf]
  %v39 = vld [vmem:[%s1 + $0x30] sm:$0xf]
  %v40 = vld [vmem:[%s1 + $0x34] sm:$0xf]
  %v41 = vld [vmem:[%s1 + $0x38] sm:$0xf]
  %v42 = vld [vmem:[%s1 + $0x3c] sm:$0xf]
  %v43 = vld [vmem:[%s1 + $0x40] sm:$0xf]
  %v44 = vld [vmem:[%s1 + $0x44] sm:$0xf]
  %v45 = vld [vmem:[%s1 + $0x48] sm:$0xf]
  %v46 = vld [vmem:[%s1 + $0x4c] sm:$0xf]
  %v47 = vld [vmem:[%s1 + $0x50] sm:$0xf]
  %v48 = vld [vmem:[%s1 + $0x54] sm:$0xf]
  %v49 = vld [vmem:[%s1 + $0x58] sm:$0xf]
  %v50 = vld [vmem:[%s1 + $0x5c] sm:$0xf]
  %v51 = vld [vmem:[%s1 + $0x60] sm:$0xf]
  %v52 = vld [vmem:[%s1 + $0x64] sm:$0xf]
  %v53 = vld [vmem:[%s1 + $0x68] sm:$0xf]
  %v54 = vld [vmem:[%s1 + $0x6c] sm:$0xf]
  %v55 = vld [vmem:[%s1 + $0x70] sm:$0xf]
  %v56 = vld [vmem:[%s1 + $0x74] sm:$0xf]
  %v57 = vld [vmem:[%s1 + $0x78] sm:$0xf]
  %v58 = vld [vmem:[%s1 + $0x7c] sm:$0xf]
  %v59 = vld [vmem:[%s1 + $0x80] sm:$0xf]
  %v60 = vld [vmem:[%s1 + $0x84] sm:$0xf]
  %v61 = vld [vmem:[%s1 + $0x88] sm:$0xf]
  %v62 = vld [vmem:[%s1 + $0x8c] sm:$0xf]
  %v63 = vld [vmem:[%s2] sm:$0x1]
  %v65 = vlaneseq
  %v66 = vshrl.u32 %v65, 7
  %v67 = vsub.s32 0, %v66
  %v68 = vrot.slane %v63, %v67
  %v82 = vunpack.c.l.b16 %v15
  %v83 = vunpack.c.h.b16 %v15
  %v84 = vunpack.c.l.b16 %v16
  %v85 = vunpack.c.l.b16 %v17
  %v86 = vunpack.c.h.b16 %v17
  %v87 = vunpack.c.l.b16 %v18
  %v88 = vunpack.c.l.b16 %v19
  %v89 = vunpack.c.h.b16 %v19
  %v90 = vunpack.c.l.b16 %v20
  %v91 = vunpack.c.l.b16 %v21
  %v92 = vunpack.c.h.b16 %v21
  %v93 = vunpack.c.l.b16 %v22
  %v94 = vunpack.c.l.b16 %v23
  %v95 = vunpack.c.h.b16 %v23
  %v96 = vunpack.c.l.b16 %v24
  %v97 = vunpack.c.l.b16 %v25
  %v98 = vunpack.c.h.b16 %v25
  %v99 = vunpack.c.l.b16 %v26
  %v100 = vpack.c.b16 %v85, %v82
  %v101 = vpack.c.b16 %v86, %v83
  %v102 = vpack.c.b16 %v87, %v84
  %v103 = vpack.c.b16 %v91, %v88
  %v104 = vpack.c.b16 %v92, %v89
  %v105 = vpack.c.b16 %v93, %v90
  %v106 = vpack.c.b16 %v97, %v94
  %v107 = vpack.c.b16 %v98, %v95
  %v108 = vpack.c.b16 %v99, %v96
  %v151 = vunpack.c.l.b16 %v27
  %v152 = vunpack.c.l.b16 %v28
  %v153 = vunpack.c.l.b16 %v29
  %v154 = vunpack.c.l.b16 %v30
  %v155 = vunpack.c.l.b16 %v31
  %v156 = vunpack.c.l.b16 %v32
  %v157 = vunpack.c.l.b16 %v33
  %v158 = vunpack.c.l.b16 %v34
  %v159 = vunpack.c.l.b16 %v35
  %v160 = vunpack.c.l.b16 %v36
  %v161 = vunpack.c.l.b16 %v37
  %v162 = vunpack.c.l.b16 %v38
  %v163 = vunpack.c.l.b16 %v39
  %v164 = vunpack.c.l.b16 %v40
  %v165 = vunpack.c.l.b16 %v41
  %v166 = vunpack.c.l.b16 %v42
  %v167 = vunpack.c.l.b16 %v43
  %v168 = vunpack.c.l.b16 %v44
  %v169 = vunpack.c.l.b16 %v45
  %v170 = vunpack.c.l.b16 %v46
  %v171 = vunpack.c.l.b16 %v47
  %v172 = vunpack.c.l.b16 %v48
  %v173 = vunpack.c.l.b16 %v49
  %v174 = vunpack.c.l.b16 %v50
  %v175 = vunpack.c.l.b16 %v51
  %v176 = vunpack.c.l.b16 %v52
  %v177 = vunpack.c.l.b16 %v53
  %v178 = vunpack.c.l.b16 %v54
  %v179 = vunpack.c.l.b16 %v55
  %v180 = vunpack.c.l.b16 %v56
  %v181 = vunpack.c.l.b16 %v57
  %v182 = vunpack.c.l.b16 %v58
  %v183 = vunpack.c.l.b16 %v59
  %v184 = vunpack.c.l.b16 %v60
  %v185 = vunpack.c.l.b16 %v61
  %v186 = vunpack.c.l.b16 %v62
  %v187 = vpack.c.b16 %v152, %v151
  %v188 = vpack.c.b16 %v154, %v153
  %v189 = vpack.c.b16 %v156, %v155
  %v190 = vpack.c.b16 %v158, %v157
  %v191 = vpack.c.b16 %v160, %v159
  %v192 = vpack.c.b16 %v162, %v161
  %v193 = vpack.c.b16 %v164, %v163
  %v194 = vpack.c.b16 %v166, %v165
  %v195 = vpack.c.b16 %v168, %v167
  %v196 = vpack.c.b16 %v170, %v169
  %v197 = vpack.c.b16 %v172, %v171
  %v198 = vpack.c.b16 %v174, %v173
  %v199 = vpack.c.b16 %v176, %v175
  %v200 = vpack.c.b16 %v178, %v177
  %v201 = vpack.c.b16 %v180, %v179
  %v202 = vpack.c.b16 %v182, %v181
  %v203 = vpack.c.b16 %v184, %v183
  %v204 = vpack.c.b16 %v186, %v185
  %vm223 = vcmask 261120
  %v225 = vsel %vm223, %v102, 0
  %v228 = vsel %vm223, %v105, 0
  %v231 = vsel %vm223, %v108, 0
  %233 = vmatprep.subr.bf16.mxu0 0
  %234 = vmatpush1.bf16.msra.mxu0 %v187
  %235 = vmatprep.subr.bf16.mxu0 0
  %236 = vmatpush1.bf16.msra.mxu0 %v188
  %237 = vmatprep.subr.bf16.mxu0 0
  %238 = vmatpush1.bf16.msra.mxu0 %v189
  %239 = vmatprep.subr.bf16.mxu0 0
  %240 = vmatpush1.bf16.msra.mxu0 %v190
  %241 = vmatprep.subr.bf16.mxu0 0
  %242 = vmatpush1.bf16.msra.mxu0 %v191
  %243 = vmatprep.subr.bf16.mxu0 0
  %244 = vmatpush1.bf16.msra.mxu0 %v192
  %245 = vmatprep.subr.bf16.mxu0 0
  %246 = vmatpush1.bf16.msra.mxu0 %v193
  %247 = vmatprep.subr.bf16.mxu0 0
  %248 = vmatpush1.bf16.msra.mxu0 %v194
  %249 = vmatprep.subr.bf16.mxu0 0
  %250 = vmatpush1.bf16.msra.mxu0 %v195
  %251 = vmatprep.subr.bf16.mxu0 0
  %252 = vmatpush1.bf16.msra.mxu0 %v196
  %253 = vmatprep.subr.bf16.mxu0 0
  %254 = vmatpush1.bf16.msra.mxu0 %v197
  %255 = vmatprep.subr.bf16.mxu0 0
  %256 = vmatpush1.bf16.msra.mxu0 %v198
  %257 = vmatprep.subr.bf16.mxu0 0
  %258 = vmatpush1.bf16.msra.mxu0 %v199
  %259 = vmatprep.subr.bf16.mxu0 0
  %260 = vmatpush1.bf16.msra.mxu0 %v200
  %261 = vmatprep.subr.bf16.mxu0 0
  %262 = vmatpush1.bf16.msra.mxu0 %v201
  %263 = vmatprep.subr.bf16.mxu0 0
  %264 = vmatpush1.bf16.msra.mxu0 %v202
  %265 = vmatprep.mubr.bf16.mxu0 %v101
  %266 = vmatmul.mubr.bf16.gmra.mrb[0].mxu0 %v100
  %v267 = vpop.f32.mrb[0].mxu0
  %v268 = vadd.f32 %v68, %v267
  %v269 = vpop.f32.mrb[0].mxu0
  %v270 = vpop.f32.mrb[0].mxu0
  %v271 = vadd.f32 %v68, %v270
  %v272 = vpop.f32.mrb[0].mxu0
  %273 = vmatprep.mubr.bf16.mxu0 %v104
  %274 = vmatmul.mubr.bf16.gmra.mrb[0].mxu0 %v103
  %v275 = vpop.f32.mrb[0].mxu0
  %v276 = vadd.f32 %v68, %v275
  %v277 = vpop.f32.mrb[0].mxu0
  %v278 = vpop.f32.mrb[0].mxu0
  %v279 = vadd.f32 %v68, %v278
  %v280 = vpop.f32.mrb[0].mxu0
  %281 = vmatprep.mubr.bf16.mxu0 %v107
  %282 = vmatmul.mubr.bf16.gmra.mrb[0].mxu0 %v106
  %v283 = vpop.f32.mrb[0].mxu0
  %v284 = vadd.f32 %v68, %v283
  %v285 = vpop.f32.mrb[0].mxu0
  %v286 = vpop.f32.mrb[0].mxu0
  %v287 = vadd.f32 %v68, %v286
  %v288 = vpop.f32.mrb[0].mxu0
  %289 = vdwg.mxu0
  %290 = vmatprep.subr.bf16.mxu0 0
  %291 = vmatpush1.bf16.msra.mxu0 %v203
  %292 = vmatprep.subr.bf16.mxu0 0
  %293 = vmatpush1.bf16.msra.mxu0 %v204
  %294 = vmatprep.subr.bf16.mxu0 0
  %295 = vmatpush1.bf16.msra.mxu0 0
  %296 = vmatprep.subr.bf16.mxu0 0
  %297 = vmatpush1.bf16.msra.mxu0 0
  %298 = vmatprep.subr.bf16.mxu0 0
  %299 = vmatpush1.bf16.msra.mxu0 0
  %300 = vmatprep.subr.bf16.mxu0 0
  %301 = vmatpush1.bf16.msra.mxu0 0
  %302 = vmatprep.subr.bf16.mxu0 0
  %303 = vmatpush1.bf16.msra.mxu0 0
  %304 = vmatprep.subr.bf16.mxu0 0
  %305 = vmatpush1.bf16.msra.mxu0 0
  %306 = vmatprep.subr.bf16.mxu0 0
  %307 = vmatpush1.bf16.msra.mxu0 0
  %308 = vmatprep.subr.bf16.mxu0 0
  %309 = vmatpush1.bf16.msra.mxu0 0
  %310 = vmatprep.subr.bf16.mxu0 0
  %311 = vmatpush1.bf16.msra.mxu0 0
  %312 = vmatprep.subr.bf16.mxu0 0
  %313 = vmatpush1.bf16.msra.mxu0 0
  %314 = vmatprep.subr.bf16.mxu0 0
  %315 = vmatpush1.bf16.msra.mxu0 0
  %316 = vmatprep.subr.bf16.mxu0 0
  %317 = vmatpush1.bf16.msra.mxu0 0
  %318 = vmatprep.subr.bf16.mxu0 0
  %319 = vmatpush1.bf16.msra.mxu0 0
  %320 = vmatprep.subr.bf16.mxu0 0
  %321 = vmatpush1.bf16.msra.mxu0 0
  %322 = vmatprep.mubr.bf16.mxu0 0
  %323 = vmatmul.mubr.bf16.gmra.mrb[0].mxu0 %v225
  %v324 = vpop.f32.mrb[0].mxu0
  %v325 = vadd.f32 %v268, %v324
  %v326 = vpop.f32.mrb[0].mxu0
  %v327 = vpop.f32.mrb[0].mxu0
  %v328 = vadd.f32 %v271, %v327
  %v329 = vpop.f32.mrb[0].mxu0
  %330 = vmatprep.mubr.bf16.mxu0 0
  %331 = vmatmul.mubr.bf16.gmra.mrb[0].mxu0 %v228
  %v332 = vpop.f32.mrb[0].mxu0
  %v333 = vadd.f32 %v276, %v332
  %v334 = vpop.f32.mrb[0].mxu0
  %v335 = vpop.f32.mrb[0].mxu0
  %v336 = vadd.f32 %v279, %v335
  %v337 = vpop.f32.mrb[0].mxu0
  %338 = vmatprep.mubr.bf16.mxu0 0
  %339 = vmatmul.mubr.bf16.gmra.mrb[0].mxu0 %v231
  %v340 = vpop.f32.mrb[0].mxu0
  %v341 = vadd.f32 %v284, %v340
  %v342 = vpop.f32.mrb[0].mxu0
  %v343 = vpop.f32.mrb[0].mxu0
  %v344 = vadd.f32 %v287, %v343
  %v345 = vpop.f32.mrb[0].mxu0
  %346 = vdwg.mxu0
  %v347 = vmax.f32 %v325, 0.0
  %v348 = vmax.f32 %v328, 0.0
  %v349 = vmax.f32 %v333, 0.0
  %v350 = vmax.f32 %v336, 0.0
  %v351 = vmax.f32 %v341, 0.0
  %v352 = vmax.f32 %v344, 0.0
  %v353 = vpack.c.bf16 %v348, %v347
  %v354 = vpack.c.bf16 %v350, %v349
  %v355 = vpack.c.bf16 %v352, %v351
  %v359 = vunpack.c.l.b16 %v353
  %v360 = vunpack.c.h.b16 %v353
  %v361 = vunpack.c.l.b16 %v354
  %v362 = vunpack.c.h.b16 %v354
  %v363 = vunpack.c.l.b16 %v355
  %v364 = vunpack.c.h.b16 %v355
  %v365 = vpack.c.b16 %v359, %v359
  %v366 = vpack.c.b16 %v360, %v360
  %v367 = vpack.c.b16 %v361, %v361
  %v368 = vpack.c.b16 %v362, %v362
  %v369 = vpack.c.b16 %v363, %v363
  %v370 = vpack.c.b16 %v364, %v364
  %vm377 = vcmask 257024
  %378 = vst.msk [vmem:[%s3] sm:$0xf] %vm377, %v365
  %379 = vst.msk [vmem:[%s3 + $0x4] sm:$0xf] %vm377, %v366
  %380 = vst.msk [vmem:[%s3 + $0x8] sm:$0xf] %vm377, %v367
  %381 = vst.msk [vmem:[%s3 + $0xc] sm:$0xf] %vm377, %v368
  %382 = vst.msk [vmem:[%s3 + $0x10] sm:$0xf] %vm377, %v369
  %383 = vst.msk [vmem:[%s3 + $0x14] sm:$0xf] %vm377, %v370
  // Predicated region
  $region14: #{encoder_forward.17} parent=0 // pred_check
    _
  $region15: #{encoder_forward.17} parent=0 // pred_check_branch
    %385 = sbr.rel (0) target = $region17
  $region16: #{encoder_forward.17} parent=0 // pred_region
    _
  $region17: #{encoder_forward.17} parent=0 // pred_fallthru
    _
  // Predicated region
  $region18: #{encoder_forward.17} parent=0 // pred_check
    _
  $region19: #{encoder_forward.17} parent=0 // pred_check_branch
    %387 = sbr.rel (0) target = $region21
  $region20: #{encoder_forward.17} parent=0 // pred_region
    _
  $region21: #{encoder_forward.17} parent=0 // pred_fallthru
    _

// kernel: encoder_forward.18
$region0: #{encoder_forward.18}
  #allocation0 [shape = 'u32[]', space=smem, size = 0x4, offset = 0x4, fixed_abs, tag = 'smem constant byte address 0x4 - core index']
  #allocation1 [shape = 'u32[144,128]{1,0:T(1,128)}', space=vmem, size = 0x12000, scoped, tag = 'internal scratch']
  %s0 = inlined_call_operand.vmem [shape: bf16[16,96], index: 0, kind: input, shape index: {}]
  %s1 = inlined_call_operand.vmem [shape: bf16[96,32], index: 1, kind: input, shape index: {}]
  %s2 = inlined_call_operand.vmem [shape: f32[1,32], index: 2, kind: input, shape index: {}]
  %s3 = inlined_call_operand.vmem [shape: f32[16,32], index: 3, kind: output, shape index: {}]
  %s4 = sld [smem:[#allocation0]]
  $region22: #{encoder_forward.18} parent=0
    _
  %s6 = ssub.s32 1, %s4
  %s7 = scalar_select 0, %s6, %s4
  // Predicated region
  $region2: #{encoder_forward.18} parent=0 // pred_check
    _
  $region3: #{encoder_forward.18} parent=0 // pred_check_branch
    %9 = sbr.rel (0) target = $region5
  $region4: #{encoder_forward.18} parent=0 // pred_region
    _
  $region5: #{encoder_forward.18} parent=0 // pred_fallthru
    _
  // Predicated region
  $region6: #{encoder_forward.18} parent=0 // pred_check
    _
  $region7: #{encoder_forward.18} parent=0 // pred_check_branch
    %11 = sbr.rel (0) target = $region9
  $region8: #{encoder_forward.18} parent=0 // pred_region
    _
  $region9: #{encoder_forward.18} parent=0 // pred_fallthru
    _
  // Predicated region
  $region10: #{encoder_forward.18} parent=0 // pred_check
    _
  $region11: #{encoder_forward.18} parent=0 // pred_check_branch
    %13 = sbr.rel (0) target = $region13
  $region12: #{encoder_forward.18} parent=0 // pred_region
    _
  $region13: #{encoder_forward.18} parent=0 // pred_fallthru
    _
  %v15 = vld [vmem:[%s0] sm:$0xf]
  %v16 = vld [vmem:[%s0 + $0x4] sm:$0xf]
  %v17 = vld [vmem:[%s1] sm:$0xf]
  %v18 = vld [vmem:[%s1 + $0x4] sm:$0xf]
  %v19 = vld [vmem:[%s1 + $0x8] sm:$0xf]
  %v20 = vld [vmem:[%s1 + $0xc] sm:$0xf]
  %v21 = vld [vmem:[%s1 + $0x10] sm:$0xf]
  %v22 = vld [vmem:[%s1 + $0x14] sm:$0xf]
  %v23 = vld [vmem:[%s1 + $0x18] sm:$0xf]
  %v24 = vld [vmem:[%s1 + $0x1c] sm:$0xf]
  %v25 = vld [vmem:[%s1 + $0x20] sm:$0xf]
  %v26 = vld [vmem:[%s1 + $0x24] sm:$0xf]
  %v27 = vld [vmem:[%s1 + $0x28] sm:$0xf]
  %v28 = vld [vmem:[%s1 + $0x2c] sm:$0xf]
  %v29 = vld [vmem:[%s2] sm:$0x1]
  %v31 = vlaneseq
  %v32 = vshrl.u32 %v31, 7
  %v33 = vsub.s32 0, %v32
  %v34 = vrot.slane %v29, %v33
  %v38 = vunpack.c.l.b16 %v15
  %v39 = vunpack.c.l.b16 %v16
  %v40 = vpack.c.b16 %v39, %v38
  %v53 = vunpack.c.l.b16 %v17
  %v54 = vunpack.c.l.b16 %v18
  %v55 = vunpack.c.l.b16 %v19
  %v56 = vunpack.c.l.b16 %v20
  %v57 = vunpack.c.l.b16 %v21
  %v58 = vunpack.c.l.b16 %v22
  %v59 = vunpack.c.l.b16 %v23
  %v60 = vunpack.c.l.b16 %v24
  %v61 = vunpack.c.l.b16 %v25
  %v62 = vunpack.c.l.b16 %v26
  %v63 = vunpack.c.l.b16 %v27
  %v64 = vunpack.c.l.b16 %v28
  %v65 = vpack.c.b16 %v54, %v53
  %v66 = vpack.c.b16 %v56, %v55
  %v67 = vpack.c.b16 %v58, %v57
  %v68 = vpack.c.b16 %v60, %v59
  %v69 = vpack.c.b16 %v62, %v61
  %v70 = vpack.c.b16 %v64, %v63
  %vm77 = vcmask 785408
  %v79 = vsel %vm77, %v40, 0
  %81 = vmatprep.subr.bf16.mxu0 0
  %82 = vmatpush1.bf16.msra.mxu0 %v65
  %83 = vmatprep.subr.bf16.mxu0 0
  %84 = vmatpush1.bf16.msra.mxu0 %v66
  %85 = vmatprep.subr.bf16.mxu0 0
  %86 = vmatpush1.bf16.msra.mxu0 %v67
  %87 = vmatprep.subr.bf16.mxu0 0
  %88 = vmatpush1.bf16.msra.mxu0 %v68
  %89 = vmatprep.subr.bf16.mxu0 0
  %90 = vmatpush1.bf16.msra.mxu0 %v69
  %91 = vmatprep.subr.bf16.mxu0 0
  %92 = vmatpush1.bf16.msra.mxu0 %v70
  %93 = vmatprep.subr.bf16.mxu0 0
  %94 = vmatpush1.bf16.msra.mxu0 0
  %95 = vmatprep.subr.bf16.mxu0 0
  %96 = vmatpush1.bf16.msra.mxu0 0
  %97 = vmatprep.subr.bf16.mxu0 0
  %98 = vmatpush1.bf16.msra.mxu0 0
  %99 = vmatprep.subr.bf16.mxu0 0
  %100 = vmatpush1.bf16.msra.mxu0 0
  %101 = vmatprep.subr.bf16.mxu0 0
  %102 = vmatpush1.bf16.msra.mxu0 0
  %103 = vmatprep.subr.bf16.mxu0 0
  %104 = vmatpush1.bf16.msra.mxu0 0
  %105 = vmatprep.subr.bf16.mxu0 0
  %106 = vmatpush1.bf16.msra.mxu0 0
  %107 = vmatprep.subr.bf16.mxu0 0
  %108 = vmatpush1.bf16.msra.mxu0 0
  %109 = vmatprep.subr.bf16.mxu0 0
  %110 = vmatpush1.bf16.msra.mxu0 0
  %111 = vmatprep.subr.bf16.mxu0 0
  %112 = vmatpush1.bf16.msra.mxu0 0
  %113 = vmatprep.mubr.bf16.mxu0 0
  %114 = vmatmul.mubr.bf16.gmra.mrb[0].mxu0 %v79
  %v115 = vpop.f32.mrb[0].mxu0
  %v116 = vadd.f32 %v34, %v115
  %v117 = vpop.f32.mrb[0].mxu0
  %v118 = vpop.f32.mrb[0].mxu0
  %v119 = vadd.f32 %v34, %v118
  %v120 = vpop.f32.mrb[0].mxu0
  %121 = vdwg.mxu0
  %vm122 = vcmask 261120
  %123 = vst.msk [vmem:[%s3] sm:$0xff] %vm122, %v116
  %124 = vst.msk [vmem:[%s3 + $0x8] sm:$0xff] %vm122, %v119
  // Predicated region
  $region14: #{encoder_forward.18} parent=0 // pred_check
    _
  $region15: #{encoder_forward.18} parent=0 // pred_check_branch
    %126 = sbr.rel (0) target = $region17
  $region16: #{encoder_forward.18} parent=0 // pred_region
    _
  $region17: #{encoder_forward.18} parent=0 // pred_fallthru
    _
  // Predicated region
  $region18: #{encoder_forward.18} parent=0 // pred_check
    _
  $region19: #{encoder_forward.18} parent=0 // pred_check_branch
    %128 = sbr.rel (0) target = $region21
  $region20: #{encoder_forward.18} parent=0 // pred_region
    _
  $region21: #{encoder_forward.18} parent=0 // pred_fallthru
    _

// kernel: encoder_forward.19
$region0: #{encoder_forward.19}
  #allocation0 [shape = 'u32[]', space=smem, size = 0x4, offset = 0x4, fixed_abs, tag = 'smem constant byte address 0x4 - core index']
  #allocation1 [shape = 'u32[144,128]{1,0:T(1,128)}', space=vmem, size = 0x12000, scoped, tag = 'internal scratch']
  #allocation2 [shape = 'bf16[16,32]{1,0:T(16,128)(2,1)}', space=vmem, size = 0x1000, scoped, tag = 'scratch operand']
  %s0 = inlined_call_operand.vmem [shape: bf16[16,32], index: 0, kind: input, shape index: {}]
  %s1 = inlined_call_operand.vmem [shape: f32[1,32], index: 1, kind: input, shape index: {}]
  %s2 = inlined_call_operand.vmem [shape: f32[1,32], index: 2, kind: input, shape index: {}]
  %s3 = inlined_call_operand.vmem [shape: bf16[32,64], index: 3, kind: input, shape index: {}]
  %s4 = inlined_call_operand.vmem [shape: bf16[32,64], index: 4, kind: input, shape index: {}]
  %s5 = inlined_call_operand.vmem [shape: bf16[16,64], index: 5, kind: output, shape index: {0}]
  %s6 = inlined_call_operand.vmem [shape: bf16[16,64], index: 6, kind: output, shape index: {1}]
  %7 = xla_tuple %s5, %s6
  %s8 = sld [smem:[#allocation0]]
  $region42: #{encoder_forward.19} parent=0
    _
  %s10 = ssub.s32 1, %s8
  %s11 = scalar_select 0, %s10, %s8
  // Predicated region
  $region2: #{encoder_forward.19} parent=0 // pred_check
    _
  $region3: #{encoder_forward.19} parent=0 // pred_check_branch
    %13 = sbr.rel (0) target = $region5
  $region4: #{encoder_forward.19} parent=0 // pred_region
    _
  $region5: #{encoder_forward.19} parent=0 // pred_fallthru
    _
  // Predicated region
  $region6: #{encoder_forward.19} parent=0 // pred_check
    _
  $region7: #{encoder_forward.19} parent=0 // pred_check_branch
    %15 = sbr.rel (0) target = $region9
  $region8: #{encoder_forward.19} parent=0 // pred_region
    _
  $region9: #{encoder_forward.19} parent=0 // pred_fallthru
    _
  // Predicated region
  $region10: #{encoder_forward.19} parent=0 // pred_check
    _
  $region11: #{encoder_forward.19} parent=0 // pred_check_branch
    %17 = sbr.rel (0) target = $region13
  $region12: #{encoder_forward.19} parent=0 // pred_region
    _
  $region13: #{encoder_forward.19} parent=0 // pred_fallthru
    _
  // Predicated region
  $region14: #{encoder_forward.19} parent=0 // pred_check
    _
  $region15: #{encoder_forward.19} parent=0 // pred_check_branch
    %19 = sbr.rel (0) target = $region17
  $region16: #{encoder_forward.19} parent=0 // pred_region
    _
  $region17: #{encoder_forward.19} parent=0 // pred_fallthru
    _
  // Predicated region
  $region18: #{encoder_forward.19} parent=0 // pred_check
    _
  $region19: #{encoder_forward.19} parent=0 // pred_check_branch
    %21 = sbr.rel (0) target = $region21
  $region20: #{encoder_forward.19} parent=0 // pred_region
    _
  $region21: #{encoder_forward.19} parent=0 // pred_fallthru
    _
  %p23 = scmp.eq.s32.totalorder 0, 0
  // Predicated region
  $region22: #{encoder_forward.19} parent=0 // pred_check
    %p24 = pneg %p23
  $region23: #{encoder_forward.19} parent=0 // pred_check_branch
    %26 = sbr.rel (%p24) target = $region25
  $region24: #{encoder_forward.19} parent=0 // pred_region
    %v27 = vld [vmem:[%s0] sm:$0xf]
    %v28 = vld [vmem:[%s0 + $0x4] sm:$0xf]
    %v29 = vunpack.c.l.bf16 %v27
    %v30 = vunpack.c.l.bf16 %v28
    %vm31 = vcmask 261120
    %v32 = vsel %vm31, %v29, 0.0
    %33 = vadd.xlane.f32.xlu0 %v32
    %v34 = vpop.xlane.xlu0 %33
    %v35 = vsel %vm31, %v30, 0.0
    %36 = vadd.xlane.f32.xlu0 %v35
    %v37 = vpop.xlane.xlu0 %36
    %v38 = vrcp.pop 32.0
    %v39 = vmul.f32 %v34, %v38
    %v40 = vmul.f32 %v37, %v38
    %v41 = vsub.f32 %v29, %v39
    %v42 = vsub.f32 %v30, %v40
    %v43 = vmul.f32 %v41, %v41
    %v44 = vmul.f32 %v42, %v42
    %v45 = vsel %vm31, %v43, 0.0
    %46 = vadd.xlane.f32.xlu0 %v45
    %v47 = vpop.xlane.xlu0 %46
    %v48 = vsel %vm31, %v44, 0.0
    %49 = vadd.xlane.f32.xlu0 %v48
    %v50 = vpop.xlane.xlu0 %49
    %v51 = vmul.f32 %v47, %v38
    %v52 = vmul.f32 %v50, %v38
    %v53 = vadd.f32 %v51, 1e-12
    %v54 = vadd.f32 %v52, 1e-12
    %v55 = vrsqrt.pop %v53
    %v56 = vrsqrt.pop %v54
    %v57 = vmul.f32 %v41, %v55
    %v58 = vmul.f32 %v42, %v56
    %v59 = vld [vmem:[%s1] sm:$0x1]
    %v61 = vlaneseq
    %v62 = vshrl.u32 %v61, 7
    %v63 = vsub.s32 0, %v62
    %v64 = vrot.slane %v59, %v63
    %v66 = vmul.f32 %v57, %v64
    %v67 = vmul.f32 %v58, %v64
    %v68 = vld [vmem:[%s2] sm:$0x1]
    %v70 = vlaneseq
    %v71 = vshrl.u32 %v70, 7
    %v72 = vsub.s32 0, %v71
    %v73 = vrot.slane %v68, %v72
    %v75 = vadd.f32 %v66, %v73
    %v76 = vadd.f32 %v67, %v73
    %v77 = vpack.c.bf16 %v76, %v75
    %78 = vst.msk [vmem:[#allocation2] sm:$0xff] %vm31, %v77
  $region25: #{encoder_forward.19} parent=0 // pred_fallthru
    _
  %v79 = vld [vmem:[#allocation2] sm:$0xff]
  %v80 = vld [vmem:[%s3] sm:$0xf]
  %v81 = vld [vmem:[%s3 + $0x4] sm:$0xf]
  %v82 = vld [vmem:[%s3 + $0x8] sm:$0xf]
  %v83 = vld [vmem:[%s3 + $0xc] sm:$0xf]
  %v88 = vunpack.c.l.b16 %v80
  %v89 = vunpack.c.l.b16 %v81
  %v90 = vunpack.c.l.b16 %v82
  %v91 = vunpack.c.l.b16 %v83
  %v92 = vpack.c.b16 %v89, %v88
  %v93 = vpack.c.b16 %v91, %v90
  %vm96 = vcmask 261120
  %v98 = vsel %vm96, %v79, 0
  %100 = vmatprep.subr.bf16.mxu0 0
  %101 = vmatpush1.bf16.msra.mxu0 %v92
  %102 = vmatprep.subr.bf16.mxu0 0
  %103 = vmatpush1.bf16.msra.mxu0 %v93
  %104 = vmatprep.subr.bf16.mxu0 0
  %105 = vmatpush1.bf16.msra.mxu0 0
  %106 = vmatprep.subr.bf16.mxu0 0
  %107 = vmatpush1.bf16.msra.mxu0 0
  %108 = vmatprep.subr.bf16.mxu0 0
  %109 = vmatpush1.bf16.msra.mxu0 0
  %110 = vmatprep.subr.bf16.mxu0 0
  %111 = vmatpush1.bf16.msra.mxu0 0
  %112 = vmatprep.subr.bf16.mxu0 0
  %113 = vmatpush1.bf16.msra.mxu0 0
  %114 = vmatprep.subr.bf16.mxu0 0
  %115 = vmatpush1.bf16.msra.mxu0 0
  %116 = vmatprep.subr.bf16.mxu0 0
  %117 = vmatpush1.bf16.msra.mxu0 0
  %118 = vmatprep.subr.bf16.mxu0 0
  %119 = vmatpush1.bf16.msra.mxu0 0
  %120 = vmatprep.subr.bf16.mxu0 0
  %121 = vmatpush1.bf16.msra.mxu0 0
  %122 = vmatprep.subr.bf16.mxu0 0
  %123 = vmatpush1.bf16.msra.mxu0 0
  %124 = vmatprep.subr.bf16.mxu0 0
  %125 = vmatpush1.bf16.msra.mxu0 0
  %126 = vmatprep.subr.bf16.mxu0 0
  %127 = vmatpush1.bf16.msra.mxu0 0
  %128 = vmatprep.subr.bf16.mxu0 0
  %129 = vmatpush1.bf16.msra.mxu0 0
  %130 = vmatprep.subr.bf16.mxu0 0
  %131 = vmatpush1.bf16.msra.mxu0 0
  %132 = vmatprep.mubr.bf16.mxu0 0
  %133 = vmatmul.mubr.bf16.gmra.mrb[0].mxu0 %v98
  %v134 = vpop.f32.mrb[0].mxu0
  %v135 = vadd.f32 0.0, %v134
  %v136 = vpop.f32.mrb[0].mxu0
  %v137 = vpop.f32.mrb[0].mxu0
  %v138 = vadd.f32 0.0, %v137
  %v139 = vpop.f32.mrb[0].mxu0
  %140 = vdwg.mxu0
  %v141 = vpack.c.bf16 %v138, %v135
  %v143 = vunpack.c.l.b16 %v141
  %v144 = vunpack.c.h.b16 %v141
  %v145 = vpack.c.b16 %v143, %v143
  %v146 = vpack.c.b16 %v144, %v144
  %vm149 = vcmask 519168
  %150 = vst.msk [vmem:[%s5] sm:$0xf] %vm149, %v145
  %151 = vst.msk [vmem:[%s5 + $0x4] sm:$0xf] %vm149, %v146
  %v152 = vld [vmem:[%s4] sm:$0xf]
  %v153 = vld [vmem:[%s4 + $0x4] sm:$0xf]
  %v154 = vld [vmem:[%s4 + $0x8] sm:$0xf]
  %v155 = vld [vmem:[%s4 + $0xc] sm:$0xf]
  %v160 = vunpack.c.l.b16 %v152
  %v161 = vunpack.c.l.b16 %v153
  %v162 = vunpack.c.l.b16 %v154
  %v163 = vunpack.c.l.b16 %v155
  %v164 = vpack.c.b16 %v161, %v160
  %v165 = vpack.c.b16 %v163, %v162
  %168 = vmatprep.subr.bf16.mxu0 0
  %169 = vmatpush1.bf16.msra.mxu0 %v164
  %170 = vmatprep.subr.bf16.mxu0 0
  %171 = vmatpush1.bf16.msra.mxu0 %v165
  %172 = vmatprep.subr.bf16.mxu0 0
  %173 = vmatpush1.bf16.msra.mxu0 0
  %174 = vmatprep.subr.bf16.mxu0 0
  %175 = vmatpush1.bf16.msra.mxu0 0
  %176 = vmatprep.subr.bf16.mxu0 0
  %177 = vmatpush1.bf16.msra.mxu0 0
  %178 = vmatprep.subr.bf16.mxu0 0
  %179 = vmatpush1.bf16.msra.mxu0 0
  %180 = vmatprep.subr.bf16.mxu0 0
  %181 = vmatpush1.bf16.msra.mxu0 0
  %182 = vmatprep.subr.bf16.mxu0 0
  %183 = vmatpush1.bf16.msra.mxu0 0
  %184 = vmatprep.subr.bf16.mxu0 0
  %185 = vmatpush1.bf16.msra.mxu0 0
  %186 = vmatprep.subr.bf16.mxu0 0
  %187 = vmatpush1.bf16.msra.mxu0 0
  %188 = vmatprep.subr.bf16.mxu0 0
  %189 = vmatpush1.bf16.msra.mxu0 0
  %190 = vmatprep.subr.bf16.mxu0 0
  %191 = vmatpush1.bf16.msra.mxu0 0
  %192 = vmatprep.subr.bf16.mxu0 0
  %193 = vmatpush1.bf16.msra.mxu0 0
  %194 = vmatprep.subr.bf16.mxu0 0
  %195 = vmatpush1.bf16.msra.mxu0 0
  %196 = vmatprep.subr.bf16.mxu0 0
  %197 = vmatpush1.bf16.msra.mxu0 0
  %198 = vmatprep.subr.bf16.mxu0 0
  %199 = vmatpush1.bf16.msra.mxu0 0
  %200 = vmatprep.mubr.bf16.mxu0 0
  %201 = vmatmul.mubr.bf16.gmra.mrb[0].mxu0 %v98
  %v202 = vpop.f32.mrb[0].mxu0
  %v203 = vadd.f32 0.0, %v202
  %v204 = vpop.f32.mrb[0].mxu0
  %v205 = vpop.f32.mrb[0].mxu0
  %v206 = vadd.f32 0.0, %v205
  %v207 = vpop.f32.mrb[0].mxu0
  %208 = vdwg.mxu0
  %v209 = vpack.c.bf16 %v206, %v203
  %v211 = vunpack.c.l.b16 %v209
  %v212 = vunpack.c.h.b16 %v209
  %v213 = vpack.c.b16 %v211, %v211
  %v214 = vpack.c.b16 %v212, %v212
  %217 = vst.msk [vmem:[%s6] sm:$0xf] %vm149, %v213
  %218 = vst.msk [vmem:[%s6 + $0x4] sm:$0xf] %vm149, %v214
  // Predicated region
  $region26: #{encoder_forward.19} parent=0 // pred_check
    _
  $region27: #{encoder_forward.19} parent=0 // pred_check_branch
    %220 = sbr.rel (0) target = $region29
  $region28: #{encoder_forward.19} parent=0 // pred_region
    _
  $region29: #{encoder_forward.19} parent=0 // pred_fallthru
    _
  // Predicated region
  $region30: #{encoder_forward.19} parent=0 // pred_check
    _
  $region31: #{encoder_forward.19} parent=0 // pred_check_branch
    %222 = sbr.rel (0) target = $region33
  $region32: #{encoder_forward.19} parent=0 // pred_region
    _
  $region33: #{encoder_forward.19} parent=0 // pred_fallthru
    _
  // Predicated region
  $region34: #{encoder_forward.19} parent=0 // pred_check
    _
  $region35: #{encoder_forward.19} parent=0 // pred_check_branch
    %224 = sbr.rel (0) target = $region37
  $region36: #{encoder_forward.19} parent=0 // pred_region
    _
  $region37: #{encoder_forward.19} parent=0 // pred_fallthru
    _
  // Predicated region
  $region38: #{encoder_forward.19} parent=0 // pred_check
    _
  $region39: #{encoder_forward.19} parent=0 // pred_check_branch
    %226 = sbr.rel (0) target = $region41
  $region40: #{encoder_forward.19} parent=0 // pred_region
    _
  $region41: #{encoder_forward.19} parent=0 // pred_fallthru
    _

// kernel: encoder_forward.21
$region0: #{encoder_forward.21}
  #allocation0 [shape = 'u32[]', space=smem, size = 0x4, offset = 0x4, fixed_abs, tag = 'smem constant byte address 0x4 - core index']
  #allocation1 [shape = 'u32[144,128]{1,0:T(1,128)}', space=vmem, size = 0x12000, scoped, tag = 'internal scratch']
  %s0 = inlined_call_operand.vmem [shape: bf16[16,64], index: 0, kind: input, shape index: {}]
  %s1 = inlined_call_operand.vmem [shape: bf16[64,18], index: 1, kind: input, shape index: {}]
  %s2 = inlined_call_operand.vmem [shape: f32[1,18], index: 2, kind: input, shape index: {}]
  %s3 = inlined_call_operand.vmem [shape: bf16[16,18], index: 3, kind: output, shape index: {}]
  %s4 = sld [smem:[#allocation0]]
  $region22: #{encoder_forward.21} parent=0
    _
  %s6 = ssub.s32 1, %s4
  %s7 = scalar_select 0, %s6, %s4
  // Predicated region
  $region2: #{encoder_forward.21} parent=0 // pred_check
    _
  $region3: #{encoder_forward.21} parent=0 // pred_check_branch
    %9 = sbr.rel (0) target = $region5
  $region4: #{encoder_forward.21} parent=0 // pred_region
    _
  $region5: #{encoder_forward.21} parent=0 // pred_fallthru
    _
  // Predicated region
  $region6: #{encoder_forward.21} parent=0 // pred_check
    _
  $region7: #{encoder_forward.21} parent=0 // pred_check_branch
    %11 = sbr.rel (0) target = $region9
  $region8: #{encoder_forward.21} parent=0 // pred_region
    _
  $region9: #{encoder_forward.21} parent=0 // pred_fallthru
    _
  // Predicated region
  $region10: #{encoder_forward.21} parent=0 // pred_check
    _
  $region11: #{encoder_forward.21} parent=0 // pred_check_branch
    %13 = sbr.rel (0) target = $region13
  $region12: #{encoder_forward.21} parent=0 // pred_region
    _
  $region13: #{encoder_forward.21} parent=0 // pred_fallthru
    _
  %v15 = vld [vmem:[%s0] sm:$0xf]
  %v16 = vld [vmem:[%s0 + $0x4] sm:$0xf]
  %v17 = vld [vmem:[%s1] sm:$0xf]
  %v18 = vld [vmem:[%s1 + $0x4] sm:$0xf]
  %v19 = vld [vmem:[%s1 + $0x8] sm:$0xf]
  %v20 = vld [vmem:[%s1 + $0xc] sm:$0xf]
  %v21 = vld [vmem:[%s1 + $0x10] sm:$0xf]
  %v22 = vld [vmem:[%s1 + $0x14] sm:$0xf]
  %v23 = vld [vmem:[%s1 + $0x18] sm:$0xf]
  %v24 = vld [vmem:[%s1 + $0x1c] sm:$0xf]
  %v25 = vld [vmem:[%s2] sm:$0x1]
  %v27 = vlaneseq
  %v28 = vshrl.u32 %v27, 7
  %v29 = vsub.s32 0, %v28
  %v30 = vrot.slane %v25, %v29
  %v34 = vunpack.c.l.b16 %v15
  %v35 = vunpack.c.l.b16 %v16
  %v36 = vpack.c.b16 %v35, %v34
  %v45 = vunpack.c.l.b16 %v17
  %v46 = vunpack.c.l.b16 %v18
  %v47 = vunpack.c.l.b16 %v19
  %v48 = vunpack.c.l.b16 %v20
  %v49 = vunpack.c.l.b16 %v21
  %v50 = vunpack.c.l.b16 %v22
  %v51 = vunpack.c.l.b16 %v23
  %v52 = vunpack.c.l.b16 %v24
  %v53 = vpack.c.b16 %v46, %v45
  %v54 = vpack.c.b16 %v48, %v47
  %v55 = vpack.c.b16 %v50, %v49
  %v56 = vpack.c.b16 %v52, %v51
  %vm61 = vcmask 523264
  %v63 = vsel %vm61, %v36, 0
  %65 = vmatprep.subr.bf16.mxu0 0
  %66 = vmatpush1.bf16.msra.mxu0 %v53
  %67 = vmatprep.subr.bf16.mxu0 0
  %68 = vmatpush1.bf16.msra.mxu0 %v54
  %69 = vmatprep.subr.bf16.mxu0 0
  %70 = vmatpush1.bf16.msra.mxu0 %v55
  %71 = vmatprep.subr.bf16.mxu0 0
  %72 = vmatpush1.bf16.msra.mxu0 %v56
  %73 = vmatprep.subr.bf16.mxu0 0
  %74 = vmatpush1.bf16.msra.mxu0 0
  %75 = vmatprep.subr.bf16.mxu0 0
  %76 = vmatpush1.bf16.msra.mxu0 0
  %77 = vmatprep.subr.bf16.mxu0 0
  %78 = vmatpush1.bf16.msra.mxu0 0
  %79 = vmatprep.subr.bf16.mxu0 0
  %80 = vmatpush1.bf16.msra.mxu0 0
  %81 = vmatprep.subr.bf16.mxu0 0
  %82 = vmatpush1.bf16.msra.mxu0 0
  %83 = vmatprep.subr.bf16.mxu0 0
  %84 = vmatpush1.bf16.msra.mxu0 0
  %85 = vmatprep.subr.bf16.mxu0 0
  %86 = vmatpush1.bf16.msra.mxu0 0
  %87 = vmatprep.subr.bf16.mxu0 0
  %88 = vmatpush1.bf16.msra.mxu0 0
  %89 = vmatprep.subr.bf16.mxu0 0
  %90 = vmatpush1.bf16.msra.mxu0 0
  %91 = vmatprep.subr.bf16.mxu0 0
  %92 = vmatpush1.bf16.msra.mxu0 0
  %93 = vmatprep.subr.bf16.mxu0 0
  %94 = vmatpush1.bf16.msra.mxu0 0
  %95 = vmatprep.subr.bf16.mxu0 0
  %96 = vmatpush1.bf16.msra.mxu0 0
  %97 = vmatprep.mubr.bf16.mxu0 0
  %98 = vmatmul.mubr.bf16.gmra.mrb[0].mxu0 %v63
  %v99 = vpop.f32.mrb[0].mxu0
  %v100 = vadd.f32 %v30, %v99
  %v101 = vpop.f32.mrb[0].mxu0
  %v102 = vpop.f32.mrb[0].mxu0
  %v103 = vadd.f32 %v30, %v102
  %v104 = vpop.f32.mrb[0].mxu0
  %105 = vdwg.mxu0
  %v106 = vpack.c.bf16 %v103, %v100
  %v108 = vunpack.c.l.b16 %v106
  %v109 = vunpack.c.h.b16 %v106
  %v110 = vpack.c.b16 %v108, %v108
  %v111 = vpack.c.b16 %v109, %v109
  %vm114 = vcmask 142336
  %115 = vst.msk [vmem:[%s3] sm:$0xf] %vm114, %v110
  %116 = vst.msk [vmem:[%s3 + $0x4] sm:$0xf] %vm114, %v111
  // Predicated region
  $region14: #{encoder_forward.21} parent=0 // pred_check
    _
  $region15: #{encoder_forward.21} parent=0 // pred_check_branch
    %118 = sbr.rel (0) target = $region17
  $region16: #{encoder_forward.21} parent=0 // pred_region
    _
  $region17: #{encoder_forward.21} parent=0 // pred_fallthru
    _
  // Predicated region
  $region18: #{encoder_forward.21} parent=0 // pred_check
    _
  $region19: #{encoder_forward.21} parent=0 // pred_check_branch
    %120 = sbr.rel (0) target = $region21
  $region20: #{encoder_forward.21} parent=0 // pred_region
    _
  $region21: #{encoder_forward.21} parent=0 // pred_fallthru
    _

// kernel: encoder_forward.20
$region0: #{encoder_forward.20}
  #allocation0 [shape = 'u32[]', space=smem, size = 0x4, offset = 0x4, fixed_abs, tag = 'smem constant byte address 0x4 - core index']
  #allocation1 [shape = 'u32[144,128]{1,0:T(1,128)}', space=vmem, size = 0x12000, scoped, tag = 'internal scratch']
  #allocation2 [shape = 'f32[3,64]{1,0:T(4,128)}', space=vmem, size = 0x800, scoped, tag = 'scratch operand']
  %s0 = inlined_call_operand.vmem [shape: bf16[2,8,64], index: 0, kind: input, shape index: {}]
  %s1 = inlined_call_operand.vmem [shape: f32[4,64], index: 1, kind: input, shape index: {}]
  %s2 = inlined_call_operand.vmem [shape: f32[1,64], index: 2, kind: input, shape index: {}]
  %s3 = inlined_call_operand.vmem [shape: bf16[2,8,64], index: 3, kind: output, shape index: {}]
  %s4 = sld [smem:[#allocation0]]
  $region49: #{encoder_forward.20} parent=0
    _
  %s6 = ssub.s32 1, %s4
  %s7 = scalar_select 0, %s6, %s4
  loop: start=0, step=1, limit=4
  $region2: #{encoder_forward.20} parent=0 // loop_pre_header
    _
  $region3: #{encoder_forward.20} parent=0 // loop_header
    %s9 = sphi 0, %s13
    %p10 = scmp.ge.s32.totalorder %s9, 4
    %s16 = sphi 0, %s35
    %s17 = sphi 0, %s31
    %s18 = sphi 0, %s27
    %s19 = sphi 0, %s16
    %s20 = sphi 0, %s17
    %s21 = sphi 0, %s18
    %s22 = sphi 0, %s19
    %s23 = sphi 0, %s20
    %s24 = sphi 0, %s21
    %s42 = sphi 0, %s44
    %s45 = sphi 0, %s42
    %s46 = sphi 0, %s45
    %s62 = sphi 0, %s46
    %s68 = sphi 0, %s70
    %s71 = sphi 0, %s68
    %s72 = sphi 0, %s71
    %s88 = sphi 0, %s72
    %s94 = sphi 0, %s96
    %s97 = sphi 0, %s94
    %s98 = sphi 0, %s97
    %s114 = sphi 0, %s98
    %s124 = sphi 0, %s126
    %s127 = sphi 0, %s124
    %s128 = sphi 0, %s127
    %s144 = sphi 0, %s128
  $region4: #{encoder_forward.20} parent=0 // loop_header_branch
    %12 = sbr.rel (%p10) target = $region8
  $region5: #{encoder_forward.20} parent=0 // loop_body
    %s14 = ssub.s32 %s9, 1
    %s15 = ssub.s32 %s9, 2
    %s25 = sadd.s32 1, %s18
    %p26 = scmp.ge.s32.totalorder %s25, 1
    %s27 = scalar_select %p26, 0, %s25
    %s28 = sadd.s32 1, %s17
    %s29 = scalar_select %p26, %s28, %s17
    %p30 = scmp.ge.s32.totalorder %s29, 1
    %s31 = scalar_select %p30, 0, %s29
    %s32 = sadd.s32 1, %s16
    %s33 = scalar_select %p30, %s32, %s16
    %p34 = scmp.ge.s32.totalorder %s33, 2
    %s35 = scalar_select %p34, 0, %s33
    %s36 = ssub.s32 %s16, %s35
    %s37 = ssub.s32 %s18, %s27
    %s38 = sor.u32 %s36, %s37
    %s39 = ssub.s32 %s17, %s31
    %s40 = sor.u32 %s38, %s39
    %p41 = scmp.eq.s32.totalorder %s40, 0
    %s43 = sadd.s32 %s42, 1
    %s44 = scalar_select %p41, %s42, %s43
    %p47 = pneg %p41
    %p48 = scmp.eq.s32.totalorder %s9, 1
    %p49 = por %p47, %p48
    %p50 = scmp.ne.s32.totalorder %s42, %s45
    %p51 = scmp.eq.s32.totalorder %s9, 0
    %p52 = por %p50, %p51
    %p53 = scmp.ne.s32.totalorder %s42, %s45
    %p54 = scmp.eq.s32.totalorder %s14, 1
    %p55 = por %p53, %p54
    %p56 = scmp.ne.s32.totalorder %s45, %s46
    %p57 = scmp.eq.s32.totalorder %s14, 0
    %p58 = por %p56, %p57
    %p59 = scmp.ne.s32.totalorder %s45, %s46
    %p60 = scmp.eq.s32.totalorder %s15, 1
    %p61 = por %p59, %p60
    %p63 = scmp.ne.s32.totalorder %s46, %s62
    %p64 = scmp.eq.s32.totalorder %s15, 0
    %p65 = por %p63, %p64
    %s66 = ssub.s32 %s17, %s31
    %p67 = scmp.eq.s32.totalorder %s66, 0
    %s69 = sadd.s32 %s68, 1
    %s70 = scalar_select %p67, %s68, %s69
    %p73 = pneg %p67
    %p74 = scmp.eq.s32.totalorder %s9, 1
    %p75 = por %p73, %p74
    %p76 = scmp.ne.s32.totalorder %s68, %s71
    %p77 = scmp.eq.s32.totalorder %s9, 0
    %p78 = por %p76, %p77
    %p79 = scmp.ne.s32.totalorder %s68, %s71
    %p80 = scmp.eq.s32.totalorder %s14, 1
    %p81 = por %p79, %p80
    %p82 = scmp.ne.s32.totalorder %s71, %s72
    %p83 = scmp.eq.s32.totalorder %s14, 0
    %p84 = por %p82, %p83
    %p85 = scmp.ne.s32.totalorder %s71, %s72
    %p86 = scmp.eq.s32.totalorder %s15, 1
    %p87 = por %p85, %p86
    %p89 = scmp.ne.s32.totalorder %s72, %s88
    %p90 = scmp.eq.s32.totalorder %s15, 0
    %p91 = por %p89, %p90
    %s92 = ssub.s32 %s17, %s31
    %p93 = scmp.eq.s32.totalorder %s92, 0
    %s95 = sadd.s32 %s94, 1
    %s96 = scalar_select %p93, %s94, %s95
    %p99 = pneg %p93
    %p100 = scmp.eq.s32.totalorder %s9, 1
    %p101 = por %p99, %p100
    %p102 = scmp.ne.s32.totalorder %s94, %s97
    %p103 = scmp.eq.s32.totalorder %s9, 0
    %p104 = por %p102, %p103
    %p105 = scmp.ne.s32.totalorder %s94, %s97
    %p106 = scmp.eq.s32.totalorder %s14, 1
    %p107 = por %p105, %p106
    %p108 = scmp.ne.s32.totalorder %s97, %s98
    %p109 = scmp.eq.s32.totalorder %s14, 0
    %p110 = por %p108, %p109
    %p111 = scmp.ne.s32.totalorder %s97, %s98
    %p112 = scmp.eq.s32.totalorder %s15, 1
    %p113 = por %p111, %p112
    %p115 = scmp.ne.s32.totalorder %s98, %s114
    %p116 = scmp.eq.s32.totalorder %s15, 0
    %p117 = por %p115, %p116
    %s118 = ssub.s32 %s16, %s35
    %s119 = ssub.s32 %s18, %s27
    %s120 = sor.u32 %s118, %s119
    %s121 = ssub.s32 %s17, %s31
    %s122 = sor.u32 %s120, %s121
    %p123 = scmp.eq.s32.totalorder %s122, 0
    %s125 = sadd.s32 %s124, 1
    %s126 = scalar_select %p123, %s124, %s125
    %p129 = pneg %p123
    %p130 = scmp.eq.s32.totalorder %s9, 1
    %p131 = por %p129, %p130
    %p132 = scmp.ne.s32.totalorder %s124, %s127
    %p133 = scmp.eq.s32.totalorder %s9, 0
    %p134 = por %p132, %p133
    %p135 = scmp.ne.s32.totalorder %s124, %s127
    %p136 = scmp.eq.s32.totalorder %s14, 1
    %p137 = por %p135, %p136
    %p138 = scmp.ne.s32.totalorder %s127, %s128
    %p139 = scmp.eq.s32.totalorder %s14, 0
    %p140 = por %p138, %p139
    %p141 = scmp.ne.s32.totalorder %s127, %s128
    %p142 = scmp.eq.s32.totalorder %s15, 1
    %p143 = por %p141, %p142
    %p145 = scmp.ne.s32.totalorder %s128, %s144
    %p146 = scmp.eq.s32.totalorder %s15, 0
    %p147 = por %p145, %p146
    %p148 = scmp.le.s32.totalorder 1, %s9
    %p149 = scmp.lt.s32.totalorder %s9, 3
    %p150 = pnand %p148, %p149
    %p151 = pneg %p150
    // Predicated region
    $region9: #{encoder_forward.20} parent=5 // pred_check
      _
    $region10: #{encoder_forward.20} parent=5 // pred_check_branch
      %153 = sbr.rel (%p150) target = $region12
    $region11: #{encoder_forward.20} parent=5 // pred_region
      %s154 = ssub.s32 %s9, 1
      // Predicated region
      $region13: #{encoder_forward.20} parent=11 // pred_check
        %p155 = pneg %p84
      $region14: #{encoder_forward.20} parent=11 // pred_check_branch
        %157 = sbr.rel (%p155) target = $region16
      $region15: #{encoder_forward.20} parent=11 // pred_region
        %p158 = scmp.lt.s32.totalorder %s20, 0
        %s159 = scalar_select %p158, %s20, 0
        %s160 = smul.addr %s159, 4
        %s161 = scalar_lea.vmem %s1, %s160
      $region16: #{encoder_forward.20} parent=11 // pred_fallthru
        _
      // Predicated region
      $region17: #{encoder_forward.20} parent=11 // pred_check
        %p162 = pneg %p110
      $region18: #{encoder_forward.20} parent=11 // pred_check_branch
        %164 = sbr.rel (%p162) target = $region20
      $region19: #{encoder_forward.20} parent=11 // pred_region
        %p165 = scmp.lt.s32.totalorder %s20, 0
        %s166 = scalar_select %p165, %s20, 0
        %s167 = scalar_lea.vmem %s2, %s166
      $region20: #{encoder_forward.20} parent=11 // pred_fallthru
        _
    $region12: #{encoder_forward.20} parent=5 // pred_fallthru
      _
    %p168 = scmp.lt.s32.totalorder %s9, 2
    // Predicated region
    $region21: #{encoder_forward.20} parent=5 // pred_check
      %p169 = pneg %p168
    $region22: #{encoder_forward.20} parent=5 // pred_check_branch
      %171 = sbr.rel (%p169) target = $region24
    $region23: #{encoder_forward.20} parent=5 // pred_region
      // Predicated region
      $region25: #{encoder_forward.20} parent=23 // pred_check
        %p172 = pneg %p52
      $region26: #{encoder_forward.20} parent=23 // pred_check_branch
        %174 = sbr.rel (%p172) target = $region28
      $region27: #{encoder_forward.20} parent=23 // pred_region
        %p175 = scmp.lt.s32.totalorder %s16, 1
        %s176 = scalar_select %p175, %s16, 1
        %p177 = scmp.lt.s32.totalorder %s18, 0
        %s178 = scalar_select %p177, %s18, 0
        %p179 = scmp.lt.s32.totalorder %s17, 0
        %s180 = scalar_select %p179, %s17, 0
        %s181 = sadd.s32 %s180, %s178
        %s182 = sadd.s32 %s181, %s176
        %s183 = smul.addr %s182, 4
        %s184 = scalar_lea.vmem %s0, %s183
      $region28: #{encoder_forward.20} parent=23 // pred_fallthru
        _
    $region24: #{encoder_forward.20} parent=5 // pred_fallthru
      _
    %p185 = scmp.le.s32.totalorder 1, %s9
    %p186 = scmp.lt.s32.totalorder %s9, 3
    %p187 = pnand %p185, %p186
    %p188 = pneg %p187
    // Predicated region
    $region29: #{encoder_forward.20} parent=5 // pred_check
      _
    $region30: #{encoder_forward.20} parent=5 // pred_check_branch
      %190 = sbr.rel (%p187) target = $region32
    $region31: #{encoder_forward.20} parent=5 // pred_region
      %s191 = ssub.s32 %s9, 1
      %p192 = scmp.lt.s32.totalorder %s19, 1
      %s193 = scalar_select %p192, %s19, 1
      %p194 = scmp.lt.s32.totalorder %s21, 0
      %s195 = scalar_select %p194, %s21, 0
      %p196 = scmp.lt.s32.totalorder %s20, 0
      %s197 = scalar_select %p196, %s20, 0
      %s198 = sadd.s32 %s197, %s195
      %s199 = sadd.s32 %s198, %s193
      %s200 = smul.addr %s199, 4
      %s201 = scalar_lea.vmem %s0, %s200
      %p202 = pneg %p58
      %p203 = pneg %p55
      %p204 = scmp.lt.s32.totalorder %s20, 0
      %s205 = scalar_select %p204, %s20, 0
      %s206 = smul.addr %s205, 4
      %s207 = scalar_lea.vmem %s1, %s206
      %p208 = pneg %p84
      %p209 = pneg %p81
      %p210 = scmp.lt.s32.totalorder %s20, 0
      %s211 = scalar_select %p210, %s20, 0
      %s212 = scalar_lea.vmem %s2, %s211
      %p213 = pneg %p110
      %p214 = pneg %p107
      %p215 = pneg %p140
      %p216 = pneg %p137
      %p217 = scmp.lt.s32.totalorder %s19, 1
      %s218 = scalar_select %p217, %s19, 1
      %p219 = scmp.lt.s32.totalorder %s21, 0
      %s220 = scalar_select %p219, %s21, 0
      %p221 = scmp.lt.s32.totalorder %s20, 0
      %s222 = scalar_select %p221, %s20, 0
      %s223 = sadd.s32 %s222, %s220
      %s224 = sadd.s32 %s223, %s218
      %s225 = smul.addr %s224, 4
      %s226 = scalar_lea.vmem %s3, %s225
      %p227 = scmp.lt.s32.totalorder %s19, 1
      %s228 = scalar_select %p227, %s19, 1
      %p229 = scmp.lt.s32.totalorder %s21, 0
      %s230 = scalar_select %p229, %s21, 0
      %p231 = scmp.lt.s32.totalorder %s20, 0
      %s232 = scalar_select %p231, %s20, 0
      %s233 = sadd.s32 %s232, %s230
      %s234 = sadd.s32 %s233, %s228
      %s235 = smul.addr %s234, 4
      %s236 = scalar_lea.vmem %s0, %s235
      %p237 = scmp.lt.s32.totalorder %s20, 0
      %s238 = scalar_select %p237, %s20, 0
      %s239 = smul.addr %s238, 4
      %s240 = scalar_lea.vmem %s1, %s239
      %p241 = scmp.lt.s32.totalorder %s20, 0
      %s242 = scalar_select %p241, %s20, 0
      %s243 = scalar_lea.vmem %s2, %s242
      %p244 = scmp.lt.s32.totalorder %s19, 1
      %s245 = scalar_select %p244, %s19, 1
      %p246 = scmp.lt.s32.totalorder %s21, 0
      %s247 = scalar_select %p246, %s21, 0
      %p248 = scmp.lt.s32.totalorder %s20, 0
      %s249 = scalar_select %p248, %s20, 0
      %s250 = sadd.s32 %s249, %s247
      %s251 = sadd.s32 %s250, %s245
      %s252 = smul.addr %s251, 4
      %s253 = scalar_lea.vmem %s3, %s252
      %p254 = scmp.eq.s32.totalorder %s21, 0
      // Predicated region
      $region33: #{encoder_forward.20} parent=31 // pred_check
        %p255 = pneg %p254
      $region34: #{encoder_forward.20} parent=31 // pred_check_branch
        %257 = sbr.rel (%p255) target = $region36
      $region35: #{encoder_forward.20} parent=31 // pred_region
        %vm258 = vcmask 518144
        %259 = vst.msk [vmem:[#allocation2] sm:$0x7] %vm258, 0.0
      $region36: #{encoder_forward.20} parent=31 // pred_fallthru
        _
      %v260 = vld [vmem:[%s236] sm:$0xf]
      %v261 = vunpack.c.l.bf16 %v260
      %v262 = vld [vmem:[#allocation2] sm:$0x7]
      %v264 = vrot.slane %v261, 5
      %vm266 = vcmask 1042432
      %v267 = vsel %vm266, %v262, %v264
      %v268 = vld [vmem:[%s243] sm:$0x1]
      %v270 = vlaneseq
      %v271 = vshrl.u32 %v270, 7
      %v272 = vsub.s32 0, %v271
      %v273 = vrot.slane %v268, %v272
      %v275 = vadd.f32 %v273, 0.0
      %v276 = vld [vmem:[%s240] sm:$0x1]
      %v277 = vlaneseq
      %v278 = vshrl.u32 %v277, 7
      %v279 = vsub.s32 0, %v278
      %v280 = vrot.slane %v276, %v279
      %v281 = vmul.f32 %v267, %v280
      %v282 = vadd.f32 %v275, %v281
      %v283 = vld [vmem:[%s240 + $0x1] sm:$0x1]
      %v284 = vlaneseq
      %v285 = vshrl.u32 %v284, 7
      %v286 = vsub.s32 0, %v285
      %v287 = vrot.slane %v283, %v286
      %v288 = vmul.f32 %v267, %v287
      %v289 = vmul.f32 %v264, %v287
      %vm292 = vcmask 1046528
      %v293 = vrot.slane %v288, 1
      %v294 = vrot.slane %v289, 1
      %v295 = vsel %vm292, %v293, %v294
      %v297 = vadd.f32 %v282, %v295
      %v298 = vld [vmem:[%s240 + $0x2] sm:$0x1]
      %v299 = vlaneseq
      %v300 = vshrl.u32 %v299, 7
      %v301 = vsub.s32 0, %v300
      %v302 = vrot.slane %v298, %v301
      %v303 = vmul.f32 %v267, %v302
      %v304 = vmul.f32 %v264, %v302
      %vm307 = vcmask 1045504
      %v308 = vrot.slane %v303, 2
      %v309 = vrot.slane %v304, 2
      %v310 = vsel %vm307, %v308, %v309
      %v312 = vadd.f32 %v297, %v310
      %v313 = vld [vmem:[%s240 + $0x3] sm:$0x1]
      %v314 = vlaneseq
      %v315 = vshrl.u32 %v314, 7
      %v316 = vsub.s32 0, %v315
      %v317 = vrot.slane %v313, %v316
      %v318 = vmul.f32 %v267, %v317
      %v319 = vmul.f32 %v264, %v317
      %vm322 = vcmask 1044480
      %v323 = vrot.slane %v318, 3
      %v324 = vrot.slane %v319, 3
      %v325 = vsel %vm322, %v323, %v324
      %v327 = vadd.f32 %v312, %v325
      %vm328 = vcmask 523269
      %329 = vst.msk [vmem:[#allocation2 - $0x5] sm:$0xe0] %vm328, %v261
      %v330 = vxor.u32 %v327, 2147483648
      %v331 = vmul.f32 %v330, 1.442695
      %v332 = vpow.pop %v331
      %v333 = vadd.f32 %v332, 1.0
      %v334 = vrcp.pop %v333
      %v335 = vmul.f32 1.0, %v334
      %v336 = vmul.f32 %v327, %v335
      %v337 = vpack.c.bf16 %v336, %v336
      %vm338 = vcmask 519168
      %339 = vst.msk [vmem:[%s253] sm:$0xf] %vm338, %v337
      %p340 = scmp.lt.s32.totalorder %s19, 1
      %s341 = scalar_select %p340, %s19, 1
      %p342 = scmp.lt.s32.totalorder %s21, 0
      %s343 = scalar_select %p342, %s21, 0
      %p344 = scmp.lt.s32.totalorder %s20, 0
      %s345 = scalar_select %p344, %s20, 0
      %s346 = sadd.s32 %s345, %s343
      %s347 = sadd.s32 %s346, %s341
      %s348 = smul.addr %s347, 4
      %s349 = scalar_lea.vmem %s3, %s348
      // Predicated region
      $region37: #{encoder_forward.20} parent=31 // pred_check
        %p350 = pneg %p137
      $region38: #{encoder_forward.20} parent=31 // pred_check_branch
        %352 = sbr.rel (%p350) target = $region40
      $region39: #{encoder_forward.20} parent=31 // pred_region
        _
      $region40: #{encoder_forward.20} parent=31 // pred_fallthru
        _
    $region32: #{encoder_forward.20} parent=5 // pred_fallthru
      _
    %p353 = scmp.le.s32.totalorder 2, %s9
    // Predicated region
    $region41: #{encoder_forward.20} parent=5 // pred_check
      %p354 = pneg %p353
    $region42: #{encoder_forward.20} parent=5 // pred_check_branch
      %356 = sbr.rel (%p354) target = $region44
    $region43: #{encoder_forward.20} parent=5 // pred_region
      %s357 = ssub.s32 %s9, 2
      // Predicated region
      $region45: #{encoder_forward.20} parent=43 // pred_check
        %p358 = pneg %p143
      $region46: #{encoder_forward.20} parent=43 // pred_check_branch
        %360 = sbr.rel (%p358) target = $region48
      $region47: #{encoder_forward.20} parent=43 // pred_region
        %p361 = scmp.lt.s32.totalorder %s22, 1
        %s362 = scalar_select %p361, %s22, 1
        %p363 = scmp.lt.s32.totalorder %s24, 0
        %s364 = scalar_select %p363, %s24, 0
        %p365 = scmp.lt.s32.totalorder %s23, 0
        %s366 = scalar_select %p365, %s23, 0
        %s367 = sadd.s32 %s366, %s364
        %s368 = sadd.s32 %s367, %s362
        %s369 = smul.addr %s368, 4
        %s370 = scalar_lea.vmem %s3, %s369
      $region48: #{encoder_forward.20} parent=43 // pred_fallthru
        _
    $region44: #{encoder_forward.20} parent=5 // pred_fallthru
      _
  $region6: #{encoder_forward.20} parent=0 // loop_footer
    %s13 = sadd.s32 1, %s9
  $region7: #{encoder_forward.20} parent=0 // loop_footer_branch
    %8 = sbr.rel target = $region3
  $region8: #{encoder_forward.20} parent=0 // loop_exit
    _

// kernel: encoder_forward.23
$region0: #{encoder_forward.23}
  #allocation0 [shape = 'u32[]', space=smem, size = 0x4, offset = 0x4, fixed_abs, tag = 'smem constant byte address 0x4 - core index']
  #allocation1 [shape = 'u32[144,128]{1,0:T(1,128)}', space=vmem, size = 0x12000, scoped, tag = 'internal scratch']
  %s0 = inlined_call_operand.vmem [shape: bf16[16,64], index: 0, kind: input, shape index: {}]
  %s1 = inlined_call_operand.vmem [shape: bf16[64,32], index: 1, kind: input, shape index: {}]
  %s2 = inlined_call_operand.vmem [shape: f32[1,32], index: 2, kind: input, shape index: {}]
  %s3 = inlined_call_operand.vmem [shape: bf16[16,32], index: 3, kind: input, shape index: {}]
  %s4 = inlined_call_operand.vmem [shape: bf16[16,32], index: 4, kind: output, shape index: {}]
  %s5 = sld [smem:[#allocation0]]
  $region26: #{encoder_forward.23} parent=0
    _
  %s7 = ssub.s32 1, %s5
  %s8 = scalar_select 0, %s7, %s5
  // Predicated region
  $region2: #{encoder_forward.23} parent=0 // pred_check
    _
  $region3: #{encoder_forward.23} parent=0 // pred_check_branch
    %10 = sbr.rel (0) target = $region5
  $region4: #{encoder_forward.23} parent=0 // pred_region
    _
  $region5: #{encoder_forward.23} parent=0 // pred_fallthru
    _
  // Predicated region
  $region6: #{encoder_forward.23} parent=0 // pred_check
    _
  $region7: #{encoder_forward.23} parent=0 // pred_check_branch
    %12 = sbr.rel (0) target = $region9
  $region8: #{encoder_forward.23} parent=0 // pred_region
    _
  $region9: #{encoder_forward.23} parent=0 // pred_fallthru
    _
  // Predicated region
  $region10: #{encoder_forward.23} parent=0 // pred_check
    _
  $region11: #{encoder_forward.23} parent=0 // pred_check_branch
    %14 = sbr.rel (0) target = $region13
  $region12: #{encoder_forward.23} parent=0 // pred_region
    _
  $region13: #{encoder_forward.23} parent=0 // pred_fallthru
    _
  // Predicated region
  $region14: #{encoder_forward.23} parent=0 // pred_check
    _
  $region15: #{encoder_forward.23} parent=0 // pred_check_branch
    %16 = sbr.rel (0) target = $region17
  $region16: #{encoder_forward.23} parent=0 // pred_region
    _
  $region17: #{encoder_forward.23} parent=0 // pred_fallthru
    _
  %v18 = vld [vmem:[%s0] sm:$0xf]
  %v19 = vld [vmem:[%s0 + $0x4] sm:$0xf]
  %v20 = vld [vmem:[%s1] sm:$0xf]
  %v21 = vld [vmem:[%s1 + $0x4] sm:$0xf]
  %v22 = vld [vmem:[%s1 + $0x8] sm:$0xf]
  %v23 = vld [vmem:[%s1 + $0xc] sm:$0xf]
  %v24 = vld [vmem:[%s1 + $0x10] sm:$0xf]
  %v25 = vld [vmem:[%s1 + $0x14] sm:$0xf]
  %v26 = vld [vmem:[%s1 + $0x18] sm:$0xf]
  %v27 = vld [vmem:[%s1 + $0x1c] sm:$0xf]
  %v28 = vld [vmem:[%s2] sm:$0x1]
  %v30 = vlaneseq
  %v31 = vshrl.u32 %v30, 7
  %v32 = vsub.s32 0, %v31
  %v33 = vrot.slane %v28, %v32
  %v37 = vunpack.c.l.b16 %v18
  %v38 = vunpack.c.l.b16 %v19
  %v39 = vpack.c.b16 %v38, %v37
  %v48 = vunpack.c.l.b16 %v20
  %v49 = vunpack.c.l.b16 %v21
  %v50 = vunpack.c.l.b16 %v22
  %v51 = vunpack.c.l.b16 %v23
  %v52 = vunpack.c.l.b16 %v24
  %v53 = vunpack.c.l.b16 %v25
  %v54 = vunpack.c.l.b16 %v26
  %v55 = vunpack.c.l.b16 %v27
  %v56 = vpack.c.b16 %v49, %v48
  %v57 = vpack.c.b16 %v51, %v50
  %v58 = vpack.c.b16 %v53, %v52
  %v59 = vpack.c.b16 %v55, %v54
  %vm64 = vcmask 523264
  %v66 = vsel %vm64, %v39, 0
  %68 = vmatprep.subr.bf16.mxu0 0
  %69 = vmatpush1.bf16.msra.mxu0 %v56
  %70 = vmatprep.subr.bf16.mxu0 0
  %71 = vmatpush1.bf16.msra.mxu0 %v57
  %72 = vmatprep.subr.bf16.mxu0 0
  %73 = vmatpush1.bf16.msra.mxu0 %v58
  %74 = vmatprep.subr.bf16.mxu0 0
  %75 = vmatpush1.bf16.msra.mxu0 %v59
  %76 = vmatprep.subr.bf16.mxu0 0
  %77 = vmatpush1.bf16.msra.mxu0 0
  %78 = vmatprep.subr.bf16.mxu0 0
  %79 = vmatpush1.bf16.msra.mxu0 0
  %80 = vmatprep.subr.bf16.mxu0 0
  %81 = vmatpush1.bf16.msra.mxu0 0
  %82 = vmatprep.subr.bf16.mxu0 0
  %83 = vmatpush1.bf16.msra.mxu0 0
  %84 = vmatprep.subr.bf16.mxu0 0
  %85 = vmatpush1.bf16.msra.mxu0 0
  %86 = vmatprep.subr.bf16.mxu0 0
  %87 = vmatpush1.bf16.msra.mxu0 0
  %88 = vmatprep.subr.bf16.mxu0 0
  %89 = vmatpush1.bf16.msra.mxu0 0
  %90 = vmatprep.subr.bf16.mxu0 0
  %91 = vmatpush1.bf16.msra.mxu0 0
  %92 = vmatprep.subr.bf16.mxu0 0
  %93 = vmatpush1.bf16.msra.mxu0 0
  %94 = vmatprep.subr.bf16.mxu0 0
  %95 = vmatpush1.bf16.msra.mxu0 0
  %96 = vmatprep.subr.bf16.mxu0 0
  %97 = vmatpush1.bf16.msra.mxu0 0
  %98 = vmatprep.subr.bf16.mxu0 0
  %99 = vmatpush1.bf16.msra.mxu0 0
  %100 = vmatprep.mubr.bf16.mxu0 0
  %101 = vmatmul.mubr.bf16.gmra.mrb[0].mxu0 %v66
  %v102 = vpop.f32.mrb[0].mxu0
  %v103 = vadd.f32 %v33, %v102
  %v104 = vpop.f32.mrb[0].mxu0
  %v105 = vpop.f32.mrb[0].mxu0
  %v106 = vadd.f32 %v33, %v105
  %v107 = vpop.f32.mrb[0].mxu0
  %108 = vdwg.mxu0
  %v109 = vld [vmem:[%s3] sm:$0xf]
  %v110 = vld [vmem:[%s3 + $0x4] sm:$0xf]
  %v111 = vunpack.c.l.bf16 %v109
  %v112 = vunpack.c.l.bf16 %v110
  %v113 = vadd.f32 %v103, %v111
  %v114 = vadd.f32 %v106, %v112
  %v115 = vpack.c.bf16 %v114, %v113
  %v117 = vunpack.c.l.b16 %v115
  %v118 = vunpack.c.h.b16 %v115
  %v119 = vpack.c.b16 %v117, %v117
  %v120 = vpack.c.b16 %v118, %v118
  %vm123 = vcmask 257024
  %124 = vst.msk [vmem:[%s4] sm:$0xf] %vm123, %v119
  %125 = vst.msk [vmem:[%s4 + $0x4] sm:$0xf] %vm123, %v120
  // Predicated region
  $region18: #{encoder_forward.23} parent=0 // pred_check
    _
  $region19: #{encoder_forward.23} parent=0 // pred_check_branch
    %127 = sbr.rel (0) target = $region21
  $region20: #{encoder_forward.23} parent=0 // pred_region
    _
  $region21: #{encoder_forward.23} parent=0 // pred_fallthru
    _
  // Predicated region
  $region22: #{encoder_forward.23} parent=0 // pred_check
    _
  $region23: #{encoder_forward.23} parent=0 // pred_check_branch
    %129 = sbr.rel (0) target = $region25
  $region24: #{encoder_forward.23} parent=0 // pred_region
    _
  $region25: #{encoder_forward.23} parent=0 // pred_fallthru
    _

// kernel: encoder_forward.24
$region0: #{encoder_forward.24}
  #allocation0 [shape = 'u32[]', space=smem, size = 0x4, offset = 0x4, fixed_abs, tag = 'smem constant byte address 0x4 - core index']
  #allocation1 [shape = 'u32[144,128]{1,0:T(1,128)}', space=vmem, size = 0x12000, scoped, tag = 'internal scratch']
  #allocation2 [shape = 'bf16[16,32]{1,0:T(16,128)(2,1)}', space=vmem, size = 0x1000, scoped, tag = 'scratch operand']
  #allocation3 [shape = 'f32[16,32]{1,0:T(8,128)}', space=vmem, size = 0x2000, scoped, tag = 'scratch operand']
  %s0 = inlined_call_operand.vmem [shape: bf16[16,32], index: 0, kind: input, shape index: {}]
  %s1 = inlined_call_operand.vmem [shape: f32[1,32], index: 1, kind: input, shape index: {}]
  %s2 = inlined_call_operand.vmem [shape: f32[1,32], index: 2, kind: input, shape index: {}, may-alias: {2,6}]
  %s3 = inlined_call_operand.vmem [shape: bf16[32,64], index: 3, kind: input, shape index: {}]
  %s4 = inlined_call_operand.vmem [shape: f32[1,64], index: 4, kind: input, shape index: {}]
  %s5 = inlined_call_operand.vmem [shape: bf16[64,32], index: 5, kind: input, shape index: {}]
  %s6 = inlined_call_operand.vmem [shape: f32[1,32], index: 6, kind: input, shape index: {}, may-alias: {2,6}]
  %s7 = inlined_call_operand.vmem [shape: bf16[16,32], index: 7, kind: output, shape index: {}]
  %s8 = sld [smem:[#allocation0]]
  $region46: #{encoder_forward.24} parent=0
    _
  %s10 = ssub.s32 1, %s8
  %s11 = scalar_select 0, %s10, %s8
  // Predicated region
  $region2: #{encoder_forward.24} parent=0 // pred_check
    _
  $region3: #{encoder_forward.24} parent=0 // pred_check_branch
    %13 = sbr.rel (0) target = $region5
  $region4: #{encoder_forward.24} parent=0 // pred_region
    _
  $region5: #{encoder_forward.24} parent=0 // pred_fallthru
    _
  // Predicated region
  $region6: #{encoder_forward.24} parent=0 // pred_check
    _
  $region7: #{encoder_forward.24} parent=0 // pred_check_branch
    %15 = sbr.rel (0) target = $region9
  $region8: #{encoder_forward.24} parent=0 // pred_region
    _
  $region9: #{encoder_forward.24} parent=0 // pred_fallthru
    _
  // Predicated region
  $region10: #{encoder_forward.24} parent=0 // pred_check
    _
  $region11: #{encoder_forward.24} parent=0 // pred_check_branch
    %17 = sbr.rel (0) target = $region13
  $region12: #{encoder_forward.24} parent=0 // pred_region
    _
  $region13: #{encoder_forward.24} parent=0 // pred_fallthru
    _
  // Predicated region
  $region14: #{encoder_forward.24} parent=0 // pred_check
    _
  $region15: #{encoder_forward.24} parent=0 // pred_check_branch
    %19 = sbr.rel (0) target = $region17
  $region16: #{encoder_forward.24} parent=0 // pred_region
    _
  $region17: #{encoder_forward.24} parent=0 // pred_fallthru
    _
  // Predicated region
  $region18: #{encoder_forward.24} parent=0 // pred_check
    _
  $region19: #{encoder_forward.24} parent=0 // pred_check_branch
    %21 = sbr.rel (0) target = $region21
  $region20: #{encoder_forward.24} parent=0 // pred_region
    _
  $region21: #{encoder_forward.24} parent=0 // pred_fallthru
    _
  // Predicated region
  $region22: #{encoder_forward.24} parent=0 // pred_check
    _
  $region23: #{encoder_forward.24} parent=0 // pred_check_branch
    %23 = sbr.rel (0) target = $region25
  $region24: #{encoder_forward.24} parent=0 // pred_region
    _
  $region25: #{encoder_forward.24} parent=0 // pred_fallthru
    _
  // Predicated region
  $region26: #{encoder_forward.24} parent=0 // pred_check
    _
  $region27: #{encoder_forward.24} parent=0 // pred_check_branch
    %25 = sbr.rel (0) target = $region29
  $region28: #{encoder_forward.24} parent=0 // pred_region
    _
  $region29: #{encoder_forward.24} parent=0 // pred_fallthru
    _
  %p27 = scmp.eq.s32.totalorder 0, 0
  // Predicated region
  $region30: #{encoder_forward.24} parent=0 // pred_check
    %p28 = pneg %p27
  $region31: #{encoder_forward.24} parent=0 // pred_check_branch
    %30 = sbr.rel (%p28) target = $region33
  $region32: #{encoder_forward.24} parent=0 // pred_region
    %v31 = vld [vmem:[%s0] sm:$0xf]
    %v32 = vld [vmem:[%s0 + $0x4] sm:$0xf]
    %v33 = vunpack.c.l.bf16 %v31
    %v34 = vunpack.c.l.bf16 %v32
    %vm35 = vcmask 261120
    %v36 = vsel %vm35, %v33, 0.0
    %37 = vadd.xlane.f32.xlu0 %v36
    %v38 = vpop.xlane.xlu0 %37
    %v39 = vsel %vm35, %v34, 0.0
    %40 = vadd.xlane.f32.xlu0 %v39
    %v41 = vpop.xlane.xlu0 %40
    %v42 = vrcp.pop 32.0
    %v43 = vmul.f32 %v38, %v42
    %v44 = vmul.f32 %v41, %v42
    %v45 = vsub.f32 %v33, %v43
    %v46 = vsub.f32 %v34, %v44
    %v47 = vmul.f32 %v45, %v45
    %v48 = vmul.f32 %v46, %v46
    %v49 = vsel %vm35, %v47, 0.0
    %50 = vadd.xlane.f32.xlu0 %v49
    %v51 = vpop.xlane.xlu0 %50
    %v52 = vsel %vm35, %v48, 0.0
    %53 = vadd.xlane.f32.xlu0 %v52
    %v54 = vpop.xlane.xlu0 %53
    %v55 = vmul.f32 %v51, %v42
    %v56 = vmul.f32 %v54, %v42
    %v57 = vadd.f32 %v55, 1e-12
    %v58 = vadd.f32 %v56, 1e-12
    %v59 = vrsqrt.pop %v57
    %v60 = vrsqrt.pop %v58
    %v61 = vmul.f32 %v45, %v59
    %v62 = vmul.f32 %v46, %v60
    %v63 = vld [vmem:[%s1] sm:$0x1]
    %v65 = vlaneseq
    %v66 = vshrl.u32 %v65, 7
    %v67 = vsub.s32 0, %v66
    %v68 = vrot.slane %v63, %v67
    %v70 = vmul.f32 %v61, %v68
    %v71 = vmul.f32 %v62, %v68
    %v72 = vld [vmem:[%s2] sm:$0x1]
    %v74 = vlaneseq
    %v75 = vshrl.u32 %v74, 7
    %v76 = vsub.s32 0, %v75
    %v77 = vrot.slane %v72, %v76
    %v79 = vadd.f32 %v70, %v77
    %v80 = vadd.f32 %v71, %v77
    %v81 = vpack.c.bf16 %v80, %v79
    %82 = vst.msk [vmem:[#allocation2] sm:$0xff] %vm35, %v81
    %83 = vst.msk [vmem:[#allocation3] sm:$0xff] %vm35, 0.0
    %84 = vst.msk [vmem:[#allocation3 + $0x8] sm:$0xff] %vm35, 0.0
  $region33: #{encoder_forward.24} parent=0 // pred_fallthru
    _
  %v85 = vld [vmem:[#allocation2] sm:$0xff]
  %v86 = vld [vmem:[%s3] sm:$0xf]
  %v87 = vld [vmem:[%s3 + $0x4] sm:$0xf]
  %v88 = vld [vmem:[%s3 + $0x8] sm:$0xf]
  %v89 = vld [vmem:[%s3 + $0xc] sm:$0xf]
  %v90 = vld [vmem:[%s4] sm:$0x1]
  %v92 = vlaneseq
  %v93 = vshrl.u32 %v92, 7
  %v94 = vsub.s32 0, %v93
  %v95 = vrot.slane %v90, %v94
  %v101 = vunpack.c.l.b16 %v86
  %v102 = vunpack.c.l.b16 %v87
  %v103 = vunpack.c.l.b16 %v88
  %v104 = vunpack.c.l.b16 %v89
  %v105 = vpack.c.b16 %v102, %v101
  %v106 = vpack.c.b16 %v104, %v103
  %vm109 = vcmask 261120
  %v111 = vsel %vm109, %v85, 0
  %113 = vmatprep.subr.bf16.mxu0 0
  %114 = vmatpush1.bf16.msra.mxu0 %v105
  %115 = vmatprep.subr.bf16.mxu0 0
  %116 = vmatpush1.bf16.msra.mxu0 %v106
  %117 = vmatprep.subr.bf16.mxu0 0
  %118 = vmatpush1.bf16.msra.mxu0 0
  %119 = vmatprep.subr.bf16.mxu0 0
  %120 = vmatpush1.bf16.msra.mxu0 0
  %121 = vmatprep.subr.bf16.mxu0 0
  %122 = vmatpush1.bf16.msra.mxu0 0
  %123 = vmatprep.subr.bf16.mxu0 0
  %124 = vmatpush1.bf16.msra.mxu0 0
  %125 = vmatprep.subr.bf16.mxu0 0
  %126 = vmatpush1.bf16.msra.mxu0 0
  %127 = vmatprep.subr.bf16.mxu0 0
  %128 = vmatpush1.bf16.msra.mxu0 0
  %129 = vmatprep.subr.bf16.mxu0 0
  %130 = vmatpush1.bf16.msra.mxu0 0
  %131 = vmatprep.subr.bf16.mxu0 0
  %132 = vmatpush1.bf16.msra.mxu0 0
  %133 = vmatprep.subr.bf16.mxu0 0
  %134 = vmatpush1.bf16.msra.mxu0 0
  %135 = vmatprep.subr.bf16.mxu0 0
  %136 = vmatpush1.bf16.msra.mxu0 0
  %137 = vmatprep.subr.bf16.mxu0 0
  %138 = vmatpush1.bf16.msra.mxu0 0
  %139 = vmatprep.subr.bf16.mxu0 0
  %140 = vmatpush1.bf16.msra.mxu0 0
  %141 = vmatprep.subr.bf16.mxu0 0
  %142 = vmatpush1.bf16.msra.mxu0 0
  %143 = vmatprep.subr.bf16.mxu0 0
  %144 = vmatpush1.bf16.msra.mxu0 0
  %145 = vmatprep.mubr.bf16.mxu0 0
  %146 = vmatmul.mubr.bf16.gmra.mrb[0].mxu0 %v111
  %v147 = vpop.f32.mrb[0].mxu0
  %v148 = vadd.f32 %v95, %v147
  %v149 = vpop.f32.mrb[0].mxu0
  %v150 = vpop.f32.mrb[0].mxu0
  %v151 = vadd.f32 %v95, %v150
  %v152 = vpop.f32.mrb[0].mxu0
  %153 = vdwg.mxu0
  %v154 = vxor.u32 %v148, 2147483648
  %v155 = vxor.u32 %v151, 2147483648
  %v156 = vmul.f32 %v154, 1.442695
  %v157 = vpow.pop %v156
  %v158 = vmul.f32 %v155, 1.442695
  %v159 = vpow.pop %v158
  %v160 = vadd.f32 %v157, 1.0
  %v161 = vadd.f32 %v159, 1.0
  %v162 = vrcp.pop %v160
  %v163 = vmul.f32 1.0, %v162
  %v164 = vrcp.pop %v161
  %v165 = vmul.f32 1.0, %v164
  %v166 = vmul.f32 %v148, %v163
  %v167 = vmul.f32 %v151, %v165
  %v168 = vld [vmem:[#allocation3] sm:$0xff]
  %v169 = vld [vmem:[#allocation3 + $0x8] sm:$0xff]
  %v170 = vpack.c.bf16 %v167, %v166
  %v171 = vld [vmem:[%s5] sm:$0xf]
  %v172 = vld [vmem:[%s5 + $0x4] sm:$0xf]
  %v173 = vld [vmem:[%s5 + $0x8] sm:$0xf]
  %v174 = vld [vmem:[%s5 + $0xc] sm:$0xf]
  %v175 = vld [vmem:[%s5 + $0x10] sm:$0xf]
  %v176 = vld [vmem:[%s5 + $0x14] sm:$0xf]
  %v177 = vld [vmem:[%s5 + $0x18] sm:$0xf]
  %v178 = vld [vmem:[%s5 + $0x1c] sm:$0xf]
  %v187 = vunpack.c.l.b16 %v171
  %v188 = vunpack.c.l.b16 %v172
  %v189 = vunpack.c.l.b16 %v173
  %v190 = vunpack.c.l.b16 %v174
  %v191 = vunpack.c.l.b16 %v175
  %v192 = vunpack.c.l.b16 %v176
  %v193 = vunpack.c.l.b16 %v177
  %v194 = vunpack.c.l.b16 %v178
  %v195 = vpack.c.b16 %v188, %v187
  %v196 = vpack.c.b16 %v190, %v189
  %v197 = vpack.c.b16 %v192, %v191
  %v198 = vpack.c.b16 %v194, %v193
  %vm203 = vcmask 523264
  %v205 = vsel %vm203, %v170, 0
  %207 = vmatprep.subr.bf16.mxu0 0
  %208 = vmatpush1.bf16.msra.mxu0 %v195
  %209 = vmatprep.subr.bf16.mxu0 0
  %210 = vmatpush1.bf16.msra.mxu0 %v196
  %211 = vmatprep.subr.bf16.mxu0 0
  %212 = vmatpush1.bf16.msra.mxu0 %v197
  %213 = vmatprep.subr.bf16.mxu0 0
  %214 = vmatpush1.bf16.msra.mxu0 %v198
  %215 = vmatprep.subr.bf16.mxu0 0
  %216 = vmatpush1.bf16.msra.mxu0 0
  %217 = vmatprep.subr.bf16.mxu0 0
  %218 = vmatpush1.bf16.msra.mxu0 0
  %219 = vmatprep.subr.bf16.mxu0 0
  %220 = vmatpush1.bf16.msra.mxu0 0
  %221 = vmatprep.subr.bf16.mxu0 0
  %222 = vmatpush1.bf16.msra.mxu0 0
  %223 = vmatprep.subr.bf16.mxu0 0
  %224 = vmatpush1.bf16.msra.mxu0 0
  %225 = vmatprep.subr.bf16.mxu0 0
  %226 = vmatpush1.bf16.msra.mxu0 0
  %227 = vmatprep.subr.bf16.mxu0 0
  %228 = vmatpush1.bf16.msra.mxu0 0
  %229 = vmatprep.subr.bf16.mxu0 0
  %230 = vmatpush1.bf16.msra.mxu0 0
  %231 = vmatprep.subr.bf16.mxu0 0
  %232 = vmatpush1.bf16.msra.mxu0 0
  %233 = vmatprep.subr.bf16.mxu0 0
  %234 = vmatpush1.bf16.msra.mxu0 0
  %235 = vmatprep.subr.bf16.mxu0 0
  %236 = vmatpush1.bf16.msra.mxu0 0
  %237 = vmatprep.subr.bf16.mxu0 0
  %238 = vmatpush1.bf16.msra.mxu0 0
  %239 = vmatprep.mubr.bf16.mxu0 0
  %240 = vmatmul.mubr.bf16.gmra.mrb[0].mxu0 %v205
  %v241 = vpop.f32.mrb[0].mxu0
  %v242 = vadd.f32 0.0, %v241
  %v243 = vpop.f32.mrb[0].mxu0
  %v244 = vpop.f32.mrb[0].mxu0
  %v245 = vadd.f32 0.0, %v244
  %v246 = vpop.f32.mrb[0].mxu0
  %247 = vdwg.mxu0
  %v248 = vadd.f32 %v168, %v242
  %v249 = vadd.f32 %v169, %v245
  %250 = vst.msk [vmem:[#allocation3] sm:$0xff] %vm109, %v248
  %251 = vst.msk [vmem:[#allocation3 + $0x8] sm:$0xff] %vm109, %v249
  // Predicated region
  $region34: #{encoder_forward.24} parent=0 // pred_check
    %p252 = pneg %p27
  $region35: #{encoder_forward.24} parent=0 // pred_check_branch
    %254 = sbr.rel (%p252) target = $region37
  $region36: #{encoder_forward.24} parent=0 // pred_region
    %v255 = vld [vmem:[#allocation3] sm:$0xff]
    %v256 = vld [vmem:[#allocation3 + $0x8] sm:$0xff]
    %v257 = vld [vmem:[%s6] sm:$0x1]
    %v259 = vlaneseq
    %v260 = vshrl.u32 %v259, 7
    %v261 = vsub.s32 0, %v260
    %v262 = vrot.slane %v257, %v261
    %v264 = vadd.f32 %v255, %v262
    %v265 = vadd.f32 %v256, %v262
    %v266 = vld [vmem:[%s0] sm:$0xf]
    %v267 = vld [vmem:[%s0 + $0x4] sm:$0xf]
    %v268 = vunpack.c.l.bf16 %v266
    %v269 = vunpack.c.l.bf16 %v267
    %v270 = vadd.f32 %v264, %v268
    %v271 = vadd.f32 %v265, %v269
    %v272 = vpack.c.bf16 %v271, %v270
    %v274 = vunpack.c.l.b16 %v272
    %v275 = vunpack.c.h.b16 %v272
    %v276 = vpack.c.b16 %v274, %v274
    %v277 = vpack.c.b16 %v275, %v275
    %vm280 = vcmask 257024
    %281 = vst.msk [vmem:[%s7] sm:$0xf] %vm280, %v276
    %282 = vst.msk [vmem:[%s7 + $0x4] sm:$0xf] %vm280, %v277
  $region37: #{encoder_forward.24} parent=0 // pred_fallthru
    _
  // Predicated region
  $region38: #{encoder_forward.24} parent=0 // pred_check
    _
  $region39: #{encoder_forward.24} parent=0 // pred_check_branch
    %284 = sbr.rel (0) target = $region41
  $region40: #{encoder_forward.24} parent=0 // pred_region
    _
  $region41: #{encoder_forward.24} parent=0 // pred_fallthru
    _
  // Predicated region
  $region42: #{encoder_forward.24} parent=0 // pred_check
    _
  $region43: #{encoder_forward.24} parent=0 // pred_check_branch
    %286 = sbr.rel (0) target = $region45
  $region44: #{encoder_forward.24} parent=0 // pred_region
    _
  $region45: #{encoder_forward.24} parent=0 // pred_fallthru
    _

// kernel: encoder_forward.31
$region0: #{encoder_forward.31}
  #allocation0 [shape = 'u32[]', space=smem, size = 0x4, offset = 0x4, fixed_abs, tag = 'smem constant byte address 0x4 - core index']
  #allocation1 [shape = 'u32[144,128]{1,0:T(1,128)}', space=vmem, size = 0x12000, scoped, tag = 'internal scratch']
  %s0 = inlined_call_operand.vmem [shape: bf16[16,32], index: 0, kind: input, shape index: {}]
  %s1 = inlined_call_operand.vmem [shape: f32[1,32], index: 1, kind: input, shape index: {}]
  %s2 = inlined_call_operand.vmem [shape: f32[1,32], index: 2, kind: input, shape index: {}]
  %s3 = inlined_call_operand.vmem [shape: f32[16,32], index: 3, kind: output, shape index: {}]
  %s4 = sld [smem:[#allocation0]]
  $region22: #{encoder_forward.31} parent=0
    _
  %s6 = ssub.s32 1, %s4
  %s7 = scalar_select 0, %s6, %s4
  // Predicated region
  $region2: #{encoder_forward.31} parent=0 // pred_check
    _
  $region3: #{encoder_forward.31} parent=0 // pred_check_branch
    %9 = sbr.rel (0) target = $region5
  $region4: #{encoder_forward.31} parent=0 // pred_region
    _
  $region5: #{encoder_forward.31} parent=0 // pred_fallthru
    _
  // Predicated region
  $region6: #{encoder_forward.31} parent=0 // pred_check
    _
  $region7: #{encoder_forward.31} parent=0 // pred_check_branch
    %11 = sbr.rel (0) target = $region9
  $region8: #{encoder_forward.31} parent=0 // pred_region
    _
  $region9: #{encoder_forward.31} parent=0 // pred_fallthru
    _
  // Predicated region
  $region10: #{encoder_forward.31} parent=0 // pred_check
    _
  $region11: #{encoder_forward.31} parent=0 // pred_check_branch
    %13 = sbr.rel (0) target = $region13
  $region12: #{encoder_forward.31} parent=0 // pred_region
    _
  $region13: #{encoder_forward.31} parent=0 // pred_fallthru
    _
  %v14 = vld [vmem:[%s0] sm:$0xf]
  %v15 = vld [vmem:[%s0 + $0x4] sm:$0xf]
  %v16 = vunpack.c.l.bf16 %v14
  %v17 = vunpack.c.l.bf16 %v15
  %vm18 = vcmask 261120
  %v19 = vsel %vm18, %v16, 0.0
  %20 = vadd.xlane.f32.xlu0 %v19
  %v21 = vpop.xlane.xlu0 %20
  %v22 = vsel %vm18, %v17, 0.0
  %23 = vadd.xlane.f32.xlu0 %v22
  %v24 = vpop.xlane.xlu0 %23
  %v25 = vrcp.pop 32.0
  %v26 = vmul.f32 %v21, %v25
  %v27 = vmul.f32 %v24, %v25
  %v28 = vsub.f32 %v16, %v26
  %v29 = vsub.f32 %v17, %v27
  %v30 = vmul.f32 %v28, %v28
  %v31 = vmul.f32 %v29, %v29
  %v32 = vsel %vm18, %v30, 0.0
  %33 = vadd.xlane.f32.xlu0 %v32
  %v34 = vpop.xlane.xlu0 %33
  %v35 = vsel %vm18, %v31, 0.0
  %36 = vadd.xlane.f32.xlu0 %v35
  %v37 = vpop.xlane.xlu0 %36
  %v38 = vmul.f32 %v34, %v25
  %v39 = vmul.f32 %v37, %v25
  %v40 = vadd.f32 %v38, 1e-12
  %v41 = vadd.f32 %v39, 1e-12
  %v42 = vrsqrt.pop %v40
  %v43 = vrsqrt.pop %v41
  %v44 = vmul.f32 %v28, %v42
  %v45 = vmul.f32 %v29, %v43
  %v46 = vld [vmem:[%s1] sm:$0x1]
  %v48 = vlaneseq
  %v49 = vshrl.u32 %v48, 7
  %v50 = vsub.s32 0, %v49
  %v51 = vrot.slane %v46, %v50
  %v53 = vmul.f32 %v44, %v51
  %v54 = vmul.f32 %v45, %v51
  %v55 = vld [vmem:[%s2] sm:$0x1]
  %v57 = vlaneseq
  %v58 = vshrl.u32 %v57, 7
  %v59 = vsub.s32 0, %v58
  %v60 = vrot.slane %v55, %v59
  %v62 = vadd.f32 %v53, %v60
  %v63 = vadd.f32 %v54, %v60
  %64 = vst.msk [vmem:[%s3] sm:$0xff] %vm18, %v62
  %65 = vst.msk [vmem:[%s3 + $0x8] sm:$0xff] %vm18, %v63
  // Predicated region
  $region14: #{encoder_forward.31} parent=0 // pred_check
    _
  $region15: #{encoder_forward.31} parent=0 // pred_check_branch
    %67 = sbr.rel (0) target = $region17
  $region16: #{encoder_forward.31} parent=0 // pred_region
    _
  $region17: #{encoder_forward.31} parent=0 // pred_fallthru
    _
  // Predicated region
  $region18: #{encoder_forward.31} parent=0 // pred_check
    _
  $region19: #{encoder_forward.31} parent=0 // pred_check_branch
    %69 = sbr.rel (0) target = $region21
  $region20: #{encoder_forward.31} parent=0 // pred_region
    _
  $region21: #{encoder_forward.31} parent=0 // pred_fallthru
    _

// kernel: encoder_forward.22
$region0: #{encoder_forward.22}
  #allocation0 [shape = 'u32[]', space=smem, size = 0x4, offset = 0x4, fixed_abs, tag = 'smem constant byte address 0x4 - core index']
  #allocation1 [shape = 'u32[144,128]{1,0:T(1,128)}', space=vmem, size = 0x12000, scoped, tag = 'internal scratch']
  #allocation2 [shape = 'f32[8,64]{1,0:T(8,128)}', space=vmem, size = 0x1000, scoped, tag = 'scratch operand']
  #allocation3 [shape = 'f32[8,64]{1,0:T(8,128)}', space=vmem, size = 0x1000, scoped, tag = 'scratch operand']
  %s0 = inlined_call_operand.vmem [shape: bf16[2,8,64], index: 0, kind: input, shape index: {}]
  %s1 = inlined_call_operand.vmem [shape: bf16[2,8,64], index: 1, kind: input, shape index: {}]
  %s2 = inlined_call_operand.vmem [shape: bf16[2,8,8], index: 2, kind: input, shape index: {}]
  %s3 = inlined_call_operand.vmem [shape: bf16[2,8,8], index: 3, kind: input, shape index: {}]
  %s4 = inlined_call_operand.vmem [shape: bf16[2,8,8], index: 4, kind: input, shape index: {}]
  %s5 = inlined_call_operand.vmem [shape: bf16[8,64], index: 5, kind: input, shape index: {}]
  %s6 = inlined_call_operand.vmem [shape: f32[1,64], index: 6, kind: input, shape index: {}]
  %s7 = inlined_call_operand.vmem [shape: f32[8,64], index: 7, kind: input, shape index: {}]
  %s8 = inlined_call_operand.vmem [shape: f32[1,64], index: 8, kind: input, shape index: {}]
  %s9 = inlined_call_operand.vmem [shape: bf16[2,8,64], index: 9, kind: output, shape index: {}]
  %s10 = sld [smem:[#allocation0]]
  $region73: #{encoder_forward.22} parent=0
    _
  %s12 = ssub.s32 1, %s10
  %s13 = scalar_select 0, %s12, %s10
  loop: start=0, step=1, limit=4
  $region2: #{encoder_forward.22} parent=0 // loop_pre_header
    _
  $region3: #{encoder_forward.22} parent=0 // loop_header
    %s15 = sphi 0, %s19
    %p16 = scmp.ge.s32.totalorder %s15, 4
    %s22 = sphi 0, %s41
    %s23 = sphi 0, %s37
    %s24 = sphi 0, %s33
    %s25 = sphi 0, %s22
    %s26 = sphi 0, %s23
    %s27 = sphi 0, %s24
    %s28 = sphi 0, %s25
    %s29 = sphi 0, %s26
    %s30 = sphi 0, %s27
    %s48 = sphi 0, %s50
    %s51 = sphi 0, %s48
    %s52 = sphi 0, %s51
    %s68 = sphi 0, %s52
    %s78 = sphi 0, %s80
    %s81 = sphi 0, %s78
    %s82 = sphi 0, %s81
    %s98 = sphi 0, %s82
    %s106 = sphi 0, %s108
    %s109 = sphi 0, %s106
    %s110 = sphi 0, %s109
    %s126 = sphi 0, %s110
    %s134 = sphi 0, %s136
    %s137 = sphi 0, %s134
    %s138 = sphi 0, %s137
    %s154 = sphi 0, %s138
    %s162 = sphi 0, %s164
    %s165 = sphi 0, %s162
    %s166 = sphi 0, %s165
    %s182 = sphi 0, %s166
    %s188 = sphi 0, %s190
    %s191 = sphi 0, %s188
    %s192 = sphi 0, %s191
    %s208 = sphi 0, %s192
    %s214 = sphi 0, %s216
    %s217 = sphi 0, %s214
    %s218 = sphi 0, %s217
    %s234 = sphi 0, %s218
    %s240 = sphi 0, %s242
    %s243 = sphi 0, %s240
    %s244 = sphi 0, %s243
    %s260 = sphi 0, %s244
    %s266 = sphi 0, %s268
    %s269 = sphi 0, %s266
    %s270 = sphi 0, %s269
    %s286 = sphi 0, %s270
    %s296 = sphi 0, %s298
    %s299 = sphi 0, %s296
    %s300 = sphi 0, %s299
    %s316 = sphi 0, %s300
  $region4: #{encoder_forward.22} parent=0 // loop_header_branch
    %18 = sbr.rel (%p16) target = $region8
  $region5: #{encoder_forward.22} parent=0 // loop_body
    %s20 = ssub.s32 %s15, 1
    %s21 = ssub.s32 %s15, 2
    %s31 = sadd.s32 1, %s24
    %p32 = scmp.ge.s32.totalorder %s31, 1
    %s33 = scalar_select %p32, 0, %s31
    %s34 = sadd.s32 1, %s23
    %s35 = scalar_select %p32, %s34, %s23
    %p36 = scmp.ge.s32.totalorder %s35, 1
    %s37 = scalar_select %p36, 0, %s35
    %s38 = sadd.s32 1, %s22
    %s39 = scalar_select %p36, %s38, %s22
    %p40 = scmp.ge.s32.totalorder %s39, 2
    %s41 = scalar_select %p40, 0, %s39
    %s42 = ssub.s32 %s22, %s41
    %s43 = ssub.s32 %s24, %s33
    %s44 = sor.u32 %s42, %s43
    %s45 = ssub.s32 %s23, %s37
    %s46 = sor.u32 %s44, %s45
    %p47 = scmp.eq.s32.totalorder %s46, 0
    %s49 = sadd.s32 %s48, 1
    %s50 = scalar_select %p47, %s48, %s49
    %p53 = pneg %p47
    %p54 = scmp.eq.s32.totalorder %s15, 1
    %p55 = por %p53, %p54
    %p56 = scmp.ne.s32.totalorder %s48, %s51
    %p57 = scmp.eq.s32.totalorder %s15, 0
    %p58 = por %p56, %p57
    %p59 = scmp.ne.s32.totalorder %s48, %s51
    %p60 = scmp.eq.s32.totalorder %s20, 1
    %p61 = por %p59, %p60
    %p62 = scmp.ne.s32.totalorder %s51, %s52
    %p63 = scmp.eq.s32.totalorder %s20, 0
    %p64 = por %p62, %p63
    %p65 = scmp.ne.s32.totalorder %s51, %s52
    %p66 = scmp.eq.s32.totalorder %s21, 1
    %p67 = por %p65, %p66
    %p69 = scmp.ne.s32.totalorder %s52, %s68
    %p70 = scmp.eq.s32.totalorder %s21, 0
    %p71 = por %p69, %p70
    %s72 = ssub.s32 %s22, %s41
    %s73 = ssub.s32 %s24, %s33
    %s74 = sor.u32 %s72, %s73
    %s75 = ssub.s32 %s23, %s37
    %s76 = sor.u32 %s74, %s75
    %p77 = scmp.eq.s32.totalorder %s76, 0
    %s79 = sadd.s32 %s78, 1
    %s80 = scalar_select %p77, %s78, %s79
    %p83 = pneg %p77
    %p84 = scmp.eq.s32.totalorder %s15, 1
    %p85 = por %p83, %p84
    %p86 = scmp.ne.s32.totalorder %s78, %s81
    %p87 = scmp.eq.s32.totalorder %s15, 0
    %p88 = por %p86, %p87
    %p89 = scmp.ne.s32.totalorder %s78, %s81
    %p90 = scmp.eq.s32.totalorder %s20, 1
    %p91 = por %p89, %p90
    %p92 = scmp.ne.s32.totalorder %s81, %s82
    %p93 = scmp.eq.s32.totalorder %s20, 0
    %p94 = por %p92, %p93
    %p95 = scmp.ne.s32.totalorder %s81, %s82
    %p96 = scmp.eq.s32.totalorder %s21, 1
    %p97 = por %p95, %p96
    %p99 = scmp.ne.s32.totalorder %s82, %s98
    %p100 = scmp.eq.s32.totalorder %s21, 0
    %p101 = por %p99, %p100
    %s102 = ssub.s32 %s22, %s41
    %s103 = ssub.s32 %s24, %s33
    %s104 = sor.u32 %s102, %s103
    %p105 = scmp.eq.s32.totalorder %s104, 0
    %s107 = sadd.s32 %s106, 1
    %s108 = scalar_select %p105, %s106, %s107
    %p111 = pneg %p105
    %p112 = scmp.eq.s32.totalorder %s15, 1
    %p113 = por %p111, %p112
    %p114 = scmp.ne.s32.totalorder %s106, %s109
    %p115 = scmp.eq.s32.totalorder %s15, 0
    %p116 = por %p114, %p115
    %p117 = scmp.ne.s32.totalorder %s106, %s109
    %p118 = scmp.eq.s32.totalorder %s20, 1
    %p119 = por %p117, %p118
    %p120 = scmp.ne.s32.totalorder %s109, %s110
    %p121 = scmp.eq.s32.totalorder %s20, 0
    %p122 = por %p120, %p121
    %p123 = scmp.ne.s32.totalorder %s109, %s110
    %p124 = scmp.eq.s32.totalorder %s21, 1
    %p125 = por %p123, %p124
    %p127 = scmp.ne.s32.totalorder %s110, %s126
    %p128 = scmp.eq.s32.totalorder %s21, 0
    %p129 = por %p127, %p128
    %s130 = ssub.s32 %s22, %s41
    %s131 = ssub.s32 %s24, %s33
    %s132 = sor.u32 %s130, %s131
    %p133 = scmp.eq.s32.totalorder %s132, 0
    %s135 = sadd.s32 %s134, 1
    %s136 = scalar_select %p133, %s134, %s135
    %p139 = pneg %p133
    %p140 = scmp.eq.s32.totalorder %s15, 1
    %p141 = por %p139, %p140
    %p142 = scmp.ne.s32.totalorder %s134, %s137
    %p143 = scmp.eq.s32.totalorder %s15, 0
    %p144 = por %p142, %p143
    %p145 = scmp.ne.s32.totalorder %s134, %s137
    %p146 = scmp.eq.s32.totalorder %s20, 1
    %p147 = por %p145, %p146
    %p148 = scmp.ne.s32.totalorder %s137, %s138
    %p149 = scmp.eq.s32.totalorder %s20, 0
    %p150 = por %p148, %p149
    %p151 = scmp.ne.s32.totalorder %s137, %s138
    %p152 = scmp.eq.s32.totalorder %s21, 1
    %p153 = por %p151, %p152
    %p155 = scmp.ne.s32.totalorder %s138, %s154
    %p156 = scmp.eq.s32.totalorder %s21, 0
    %p157 = por %p155, %p156
    %s158 = ssub.s32 %s22, %s41
    %s159 = ssub.s32 %s24, %s33
    %s160 = sor.u32 %s158, %s159
    %p161 = scmp.eq.s32.totalorder %s160, 0
    %s163 = sadd.s32 %s162, 1
    %s164 = scalar_select %p161, %s162, %s163
    %p167 = pneg %p161
    %p168 = scmp.eq.s32.totalorder %s15, 1
    %p169 = por %p167, %p168
    %p170 = scmp.ne.s32.totalorder %s162, %s165
    %p171 = scmp.eq.s32.totalorder %s15, 0
    %p172 = por %p170, %p171
    %p173 = scmp.ne.s32.totalorder %s162, %s165
    %p174 = scmp.eq.s32.totalorder %s20, 1
    %p175 = por %p173, %p174
    %p176 = scmp.ne.s32.totalorder %s165, %s166
    %p177 = scmp.eq.s32.totalorder %s20, 0
    %p178 = por %p176, %p177
    %p179 = scmp.ne.s32.totalorder %s165, %s166
    %p180 = scmp.eq.s32.totalorder %s21, 1
    %p181 = por %p179, %p180
    %p183 = scmp.ne.s32.totalorder %s166, %s182
    %p184 = scmp.eq.s32.totalorder %s21, 0
    %p185 = por %p183, %p184
    %s186 = ssub.s32 %s23, %s37
    %p187 = scmp.eq.s32.totalorder %s186, 0
    %s189 = sadd.s32 %s188, 1
    %s190 = scalar_select %p187, %s188, %s189
    %p193 = pneg %p187
    %p194 = scmp.eq.s32.totalorder %s15, 1
    %p195 = por %p193, %p194
    %p196 = scmp.ne.s32.totalorder %s188, %s191
    %p197 = scmp.eq.s32.totalorder %s15, 0
    %p198 = por %p196, %p197
    %p199 = scmp.ne.s32.totalorder %s188, %s191
    %p200 = scmp.eq.s32.totalorder %s20, 1
    %p201 = por %p199, %p200
    %p202 = scmp.ne.s32.totalorder %s191, %s192
    %p203 = scmp.eq.s32.totalorder %s20, 0
    %p204 = por %p202, %p203
    %p205 = scmp.ne.s32.totalorder %s191, %s192
    %p206 = scmp.eq.s32.totalorder %s21, 1
    %p207 = por %p205, %p206
    %p209 = scmp.ne.s32.totalorder %s192, %s208
    %p210 = scmp.eq.s32.totalorder %s21, 0
    %p211 = por %p209, %p210
    %s212 = ssub.s32 %s23, %s37
    %p213 = scmp.eq.s32.totalorder %s212, 0
    %s215 = sadd.s32 %s214, 1
    %s216 = scalar_select %p213, %s214, %s215
    %p219 = pneg %p213
    %p220 = scmp.eq.s32.totalorder %s15, 1
    %p221 = por %p219, %p220
    %p222 = scmp.ne.s32.totalorder %s214, %s217
    %p223 = scmp.eq.s32.totalorder %s15, 0
    %p224 = por %p222, %p223
    %p225 = scmp.ne.s32.totalorder %s214, %s217
    %p226 = scmp.eq.s32.totalorder %s20, 1
    %p227 = por %p225, %p226
    %p228 = scmp.ne.s32.totalorder %s217, %s218
    %p229 = scmp.eq.s32.totalorder %s20, 0
    %p230 = por %p228, %p229
    %p231 = scmp.ne.s32.totalorder %s217, %s218
    %p232 = scmp.eq.s32.totalorder %s21, 1
    %p233 = por %p231, %p232
    %p235 = scmp.ne.s32.totalorder %s218, %s234
    %p236 = scmp.eq.s32.totalorder %s21, 0
    %p237 = por %p235, %p236
    %s238 = ssub.s32 %s23, %s37
    %p239 = scmp.eq.s32.totalorder %s238, 0
    %s241 = sadd.s32 %s240, 1
    %s242 = scalar_select %p239, %s240, %s241
    %p245 = pneg %p239
    %p246 = scmp.eq.s32.totalorder %s15, 1
    %p247 = por %p245, %p246
    %p248 = scmp.ne.s32.totalorder %s240, %s243
    %p249 = scmp.eq.s32.totalorder %s15, 0
    %p250 = por %p248, %p249
    %p251 = scmp.ne.s32.totalorder %s240, %s243
    %p252 = scmp.eq.s32.totalorder %s20, 1
    %p253 = por %p251, %p252
    %p254 = scmp.ne.s32.totalorder %s243, %s244
    %p255 = scmp.eq.s32.totalorder %s20, 0
    %p256 = por %p254, %p255
    %p257 = scmp.ne.s32.totalorder %s243, %s244
    %p258 = scmp.eq.s32.totalorder %s21, 1
    %p259 = por %p257, %p258
    %p261 = scmp.ne.s32.totalorder %s244, %s260
    %p262 = scmp.eq.s32.totalorder %s21, 0
    %p263 = por %p261, %p262
    %s264 = ssub.s32 %s23, %s37
    %p265 = scmp.eq.s32.totalorder %s264, 0
    %s267 = sadd.s32 %s266, 1
    %s268 = scalar_select %p265, %s266, %s267
    %p271 = pneg %p265
    %p272 = scmp.eq.s32.totalorder %s15, 1
    %p273 = por %p271, %p272
    %p274 = scmp.ne.s32.totalorder %s266, %s269
    %p275 = scmp.eq.s32.totalorder %s15, 0
    %p276 = por %p274, %p275
    %p277 = scmp.ne.s32.totalorder %s266, %s269
    %p278 = scmp.eq.s32.totalorder %s20, 1
    %p279 = por %p277, %p278
    %p280 = scmp.ne.s32.totalorder %s269, %s270
    %p281 = scmp.eq.s32.totalorder %s20, 0
    %p282 = por %p280, %p281
    %p283 = scmp.ne.s32.totalorder %s269, %s270
    %p284 = scmp.eq.s32.totalorder %s21, 1
    %p285 = por %p283, %p284
    %p287 = scmp.ne.s32.totalorder %s270, %s286
    %p288 = scmp.eq.s32.totalorder %s21, 0
    %p289 = por %p287, %p288
    %s290 = ssub.s32 %s22, %s41
    %s291 = ssub.s32 %s24, %s33
    %s292 = sor.u32 %s290, %s291
    %s293 = ssub.s32 %s23, %s37
    %s294 = sor.u32 %s292, %s293
    %p295 = scmp.eq.s32.totalorder %s294, 0
    %s297 = sadd.s32 %s296, 1
    %s298 = scalar_select %p295, %s296, %s297
    %p301 = pneg %p295
    %p302 = scmp.eq.s32.totalorder %s15, 1
    %p303 = por %p301, %p302
    %p304 = scmp.ne.s32.totalorder %s296, %s299
    %p305 = scmp.eq.s32.totalorder %s15, 0
    %p306 = por %p304, %p305
    %p307 = scmp.ne.s32.totalorder %s296, %s299
    %p308 = scmp.eq.s32.totalorder %s20, 1
    %p309 = por %p307, %p308
    %p310 = scmp.ne.s32.totalorder %s299, %s300
    %p311 = scmp.eq.s32.totalorder %s20, 0
    %p312 = por %p310, %p311
    %p313 = scmp.ne.s32.totalorder %s299, %s300
    %p314 = scmp.eq.s32.totalorder %s21, 1
    %p315 = por %p313, %p314
    %p317 = scmp.ne.s32.totalorder %s300, %s316
    %p318 = scmp.eq.s32.totalorder %s21, 0
    %p319 = por %p317, %p318
    %p320 = scmp.le.s32.totalorder 1, %s15
    %p321 = scmp.lt.s32.totalorder %s15, 3
    %p322 = pnand %p320, %p321
    %p323 = pneg %p322
    // Predicated region
    $region9: #{encoder_forward.22} parent=5 // pred_check
      _
    $region10: #{encoder_forward.22} parent=5 // pred_check_branch
      %325 = sbr.rel (%p322) target = $region12
    $region11: #{encoder_forward.22} parent=5 // pred_region
      %s326 = ssub.s32 %s15, 1
      // Predicated region
      $region13: #{encoder_forward.22} parent=11 // pred_check
        %p327 = pneg %p204
      $region14: #{encoder_forward.22} parent=11 // pred_check_branch
        %329 = sbr.rel (%p327) target = $region16
      $region15: #{encoder_forward.22} parent=11 // pred_region
        %p330 = scmp.lt.s32.totalorder %s26, 0
        %s331 = scalar_select %p330, %s26, 0
        %s332 = smul.addr %s331, 4
        %s333 = scalar_lea.vmem %s5, %s332
      $region16: #{encoder_forward.22} parent=11 // pred_fallthru
        _
      // Predicated region
      $region17: #{encoder_forward.22} parent=11 // pred_check
        %p334 = pneg %p230
      $region18: #{encoder_forward.22} parent=11 // pred_check_branch
        %336 = sbr.rel (%p334) target = $region20
      $region19: #{encoder_forward.22} parent=11 // pred_region
        %p337 = scmp.lt.s32.totalorder %s26, 0
        %s338 = scalar_select %p337, %s26, 0
        %s339 = scalar_lea.vmem %s6, %s338
      $region20: #{encoder_forward.22} parent=11 // pred_fallthru
        _
      // Predicated region
      $region21: #{encoder_forward.22} parent=11 // pred_check
        %p340 = pneg %p256
      $region22: #{encoder_forward.22} parent=11 // pred_check_branch
        %342 = sbr.rel (%p340) target = $region24
      $region23: #{encoder_forward.22} parent=11 // pred_region
        %p343 = scmp.lt.s32.totalorder %s26, 0
        %s344 = scalar_select %p343, %s26, 0
        %s345 = smul.addr %s344, 8
        %s346 = scalar_lea.vmem %s7, %s345
      $region24: #{encoder_forward.22} parent=11 // pred_fallthru
        _
      // Predicated region
      $region25: #{encoder_forward.22} parent=11 // pred_check
        %p347 = pneg %p282
      $region26: #{encoder_forward.22} parent=11 // pred_check_branch
        %349 = sbr.rel (%p347) target = $region28
      $region27: #{encoder_forward.22} parent=11 // pred_region
        %p350 = scmp.lt.s32.totalorder %s26, 0
        %s351 = scalar_select %p350, %s26, 0
        %s352 = scalar_lea.vmem %s8, %s351
      $region28: #{encoder_forward.22} parent=11 // pred_fallthru
        _
    $region12: #{encoder_forward.22} parent=5 // pred_fallthru
      _
    %p353 = scmp.lt.s32.totalorder %s15, 2
    // Predicated region
    $region29: #{encoder_forward.22} parent=5 // pred_check
      %p354 = pneg %p353
    $region30: #{encoder_forward.22} parent=5 // pred_check_branch
      %356 = sbr.rel (%p354) target = $region32
    $region31: #{encoder_forward.22} parent=5 // pred_region
      // Predicated region
      $region33: #{encoder_forward.22} parent=31 // pred_check
        %p357 = pneg %p58
      $region34: #{encoder_forward.22} parent=31 // pred_check_branch
        %359 = sbr.rel (%p357) target = $region36
      $region35: #{encoder_forward.22} parent=31 // pred_region
        %p360 = scmp.lt.s32.totalorder %s22, 1
        %s361 = scalar_select %p360, %s22, 1
        %p362 = scmp.lt.s32.totalorder %s24, 0
        %s363 = scalar_select %p362, %s24, 0
        %p364 = scmp.lt.s32.totalorder %s23, 0
        %s365 = scalar_select %p364, %s23, 0
        %s366 = sadd.s32 %s365, %s363
        %s367 = sadd.s32 %s366, %s361
        %s368 = smul.addr %s367, 4
        %s369 = scalar_lea.vmem %s0, %s368
      $region36: #{encoder_forward.22} parent=31 // pred_fallthru
        _
      // Predicated region
      $region37: #{encoder_forward.22} parent=31 // pred_check
        %p370 = pneg %p88
      $region38: #{encoder_forward.22} parent=31 // pred_check_branch
        %372 = sbr.rel (%p370) target = $region40
      $region39: #{encoder_forward.22} parent=31 // pred_region
        %p373 = scmp.lt.s32.totalorder %s22, 1
        %s374 = scalar_select %p373, %s22, 1
        %p375 = scmp.lt.s32.totalorder %s24, 0
        %s376 = scalar_select %p375, %s24, 0
        %p377 = scmp.lt.s32.totalorder %s23, 0
        %s378 = scalar_select %p377, %s23, 0
        %s379 = sadd.s32 %s378, %s376
        %s380 = sadd.s32 %s379, %s374
        %s381 = smul.addr %s380, 4
        %s382 = scalar_lea.vmem %s1, %s381
      $region40: #{encoder_forward.22} parent=31 // pred_fallthru
        _
      // Predicated region
      $region41: #{encoder_forward.22} parent=31 // pred_check
        %p383 = pneg %p116
      $region42: #{encoder_forward.22} parent=31 // pred_check_branch
        %385 = sbr.rel (%p383) target = $region44
      $region43: #{encoder_forward.22} parent=31 // pred_region
        %p386 = scmp.lt.s32.totalorder %s22, 1
        %s387 = scalar_select %p386, %s22, 1
        %p388 = scmp.lt.s32.totalorder %s24, 0
        %s389 = scalar_select %p388, %s24, 0
        %s390 = sadd.s32 %s389, %s387
        %s391 = smul.addr %s390, 4
        %s392 = scalar_lea.vmem %s2, %s391
      $region44: #{encoder_forward.22} parent=31 // pred_fallthru
        _
      // Predicated region
      $region45: #{encoder_forward.22} parent=31 // pred_check
        %p393 = pneg %p144
      $region46: #{encoder_forward.22} parent=31 // pred_check_branch
        %395 = sbr.rel (%p393) target = $region48
      $region47: #{encoder_forward.22} parent=31 // pred_region
        %p396 = scmp.lt.s32.totalorder %s22, 1
        %s397 = scalar_select %p396, %s22, 1
        %p398 = scmp.lt.s32.totalorder %s24, 0
        %s399 = scalar_select %p398, %s24, 0
        %s400 = sadd.s32 %s399, %s397
        %s401 = smul.addr %s400, 4
        %s402 = scalar_lea.vmem %s3, %s401
      $region48: #{encoder_forward.22} parent=31 // pred_fallthru
        _
      // Predicated region
      $region49: #{encoder_forward.22} parent=31 // pred_check
        %p403 = pneg %p172
      $region50: #{encoder_forward.22} parent=31 // pred_check_branch
        %405 = sbr.rel (%p403) target = $region52
      $region51: #{encoder_forward.22} parent=31 // pred_region
        %p406 = scmp.lt.s32.totalorder %s22, 1
        %s407 = scalar_select %p406, %s22, 1
        %p408 = scmp.lt.s32.totalorder %s24, 0
        %s409 = scalar_select %p408, %s24, 0
        %s410 = sadd.s32 %s409, %s407
        %s411 = smul.addr %s410, 4
        %s412 = scalar_lea.vmem %s4, %s411
      $region52: #{encoder_forward.22} parent=31 // pred_fallthru
        _
    $region32: #{encoder_forward.22} parent=5 // pred_fallthru
      _
    %p413 = scmp.le.s32.totalorder 1, %s15
    %p414 = scmp.lt.s32.totalorder %s15, 3
    %p415 = pnand %p413, %p414
    %p416 = pneg %p415
    // Predicated region
    $region53: #{encoder_forward.22} parent=5 // pred_check
      _
    $region54: #{encoder_forward.22} parent=5 // pred_check_branch
      %418 = sbr.rel (%p415) target = $region56
    $region55: #{encoder_forward.22} parent=5 // pred_region
      %s419 = ssub.s32 %s15, 1
      %p420 = scmp.lt.s32.totalorder %s25, 1
      %s421 = scalar_select %p420, %s25, 1
      %p422 = scmp.lt.s32.totalorder %s27, 0
      %s423 = scalar_select %p422, %s27, 0
      %p424 = scmp.lt.s32.totalorder %s26, 0
      %s425 = scalar_select %p424, %s26, 0
      %s426 = sadd.s32 %s425, %s423
      %s427 = sadd.s32 %s426, %s421
      %s428 = smul.addr %s427, 4
      %s429 = scalar_lea.vmem %s0, %s428
      %p430 = pneg %p64
      %p431 = pneg %p61
      %p432 = scmp.lt.s32.totalorder %s25, 1
      %s433 = scalar_select %p432, %s25, 1
      %p434 = scmp.lt.s32.totalorder %s27, 0
      %s435 = scalar_select %p434, %s27, 0
      %p436 = scmp.lt.s32.totalorder %s26, 0
      %s437 = scalar_select %p436, %s26, 0
      %s438 = sadd.s32 %s437, %s435
      %s439 = sadd.s32 %s438, %s433
      %s440 = smul.addr %s439, 4
      %s441 = scalar_lea.vmem %s1, %s440
      %p442 = pneg %p94
      %p443 = pneg %p91
      %p444 = scmp.lt.s32.totalorder %s25, 1
      %s445 = scalar_select %p444, %s25, 1
      %p446 = scmp.lt.s32.totalorder %s27, 0
      %s447 = scalar_select %p446, %s27, 0
      %s448 = sadd.s32 %s447, %s445
      %s449 = smul.addr %s448, 4
      %s450 = scalar_lea.vmem %s2, %s449
      %p451 = pneg %p122
      %p452 = pneg %p119
      %p453 = scmp.lt.s32.totalorder %s25, 1
      %s454 = scalar_select %p453, %s25, 1
      %p455 = scmp.lt.s32.totalorder %s27, 0
      %s456 = scalar_select %p455, %s27, 0
      %s457 = sadd.s32 %s456, %s454
      %s458 = smul.addr %s457, 4
      %s459 = scalar_lea.vmem %s3, %s458
      %p460 = pneg %p150
      %p461 = pneg %p147
      %p462 = scmp.lt.s32.totalorder %s25, 1
      %s463 = scalar_select %p462, %s25, 1
      %p464 = scmp.lt.s32.totalorder %s27, 0
      %s465 = scalar_select %p464, %s27, 0
      %s466 = sadd.s32 %s465, %s463
      %s467 = smul.addr %s466, 4
      %s468 = scalar_lea.vmem %s4, %s467
      %p469 = pneg %p178
      %p470 = pneg %p175
      %p471 = scmp.lt.s32.totalorder %s26, 0
      %s472 = scalar_select %p471, %s26, 0
      %s473 = smul.addr %s472, 4
      %s474 = scalar_lea.vmem %s5, %s473
      %p475 = pneg %p204
      %p476 = pneg %p201
      %p477 = scmp.lt.s32.totalorder %s26, 0
      %s478 = scalar_select %p477, %s26, 0
      %s479 = scalar_lea.vmem %s6, %s478
      %p480 = pneg %p230
      %p481 = pneg %p227
      %p482 = scmp.lt.s32.totalorder %s26, 0
      %s483 = scalar_select %p482, %s26, 0
      %s484 = smul.addr %s483, 8
      %s485 = scalar_lea.vmem %s7, %s484
      %p486 = pneg %p256
      %p487 = pneg %p253
      %p488 = scmp.lt.s32.totalorder %s26, 0
      %s489 = scalar_select %p488, %s26, 0
      %s490 = scalar_lea.vmem %s8, %s489
      %p491 = pneg %p282
      %p492 = pneg %p279
      %p493 = pneg %p312
      %p494 = pneg %p309
      %p495 = scmp.lt.s32.totalorder %s25, 1
      %s496 = scalar_select %p495, %s25, 1
      %p497 = scmp.lt.s32.totalorder %s27, 0
      %s498 = scalar_select %p497, %s27, 0
      %p499 = scmp.lt.s32.totalorder %s26, 0
      %s500 = scalar_select %p499, %s26, 0
      %s501 = sadd.s32 %s500, %s498
      %s502 = sadd.s32 %s501, %s496
      %s503 = smul.addr %s502, 4
      %s504 = scalar_lea.vmem %s9, %s503
      %p505 = scmp.lt.s32.totalorder %s25, 1
      %s506 = scalar_select %p505, %s25, 1
      %p507 = scmp.lt.s32.totalorder %s27, 0
      %s508 = scalar_select %p507, %s27, 0
      %p509 = scmp.lt.s32.totalorder %s26, 0
      %s510 = scalar_select %p509, %s26, 0
      %s511 = sadd.s32 %s510, %s508
      %s512 = sadd.s32 %s511, %s506
      %s513 = smul.addr %s512, 4
      %s514 = scalar_lea.vmem %s0, %s513
      %p515 = scmp.lt.s32.totalorder %s25, 1
      %s516 = scalar_select %p515, %s25, 1
      %p517 = scmp.lt.s32.totalorder %s27, 0
      %s518 = scalar_select %p517, %s27, 0
      %p519 = scmp.lt.s32.totalorder %s26, 0
      %s520 = scalar_select %p519, %s26, 0
      %s521 = sadd.s32 %s520, %s518
      %s522 = sadd.s32 %s521, %s516
      %s523 = smul.addr %s522, 4
      %s524 = scalar_lea.vmem %s1, %s523
      %p525 = scmp.lt.s32.totalorder %s25, 1
      %s526 = scalar_select %p525, %s25, 1
      %p527 = scmp.lt.s32.totalorder %s27, 0
      %s528 = scalar_select %p527, %s27, 0
      %s529 = sadd.s32 %s528, %s526
      %s530 = smul.addr %s529, 4
      %s531 = scalar_lea.vmem %s2, %s530
      %p532 = scmp.lt.s32.totalorder %s25, 1
      %s533 = scalar_select %p532, %s25, 1
      %p534 = scmp.lt.s32.totalorder %s27, 0
      %s535 = scalar_select %p534, %s27, 0
      %s536 = sadd.s32 %s535, %s533
      %s537 = smul.addr %s536, 4
      %s538 = scalar_lea.vmem %s3, %s537
      %p539 = scmp.lt.s32.totalorder %s25, 1
      %s540 = scalar_select %p539, %s25, 1
      %p541 = scmp.lt.s32.totalorder %s27, 0
      %s542 = scalar_select %p541, %s27, 0
      %s543 = sadd.s32 %s542, %s540
      %s544 = smul.addr %s543, 4
      %s545 = scalar_lea.vmem %s4, %s544
      %p546 = scmp.lt.s32.totalorder %s26, 0
      %s547 = scalar_select %p546, %s26, 0
      %s548 = smul.addr %s547, 4
      %s549 = scalar_lea.vmem %s5, %s548
      %p550 = scmp.lt.s32.totalorder %s26, 0
      %s551 = scalar_select %p550, %s26, 0
      %s552 = scalar_lea.vmem %s6, %s551
      %p553 = scmp.lt.s32.totalorder %s26, 0
      %s554 = scalar_select %p553, %s26, 0
      %s555 = smul.addr %s554, 8
      %s556 = scalar_lea.vmem %s7, %s555
      %p557 = scmp.lt.s32.totalorder %s26, 0
      %s558 = scalar_select %p557, %s26, 0
      %s559 = scalar_lea.vmem %s8, %s558
      %p560 = scmp.lt.s32.totalorder %s25, 1
      %s561 = scalar_select %p560, %s25, 1
      %p562 = scmp.lt.s32.totalorder %s27, 0
      %s563 = scalar_select %p562, %s27, 0
      %p564 = scmp.lt.s32.totalorder %s26, 0
      %s565 = scalar_select %p564, %s26, 0
      %s566 = sadd.s32 %s565, %s563
      %s567 = sadd.s32 %s566, %s561
      %s568 = smul.addr %s567, 4
      %s569 = scalar_lea.vmem %s9, %s568
      %p571 = scmp.eq.s32.totalorder %s27, 0
      // Predicated region
      $region57: #{encoder_forward.22} parent=55 // pred_check
        %p572 = pneg %p571
      $region58: #{encoder_forward.22} parent=55 // pred_check_branch
        %574 = sbr.rel (%p572) target = $region60
      $region59: #{encoder_forward.22} parent=55 // pred_region
        %vm575 = vcmask 523264
        %576 = vst.msk [vmem:[#allocation2] sm:$0xff] %vm575, 0.0
      $region60: #{encoder_forward.22} parent=55 // pred_fallthru
        _
      %v577 = vld [vmem:[%s514] sm:$0xf]
      %v578 = vunpack.c.l.bf16 %v577
      %v579 = vld [vmem:[%s531] sm:$0xf]
      %v580 = vld [vmem:[%s549] sm:$0xf]
      %v581 = vld [vmem:[%s552] sm:$0x1]
      %v583 = vlaneseq
      %v584 = vshrl.u32 %v583, 7
      %v585 = vsub.s32 0, %v584
      %v586 = vrot.slane %v581, %v585
      %vm588 = vcmask 64512
      %v590 = vsel %vm588, %v579, 0
      %vm592 = vcmask 1043456
      %v594 = vsel %vm592, %v580, 0
      %596 = vmatprep.subr.bf16.mxu0 0
      %597 = vmatpush1.bf16.msra.mxu0 %v594
      %598 = vmatprep.subr.bf16.mxu0 0
      %599 = vmatpush1.bf16.msra.mxu0 0
      %600 = vmatprep.subr.bf16.mxu0 0
      %601 = vmatpush1.bf16.msra.mxu0 0
      %602 = vmatprep.subr.bf16.mxu0 0
      %603 = vmatpush1.bf16.msra.mxu0 0
      %604 = vmatprep.subr.bf16.mxu0 0
      %605 = vmatpush1.bf16.msra.mxu0 0
      %606 = vmatprep.subr.bf16.mxu0 0
      %607 = vmatpush1.bf16.msra.mxu0 0
      %608 = vmatprep.subr.bf16.mxu0 0
      %609 = vmatpush1.bf16.msra.mxu0 0
      %610 = vmatprep.subr.bf16.mxu0 0
      %611 = vmatpush1.bf16.msra.mxu0 0
      %612 = vmatprep.subr.bf16.mxu0 0
      %613 = vmatpush1.bf16.msra.mxu0 0
      %614 = vmatprep.subr.bf16.mxu0 0
      %615 = vmatpush1.bf16.msra.mxu0 0
      %616 = vmatprep.subr.bf16.mxu0 0
      %617 = vmatpush1.bf16.msra.mxu0 0
      %618 = vmatprep.subr.bf16.mxu0 0
      %619 = vmatpush1.bf16.msra.mxu0 0
      %620 = vmatprep.subr.bf16.mxu0 0
      %621 = vmatpush1.bf16.msra.mxu0 0
      %622 = vmatprep.subr.bf16.mxu0 0
      %623 = vmatpush1.bf16.msra.mxu0 0
      %624 = vmatprep.subr.bf16.mxu0 0
      %625 = vmatpush1.bf16.msra.mxu0 0
      %626 = vmatprep.subr.bf16.mxu0 0
      %627 = vmatpush1.bf16.msra.mxu0 0
      %628 = vmatprep.mubr.bf16.mxu0 0
      %629 = vmatmul.mubr.bf16.gmra.mrb[0].mxu0 %v590
      %v630 = vpop.f32.mrb[0].mxu0
      %v631 = vadd.f32 %v586, %v630
      %v632 = vpop.f32.mrb[0].mxu0
      %v633 = vpop.f32.mrb[0].mxu0
      %v634 = vpop.f32.mrb[0].mxu0
      %635 = vdwg.mxu0
      %vm636 = vcmp.gt.f32.partialorder %v631, 30.0
      %v637 = vmin.f32 %v631, 30.0
      %v638 = vmul.f32 %v637, 1.442695
      %v639 = vpow.pop %v638
      %v640 = vadd.f32 %v639, 1.0
      %v641 = vlog2.pop %v640
      %v642 = vmul.f32 %v641, 0.6931472
      %v643 = vsel %vm636, %v631, %v642
      %v644 = vmul.f32 %v643, %v578
      %v645 = vld [vmem:[%s556] sm:$0xff]
      %v646 = vld [vmem:[%s538] sm:$0xf]
      %v647 = vunpack.c.l.bf16 %v646
      %648 = vxpose.xlu0.b32.start [1/16] %v647, 128
      %649 = vxpose.xlu0.b32.cont [2/16] 0.0, 128
      %650 = vxpose.xlu0.b32.cont [3/16] 0.0, 128
      %651 = vxpose.xlu0.b32.cont [4/16] 0.0, 128
      %652 = vxpose.xlu0.b32.cont [5/16] 0.0, 128
      %653 = vxpose.xlu0.b32.cont [6/16] 0.0, 128
      %654 = vxpose.xlu0.b32.cont [7/16] 0.0, 128
      %655 = vxpose.xlu0.b32.cont [8/16] 0.0, 128
      %656 = vxpose.xlu0.b32.cont [9/16] 0.0, 128
      %657 = vxpose.xlu0.b32.cont [10/16] 0.0, 128
      %658 = vxpose.xlu0.b32.cont [11/16] 0.0, 128
      %659 = vxpose.xlu0.b32.cont [12/16] 0.0, 128
      %660 = vxpose.xlu0.b32.cont [13/16] 0.0, 128
      %661 = vxpose.xlu0.b32.cont [14/16] 0.0, 128
      %662 = vxpose.xlu0.b32.cont [15/16] 0.0, 128
      %663 = vxpose.xlu0.b32.end [16/16] 0.0, 128
      %v664 = vpop.trf.xlu0
      %v665 = vpop.trf.xlu0
      %v666 = vpop.trf.xlu0
      %v667 = vpop.trf.xlu0
      %v668 = vpop.trf.xlu0
      %v669 = vpop.trf.xlu0
      %v670 = vpop.trf.xlu0
      %v671 = vpop.trf.xlu0
      %v672 = vpop.trf.xlu0
      %v673 = vpop.trf.xlu0
      %v674 = vpop.trf.xlu0
      %v675 = vpop.trf.xlu0
      %v676 = vpop.trf.xlu0
      %v677 = vpop.trf.xlu0
      %v678 = vpop.trf.xlu0
      %v679 = vpop.trf.xlu0
      %v680 = vld [vmem:[%s545] sm:$0xf]
      %v681 = vunpack.c.l.bf16 %v680
      %682 = vxpose.xlu0.b32.start [1/16] %v681, 128
      %683 = vxpose.xlu0.b32.cont [2/16] 0.0, 128
      %684 = vxpose.xlu0.b32.cont [3/16] 0.0, 128
      %685 = vxpose.xlu0.b32.cont [4/16] 0.0, 128
      %686 = vxpose.xlu0.b32.cont [5/16] 0.0, 128
      %687 = vxpose.xlu0.b32.cont [6/16] 0.0, 128
      %688 = vxpose.xlu0.b32.cont [7/16] 0.0, 128
      %689 = vxpose.xlu0.b32.cont [8/16] 0.0, 128
      %690 = vxpose.xlu0.b32.cont [9/16] 0.0, 128
      %691 = vxpose.xlu0.b32.cont [10/16] 0.0, 128
      %692 = vxpose.xlu0.b32.cont [11/16] 0.0, 128
      %693 = vxpose.xlu0.b32.cont [12/16] 0.0, 128
      %694 = vxpose.xlu0.b32.cont [13/16] 0.0, 128
      %695 = vxpose.xlu0.b32.cont [14/16] 0.0, 128
      %696 = vxpose.xlu0.b32.cont [15/16] 0.0, 128
      %697 = vxpose.xlu0.b32.end [16/16] 0.0, 128
      %v698 = vpop.trf.xlu0
      %v699 = vpop.trf.xlu0
      %v700 = vpop.trf.xlu0
      %v701 = vpop.trf.xlu0
      %v702 = vpop.trf.xlu0
      %v703 = vpop.trf.xlu0
      %v704 = vpop.trf.xlu0
      %v705 = vpop.trf.xlu0
      %v706 = vpop.trf.xlu0
      %v707 = vpop.trf.xlu0
      %v708 = vpop.trf.xlu0
      %v709 = vpop.trf.xlu0
      %v710 = vpop.trf.xlu0
      %v711 = vpop.trf.xlu0
      %v712 = vpop.trf.xlu0
      %v713 = vpop.trf.xlu0
      %v714 = vld [vmem:[#allocation2] sm:$0xff]
      %v715 = vlaneseq
      %v716 = vshrl.u32 %v715, 7
      %v717 = vsub.s32 0, %v716
      %v718 = vrot.slane %v643, %v717
      %v719 = vmul.f32 %v718, %v645
      %v720 = vmul.f32 %v719, 1.442695
      %v721 = vpow.pop %v720
      %v722 = vmul.f32 %v721, %v714
      %724 = vset.pattern.permute.xlu0 0
      %725 = vperm.xlu0 %724, %v664
      %v726 = vpop.permute.xlu0 %725
      %v728 = vlaneseq
      %v729 = vshrl.u32 %v728, 7
      %v730 = vsub.s32 0, %v729
      %v731 = vrot.slane %v644, %v730
      %v732 = vmul.f32 %v726, %v731
      %v733 = vadd.f32 %v722, %v732
      %735 = vset.pattern.permute.xlu0 0
      %736 = vperm.xlu0 %735, %v698
      %v737 = vpop.permute.xlu0 %736
      %v739 = vmul.f32 %v737, %v733
      %vm740 = vcmask 523264
      %v741 = vsel %vm740, %v739, 0.0
      %v742 = vrot.slane %v741, 4
      %v743 = vadd.f32 %v741, %v742
      %v744 = vrot.slane %v743, 2
      %v745 = vadd.f32 %v743, %v744
      %v746 = vrot.slane %v745, 1
      %v747 = vadd.f32 %v745, %v746
      %vm748 = vcmask 516096
      %749 = vst.msk [vmem:[#allocation3] sm:$0x1] %vm748, %v747
      %v750 = vlaneseq
      %v751 = vshrl.u32 %v750, 7
      %v752 = vsub.s32 1, %v751
      %v753 = vrot.slane %v643, %v752
      %v754 = vmul.f32 %v753, %v645
      %v755 = vmul.f32 %v754, 1.442695
      %v756 = vpow.pop %v755
      %v757 = vmul.f32 %v756, %v733
      %758 = vset.pattern.permute.xlu0 1
      %759 = vperm.xlu0 %758, %v664
      %v760 = vpop.permute.xlu0 %759
      %v762 = vlaneseq
      %v763 = vshrl.u32 %v762, 7
      %v764 = vsub.s32 1, %v763
      %v765 = vrot.slane %v644, %v764
      %v766 = vmul.f32 %v760, %v765
      %v767 = vadd.f32 %v757, %v766
      %768 = vset.pattern.permute.xlu0 1
      %769 = vperm.xlu0 %768, %v698
      %v770 = vpop.permute.xlu0 %769
      %v772 = vmul.f32 %v770, %v767
      %v773 = vsel %vm740, %v772, 0.0
      %v774 = vrot.slane %v773, 4
      %v775 = vadd.f32 %v773, %v774
      %v776 = vrot.slane %v775, 2
      %v777 = vadd.f32 %v775, %v776
      %v778 = vrot.slane %v777, 1
      %v779 = vadd.f32 %v777, %v778
      %780 = vst.msk [vmem:[#allocation3 + $0x1] sm:$0x1] %vm748, %v779
      %v781 = vlaneseq
      %v782 = vshrl.u32 %v781, 7
      %v783 = vsub.s32 2, %v782
      %v784 = vrot.slane %v643, %v783
      %v785 = vmul.f32 %v784, %v645
      %v786 = vmul.f32 %v785, 1.442695
      %v787 = vpow.pop %v786
      %v788 = vmul.f32 %v787, %v767
      %789 = vset.pattern.permute.xlu0 2
      %790 = vperm.xlu0 %789, %v664
      %v791 = vpop.permute.xlu0 %790
      %v793 = vlaneseq
      %v794 = vshrl.u32 %v793, 7
      %v795 = vsub.s32 2, %v794
      %v796 = vrot.slane %v644, %v795
      %v797 = vmul.f32 %v791, %v796
      %v798 = vadd.f32 %v788, %v797
      %799 = vset.pattern.permute.xlu0 2
      %800 = vperm.xlu0 %799, %v698
      %v801 = vpop.permute.xlu0 %800
      %v803 = vmul.f32 %v801, %v798
      %v804 = vsel %vm740, %v803, 0.0
      %v805 = vrot.slane %v804, 4
      %v806 = vadd.f32 %v804, %v805
      %v807 = vrot.slane %v806, 2
      %v808 = vadd.f32 %v806, %v807
      %v809 = vrot.slane %v808, 1
      %v810 = vadd.f32 %v808, %v809
      %811 = vst.msk [vmem:[#allocation3 + $0x2] sm:$0x1] %vm748, %v810
      %v812 = vlaneseq
      %v813 = vshrl.u32 %v812, 7
      %v814 = vsub.s32 3, %v813
      %v815 = vrot.slane %v643, %v814
      %v816 = vmul.f32 %v815, %v645
      %v817 = vmul.f32 %v816, 1.442695
      %v818 = vpow.pop %v817
      %v819 = vmul.f32 %v818, %v798
      %820 = vset.pattern.permute.xlu0 3
      %821 = vperm.xlu0 %820, %v664
      %v822 = vpop.permute.xlu0 %821
      %v824 = vlaneseq
      %v825 = vshrl.u32 %v824, 7
      %v826 = vsub.s32 3, %v825
      %v827 = vrot.slane %v644, %v826
      %v828 = vmul.f32 %v822, %v827
      %v829 = vadd.f32 %v819, %v828
      %830 = vset.pattern.permute.xlu0 3
      %831 = vperm.xlu0 %830, %v698
      %v832 = vpop.permute.xlu0 %831
      %v834 = vmul.f32 %v832, %v829
      %v835 = vsel %vm740, %v834, 0.0
      %v836 = vrot.slane %v835, 4
      %v837 = vadd.f32 %v835, %v836
      %v838 = vrot.slane %v837, 2
      %v839 = vadd.f32 %v837, %v838
      %v840 = vrot.slane %v839, 1
      %v841 = vadd.f32 %v839, %v840
      %842 = vst.msk [vmem:[#allocation3 + $0x3] sm:$0x1] %vm748, %v841
      %v843 = vlaneseq
      %v844 = vshrl.u32 %v843, 7
      %v845 = vsub.s32 4, %v844
      %v846 = vrot.slane %v643, %v845
      %v847 = vmul.f32 %v846, %v645
      %v848 = vmul.f32 %v847, 1.442695
      %v849 = vpow.pop %v848
      %v850 = vmul.f32 %v849, %v829
      %851 = vset.pattern.permute.xlu0 4
      %852 = vperm.xlu0 %851, %v664
      %v853 = vpop.permute.xlu0 %852
      %v855 = vlaneseq
      %v856 = vshrl.u32 %v855, 7
      %v857 = vsub.s32 4, %v856
      %v858 = vrot.slane %v644, %v857
      %v859 = vmul.f32 %v853, %v858
      %v860 = vadd.f32 %v850, %v859
      %861 = vset.pattern.permute.xlu0 4
      %862 = vperm.xlu0 %861, %v698
      %v863 = vpop.permute.xlu0 %862
      %v865 = vmul.f32 %v863, %v860
      %v866 = vsel %vm740, %v865, 0.0
      %v867 = vrot.slane %v866, 4
      %v868 = vadd.f32 %v866, %v867
      %v869 = vrot.slane %v868, 2
      %v870 = vadd.f32 %v868, %v869
      %v871 = vrot.slane %v870, 1
      %v872 = vadd.f32 %v870, %v871
      %873 = vst.msk [vmem:[#allocation3 + $0x4] sm:$0x1] %vm748, %v872
      %v874 = vlaneseq
      %v875 = vshrl.u32 %v874, 7
      %v876 = vsub.s32 5, %v875
      %v877 = vrot.slane %v643, %v876
      %v878 = vmul.f32 %v877, %v645
      %v879 = vmul.f32 %v878, 1.442695
      %v880 = vpow.pop %v879
      %v881 = vmul.f32 %v880, %v860
      %882 = vset.pattern.permute.xlu0 5
      %883 = vperm.xlu0 %882, %v664
      %v884 = vpop.permute.xlu0 %883
      %v886 = vlaneseq
      %v887 = vshrl.u32 %v886, 7
      %v888 = vsub.s32 5, %v887
      %v889 = vrot.slane %v644, %v888
      %v890 = vmul.f32 %v884, %v889
      %v891 = vadd.f32 %v881, %v890
      %892 = vset.pattern.permute.xlu0 5
      %893 = vperm.xlu0 %892, %v698
      %v894 = vpop.permute.xlu0 %893
      %v896 = vmul.f32 %v894, %v891
      %v897 = vsel %vm740, %v896, 0.0
      %v898 = vrot.slane %v897, 4
      %v899 = vadd.f32 %v897, %v898
      %v900 = vrot.slane %v899, 2
      %v901 = vadd.f32 %v899, %v900
      %v902 = vrot.slane %v901, 1
      %v903 = vadd.f32 %v901, %v902
      %904 = vst.msk [vmem:[#allocation3 + $0x5] sm:$0x1] %vm748, %v903
      %v905 = vlaneseq
      %v906 = vshrl.u32 %v905, 7
      %v907 = vsub.s32 6, %v906
      %v908 = vrot.slane %v643, %v907
      %v909 = vmul.f32 %v908, %v645
      %v910 = vmul.f32 %v909, 1.442695
      %v911 = vpow.pop %v910
      %v912 = vmul.f32 %v911, %v891
      %913 = vset.pattern.permute.xlu0 6
      %914 = vperm.xlu0 %913, %v664
      %v915 = vpop.permute.xlu0 %914
      %v917 = vlaneseq
      %v918 = vshrl.u32 %v917, 7
      %v919 = vsub.s32 6, %v918
      %v920 = vrot.slane %v644, %v919
      %v921 = vmul.f32 %v915, %v920
      %v922 = vadd.f32 %v912, %v921
      %923 = vset.pattern.permute.xlu0 6
      %924 = vperm.xlu0 %923, %v698
      %v925 = vpop.permute.xlu0 %924
      %v927 = vmul.f32 %v925, %v922
      %v928 = vsel %vm740, %v927, 0.0
      %v929 = vrot.slane %v928, 4
      %v930 = vadd.f32 %v928, %v929
      %v931 = vrot.slane %v930, 2
      %v932 = vadd.f32 %v930, %v931
      %v933 = vrot.slane %v932, 1
      %v934 = vadd.f32 %v932, %v933
      %935 = vst.msk [vmem:[#allocation3 + $0x6] sm:$0x1] %vm748, %v934
      %v936 = vlaneseq
      %v937 = vshrl.u32 %v936, 7
      %v938 = vsub.s32 7, %v937
      %v939 = vrot.slane %v643, %v938
      %v940 = vmul.f32 %v939, %v645
      %v941 = vmul.f32 %v940, 1.442695
      %v942 = vpow.pop %v941
      %v943 = vmul.f32 %v942, %v922
      %944 = vset.pattern.permute.xlu0 7
      %945 = vperm.xlu0 %944, %v664
      %v946 = vpop.permute.xlu0 %945
      %v948 = vlaneseq
      %v949 = vshrl.u32 %v948, 7
      %v950 = vsub.s32 7, %v949
      %v951 = vrot.slane %v644, %v950
      %v952 = vmul.f32 %v946, %v951
      %v953 = vadd.f32 %v943, %v952
      %954 = vset.pattern.permute.xlu0 7
      %955 = vperm.xlu0 %954, %v698
      %v956 = vpop.permute.xlu0 %955
      %v958 = vmul.f32 %v956, %v953
      %v959 = vsel %vm740, %v958, 0.0
      %v960 = vrot.slane %v959, 4
      %v961 = vadd.f32 %v959, %v960
      %v962 = vrot.slane %v961, 2
      %v963 = vadd.f32 %v961, %v962
      %v964 = vrot.slane %v963, 1
      %v965 = vadd.f32 %v963, %v964
      %966 = vst.msk [vmem:[#allocation3 + $0x7] sm:$0x1] %vm748, %v965
      %967 = vst.msk [vmem:[#allocation2] sm:$0xff] %vm740, %v953
      %v968 = vld [vmem:[%s524] sm:$0xf]
      %v969 = vunpack.c.l.bf16 %v968
      %v970 = vld [vmem:[#allocation3] sm:$0xff]
      %v971 = vld [vmem:[%s559] sm:$0x1]
      %v973 = vlaneseq
      %v974 = vshrl.u32 %v973, 7
      %v975 = vsub.s32 0, %v974
      %v976 = vrot.slane %v971, %v975
      %v978 = vmul.f32 %v976, %v578
      %v979 = vadd.f32 %v970, %v978
      %v980 = vxor.u32 %v969, 2147483648
      %v981 = vmul.f32 %v980, 1.442695
      %v982 = vpow.pop %v981
      %v983 = vadd.f32 %v982, 1.0
      %v984 = vrcp.pop %v983
      %v985 = vmul.f32 1.0, %v984
      %v986 = vmul.f32 %v969, %v985
      %v987 = vmul.f32 %v979, %v986
      %v988 = vpack.c.bf16 %v987, %v987
      %vm989 = vcmask 519168
      %990 = vst.msk [vmem:[%s569] sm:$0xf] %vm989, %v988
      %p991 = scmp.lt.s32.totalorder %s25, 1
      %s992 = scalar_select %p991, %s25, 1
      %p993 = scmp.lt.s32.totalorder %s27, 0
      %s994 = scalar_select %p993, %s27, 0
      %p995 = scmp.lt.s32.totalorder %s26, 0
      %s996 = scalar_select %p995, %s26, 0
      %s997 = sadd.s32 %s996, %s994
      %s998 = sadd.s32 %s997, %s992
      %s999 = smul.addr %s998, 4
      %s1000 = scalar_lea.vmem %s9, %s999
      // Predicated region
      $region61: #{encoder_forward.22} parent=55 // pred_check
        %p1001 = pneg %p309
      $region62: #{encoder_forward.22} parent=55 // pred_check_branch
        %1003 = sbr.rel (%p1001) target = $region64
      $region63: #{encoder_forward.22} parent=55 // pred_region
        _
      $region64: #{encoder_forward.22} parent=55 // pred_fallthru
        _
    $region56: #{encoder_forward.22} parent=5 // pred_fallthru
      _
    %p1004 = scmp.le.s32.totalorder 2, %s15
    // Predicated region
    $region65: #{encoder_forward.22} parent=5 // pred_check
      %p1005 = pneg %p1004
    $region66: #{encoder_forward.22} parent=5 // pred_check_branch
      %1007 = sbr.rel (%p1005) target = $region68
    $region67: #{encoder_forward.22} parent=5 // pred_region
      %s1008 = ssub.s32 %s15, 2
      // Predicated region
      $region69: #{encoder_forward.22} parent=67 // pred_check
        %p1009 = pneg %p315
      $region70: #{encoder_forward.22} parent=67 // pred_check_branch
        %1011 = sbr.rel (%p1009) target = $region72
      $region71: #{encoder_forward.22} parent=67 // pred_region
        %p1012 = scmp.lt.s32.totalorder %s28, 1
        %s1013 = scalar_select %p1012, %s28, 1
        %p1014 = scmp.lt.s32.totalorder %s30, 0
        %s1015 = scalar_select %p1014, %s30, 0
        %p1016 = scmp.lt.s32.totalorder %s29, 0
        %s1017 = scalar_select %p1016, %s29, 0
        %s1018 = sadd.s32 %s1017, %s1015
        %s1019 = sadd.s32 %s1018, %s1013
        %s1020 = smul.addr %s1019, 4
        %s1021 = scalar_lea.vmem %s9, %s1020
      $region72: #{encoder_forward.22} parent=67 // pred_fallthru
        _
    $region68: #{encoder_forward.22} parent=5 // pred_fallthru
      _
  $region6: #{encoder_forward.22} parent=0 // loop_footer
    %s19 = sadd.s32 1, %s15
  $region7: #{encoder_forward.22} parent=0 // loop_footer_branch
    %14 = sbr.rel target = $region3
  $region8: #{encoder_forward.22} parent=0 // loop_exit
    _

</llo_original>
